<compile_context>
chip_gen: v7x
topology: tpu7x:2x2x1
jax: 0.10.0
libtpu: 0.0.40
codegen_flags: <defaults>
</compile_context>

<pallas_src>
import functools

import jax
import jax.numpy as jnp
from jax.experimental import pallas as pl
from jax.experimental.pallas import tpu as pltpu

_EPS = 1e-5
_VMEM_LIMIT = 64 * 1024 * 1024


# =============================================================================
# In-kernel helpers
# =============================================================================

def _fill_pad_from_rows(pad_ref, get_row, H, W):
    """Zero the flat padded scratch and write the interior rows.

    pad_ref is ((H+2)*(W+2)+slack, Cin); interior pixel (i, j) lives at flat row
    (i+1)*(W+2) + (j+1).  Full re-zero each step keeps the halo (and slack rows)
    valid regardless of how the parallel batch axis is scheduled across cores.
    """
    Wp = W + 2
    pad_ref[...] = jnp.zeros(pad_ref.shape, pad_ref.dtype)
    for i in range(H):
        start = (i + 1) * Wp + 1
        pad_ref[start:start + W, :] = get_row(i)


def _conv3x3_padded(pad_ref, w_ref, b_ref, H, W):
    """3x3 same-conv via 9 contiguous row-offset slices of the flat padded scratch.

    Returns the result in padded-flat form (H*(W+2), Cout) f32: row i*(W+2)+j is
    output pixel (i, j) for j < W; columns W, W+1 are don't-care garbage.
    """
    Wp = W + 2
    L = H * Wp
    acc = None
    for k in range(9):
        dy, dx = divmod(k, 3)
        off = dy * Wp + dx
        lhs = pad_ref[off:off + L, :]                       # contiguous tap slice
        t = jnp.dot(lhs, w_ref[k], preferred_element_type=jnp.float32)
        acc = t if acc is None else acc + t                 # chained sum, no RMW
    return acc + b_ref[...]


def _noise_adain_lrelu(y, nz, nw, sc, sh, mask, inv_count):
    """[optional noise add] -> InstanceNorm -> style affine -> LeakyReLU(0.2).

    y: (rows, C) f32.  When `mask` is given, statistics are computed only over
    the masked (interior) rows with 1/count = inv_count (padded-flat layout).
    """
    if nz is not None:
        y = y + nz * nw                                     # (rows,1) * (1,C)
    if mask is None:
        mean = jnp.mean(y, axis=0, keepdims=True)
        yc = y - mean
        var = jnp.mean(jnp.square(yc), axis=0, keepdims=True)
    else:
        mean = jnp.sum(y * mask, axis=0, keepdims=True) * inv_count
        yc = y - mean
        var = jnp.sum(jnp.square(yc) * mask, axis=0, keepdims=True) * inv_count
    xn = yc * jax.lax.rsqrt(var + _EPS)
    z = sc * xn + sh
    return jnp.maximum(z, 0.2 * z)


def _store_interior(o_ref, z, H, W):
    """Copy the interior of the padded-flat result into the dense (HW, C) output."""
    Wp = W + 2
    for i in range(H):
        o_ref[0, i * W:(i + 1) * W, :] = z[i * Wp:i * Wp + W, :]


# =============================================================================
# Kernel 1: fused init SynthesisBlock
#   const (+noise1) -> AdaIN(w1) -> LReLU -> conv3x3 (+noise2) -> AdaIN(w2) -> LReLU
# =============================================================================

def _init_block_kernel(*refs, H, W, has_noise):
    if has_noise:
        (c_ref, w_ref, b_ref, mask_ref,
         nz1_ref, nw1_ref, nz2_ref, nw2_ref,
         s1_ref, t1_ref, s2_ref, t2_ref,
         o_ref, pad_ref) = refs
    else:
        (c_ref, w_ref, b_ref, mask_ref,
         s1_ref, t1_ref, s2_ref, t2_ref,
         o_ref, pad_ref) = refs
        nz1_ref = nw1_ref = nz2_ref = nw2_ref = None

    inv_hw = 1.0 / float(H * W)

    # ---- stage 1: learned constant (+ noise1) -> AdaIN(w1) -> LeakyReLU ----
    y1 = c_ref[0].astype(jnp.float32)                       # (HW, C) dense
    h = _noise_adain_lrelu(y1,
                           nz1_ref[0] if has_noise else None,
                           nw1_ref[0] if has_noise else None,
                           s1_ref[0], t1_ref[0], mask=None, inv_count=inv_hw)
    h_bf = h.astype(jnp.bfloat16)

    # ---- stage 2: conv3x3 (+ noise2) -> AdaIN(w2) -> LeakyReLU ----
    _fill_pad_from_rows(pad_ref, lambda i: h_bf[i * W:(i + 1) * W, :], H, W)
    y2 = _conv3x3_padded(pad_ref, w_ref, b_ref, H, W)       # padded-flat (L, Cout)
    z = _noise_adain_lrelu(y2,
                           nz2_ref[0] if has_noise else None,
                           nw2_ref[0] if has_noise else None,
                           s2_ref[0], t2_ref[0],
                           mask=mask_ref[0], inv_count=inv_hw)
    _store_interior(o_ref, z.astype(o_ref.dtype), H, W)


def init_block_apply(const_nhwc, p, s1, t1, s2, t2, apply_noise, noise_key):
    """Init block.  const_nhwc: (1, H, W, C).  Returns (N, H, W, Cout) bf16."""
    _, H, W, C = const_nhwc.shape
    N = s1.shape[0]
    HW, Wp = H * W, W + 2
    L = H * Wp
    Lp = (H + 2) * Wp + 8                                   # + slack rows for tap overrun
    Cout = p["conv"]["w"].shape[-1]

    const2 = const_nhwc.reshape(1, HW, C).astype(jnp.float32)
    w = (p["conv"]["w"] * p["conv"]["scale"]).reshape(9, C, Cout).astype(jnp.bfloat16)
    b = p["conv"]["b"].reshape(1, Cout).astype(jnp.float32)
    mask = (jnp.arange(L) % Wp < W).astype(jnp.float32).reshape(1, L, 1)

    inputs = [const2, w, b, mask]
    in_specs = [
        pl.BlockSpec((1, HW, C), lambda n: (0, 0, 0)),       # batch-broadcast constant
        pl.BlockSpec((9, C, Cout), lambda n: (0, 0, 0)),
        pl.BlockSpec((1, Cout), lambda n: (0, 0)),
        pl.BlockSpec((1, L, 1), lambda n: (0, 0, 0)),
    ]
    if apply_noise:
        nz1 = jax.random.normal(jax.random.fold_in(noise_key, 1), (N, HW, 1), jnp.float32)
        nz2 = jax.random.normal(jax.random.fold_in(noise_key, 2), (N, L, 1), jnp.float32)
        inputs += [nz1, p["noise1_w"].reshape(1, 1, C).astype(jnp.float32),
                   nz2, p["noise2_w"].reshape(1, 1, Cout).astype(jnp.float32)]
        in_specs += [pl.BlockSpec((1, HW, 1), lambda n: (n, 0, 0)),
                     pl.BlockSpec((1, 1, C), lambda n: (0, 0, 0)),
                     pl.BlockSpec((1, L, 1), lambda n: (n, 0, 0)),
                     pl.BlockSpec((1, 1, Cout), lambda n: (0, 0, 0))]
    inputs += [s1.reshape(N, 1, C).astype(jnp.float32),
               t1.reshape(N, 1, C).astype(jnp.float32),
               s2.reshape(N, 1, Cout).astype(jnp.float32),
               t2.reshape(N, 1, Cout).astype(jnp.float32)]
    in_specs += [pl.BlockSpec((1, 1, C), lambda n: (n, 0, 0)),
                 pl.BlockSpec((1, 1, C), lambda n: (n, 0, 0)),
                 pl.BlockSpec((1, 1, Cout), lambda n: (n, 0, 0)),
                 pl.BlockSpec((1, 1, Cout), lambda n: (n, 0, 0))]

    kernel = functools.partial(_init_block_kernel, H=H, W=W, has_noise=apply_noise)
    out = pl.pallas_call(
        kernel,
        out_shape=jax.ShapeDtypeStruct((N, HW, Cout), jnp.bfloat16),
        grid=(N,),
        in_specs=in_specs,
        out_specs=pl.BlockSpec((1, HW, Cout), lambda n: (n, 0, 0)),
        scratch_shapes=[pltpu.VMEM((Lp, C), jnp.bfloat16)],
        compiler_params=pltpu.CompilerParams(
            dimension_semantics=("parallel",),
            vmem_limit_bytes=_VMEM_LIMIT),
    )(*inputs)
    return out.reshape(N, H, W, Cout)


# =============================================================================
# Kernel 2: fused upscale SynthesisBlock (input already 2x-upsampled)
#   conv1 (+noise1) -> AdaIN(w1) -> LReLU -> conv2 (+noise2) -> AdaIN(w2) -> LReLU
# =============================================================================

def _upscale_block_kernel(*refs, H, W, has_noise):
    if has_noise:
        (x_ref, w1_ref, b1_ref, w2_ref, b2_ref, mask_ref,
         nz1_ref, nw1_ref, nz2_ref, nw2_ref,
         s1_ref, t1_ref, s2_ref, t2_ref,
         o_ref, pad1_ref, pad2_ref) = refs
    else:
        (x_ref, w1_ref, b1_ref, w2_ref, b2_ref, mask_ref,
         s1_ref, t1_ref, s2_ref, t2_ref,
         o_ref, pad1_ref, pad2_ref) = refs
        nz1_ref = nw1_ref = nz2_ref = nw2_ref = None

    Wp = W + 2
    inv_hw = 1.0 / float(H * W)
    mask = mask_ref[0]                                      # (L, 1)

    # ---- stage 1: conv1 (+ noise1) -> AdaIN(w1) -> LeakyReLU ----
    _fill_pad_from_rows(pad1_ref, lambda i: x_ref[0, i], H, W)
    y1 = _conv3x3_padded(pad1_ref, w1_ref, b1_ref, H, W)    # padded-flat (L, Cmid)
    h = _noise_adain_lrelu(y1,
                           nz1_ref[0] if has_noise else None,
                           nw1_ref[0] if has_noise else None,
                           s1_ref[0], t1_ref[0], mask=mask, inv_count=inv_hw)
    h_bf = h.astype(jnp.bfloat16)

    # ---- stage 2: conv2 (+ noise2) -> AdaIN(w2) -> LeakyReLU ----
    _fill_pad_from_rows(pad2_ref, lambda i: h_bf[i * Wp:i * Wp + W, :], H, W)
    y2 = _conv3x3_padded(pad2_ref, w2_ref, b2_ref, H, W)    # padded-flat (L, Cout)
    z = _noise_adain_lrelu(y2,
                           nz2_ref[0] if has_noise else None,
                           nw2_ref[0] if has_noise else None,
                           s2_ref[0], t2_ref[0], mask=mask, inv_count=inv_hw)
    _store_interior(o_ref, z.astype(o_ref.dtype), H, W)


def upscale_block_apply(x, p, s1, t1, s2, t2, apply_noise, noise_key):
    """Upscale block body.  x: (N, H, W, Cin) already upsampled.  -> (N, H, W, Cout)."""
    N, H, W, Cin = x.shape
    Cmid = p["conv1"]["w"].shape[-1]
    Cout = p["conv2"]["w"].shape[-1]
    HW, Wp = H * W, W + 2
    L = H * Wp
    Lp = (H + 2) * Wp + 8

    w1 = (p["conv1"]["w"] * p["conv1"]["scale"]).reshape(9, Cin, Cmid).astype(jnp.bfloat16)
    b1 = p["conv1"]["b"].reshape(1, Cmid).astype(jnp.float32)
    w2 = (p["conv2"]["w"] * p["conv2"]["scale"]).reshape(9, Cmid, Cout).astype(jnp.bfloat16)
    b2 = p["conv2"]["b"].reshape(1, Cout).astype(jnp.float32)
    mask = (jnp.arange(L) % Wp < W).astype(jnp.float32).reshape(1, L, 1)

    inputs = [x.astype(jnp.bfloat16), w1, b1, w2, b2, mask]
    in_specs = [
        pl.BlockSpec((1, H, W, Cin), lambda n: (n, 0, 0, 0)),
        pl.BlockSpec((9, Cin, Cmid), lambda n: (0, 0, 0)),
        pl.BlockSpec((1, Cmid), lambda n: (0, 0)),
        pl.BlockSpec((9, Cmid, Cout), lambda n: (0, 0, 0)),
        pl.BlockSpec((1, Cout), lambda n: (0, 0)),
        pl.BlockSpec((1, L, 1), lambda n: (0, 0, 0)),
    ]
    if apply_noise:
        nz1 = jax.random.normal(jax.random.fold_in(noise_key, 1), (N, L, 1), jnp.float32)
        nz2 = jax.random.normal(jax.random.fold_in(noise_key, 2), (N, L, 1), jnp.float32)
        inputs += [nz1, p["noise1_w"].reshape(1, 1, Cmid).astype(jnp.float32),
                   nz2, p["noise2_w"].reshape(1, 1, Cout).astype(jnp.float32)]
        in_specs += [pl.BlockSpec((1, L, 1), lambda n: (n, 0, 0)),
                     pl.BlockSpec((1, 1, Cmid), lambda n: (0, 0, 0)),
                     pl.BlockSpec((1, L, 1), lambda n: (n, 0, 0)),
                     pl.BlockSpec((1, 1, Cout), lambda n: (0, 0, 0))]
    inputs += [s1.reshape(N, 1, Cmid).astype(jnp.float32),
               t1.reshape(N, 1, Cmid).astype(jnp.float32),
               s2.reshape(N, 1, Cout).astype(jnp.float32),
               t2.reshape(N, 1, Cout).astype(jnp.float32)]
    in_specs += [pl.BlockSpec((1, 1, Cmid), lambda n: (n, 0, 0)),
                 pl.BlockSpec((1, 1, Cmid), lambda n: (n, 0, 0)),
                 pl.BlockSpec((1, 1, Cout), lambda n: (n, 0, 0)),
                 pl.BlockSpec((1, 1, Cout), lambda n: (n, 0, 0))]

    kernel = functools.partial(_upscale_block_kernel, H=H, W=W, has_noise=apply_noise)
    out = pl.pallas_call(
        kernel,
        out_shape=jax.ShapeDtypeStruct((N, HW, Cout), jnp.bfloat16),
        grid=(N,),
        in_specs=in_specs,
        out_specs=pl.BlockSpec((1, HW, Cout), lambda n: (n, 0, 0)),
        scratch_shapes=[pltpu.VMEM((Lp, Cin), jnp.bfloat16),
                        pltpu.VMEM((Lp, Cmid), jnp.bfloat16)],
        compiler_params=pltpu.CompilerParams(
            dimension_semantics=("parallel",),
            vmem_limit_bytes=_VMEM_LIMIT),
    )(*inputs)
    return out.reshape(N, H, W, Cout)


# =============================================================================
# Kernel 3: to_rgb — WSConv2d 1x1, lane-dense (3, HW) output -> NCHW for free
# =============================================================================

def _to_rgb_kernel(x_ref, w_ref, b_ref, o_ref):
    # (3, Cin) x (HW, Cin)^T -> (3, HW): lane-dense unmasked stores.
    y = jax.lax.dot_general(w_ref[...], x_ref[0],
                            dimension_numbers=(((1,), (1,)), ((), ())),
                            preferred_element_type=jnp.float32)
    o_ref[0] = y + b_ref[...]


def to_rgb_nchw(x_nhwc, rgb_p):
    """WSConv2d 1x1 -> RGB.  x: (N, H, W, Cin) -> (N, 3, H, W) f32 (NCHW)."""
    N, H, W, Cin = x_nhwc.shape
    HW = H * W
    x2 = x_nhwc.reshape(N, HW, Cin).astype(jnp.bfloat16)
    w = (rgb_p["w"] * rgb_p["scale"]).T.astype(jnp.bfloat16)         # (3, Cin)
    b = rgb_p["b"].reshape(3, 1).astype(jnp.float32)
    out = pl.pallas_call(
        _to_rgb_kernel,
        out_shape=jax.ShapeDtypeStruct((N, 3, HW), jnp.float32),
        grid=(N,),
        in_specs=[pl.BlockSpec((1, HW, Cin), lambda n: (n, 0, 0)),
                  pl.BlockSpec((3, Cin), lambda n: (0, 0)),
                  pl.BlockSpec((3, 1), lambda n: (0, 0))],
        out_specs=pl.BlockSpec((1, 3, HW), lambda n: (n, 0, 0)),
        compiler_params=pltpu.CompilerParams(
            dimension_semantics=("parallel",),
            vmem_limit_bytes=_VMEM_LIMIT),
    )(x2, w, b)
    return out.reshape(N, 3, H, W)


# =============================================================================
# Plain-JAX glue
# =============================================================================

def upsample2x_bilinear_nhwc(x):
    # F.interpolate(scale_factor=2, mode='bilinear', antialias=True): for 2x
    # upsampling antialias does not widen the kernel, matching half-pixel
    # bilinear resize.  TODO(synk): fuse into the following conv1 stage.
    N, H, W, C = x.shape
    return jax.image.resize(x, (N, 2 * H, 2 * W, C), method="bilinear")


def style_linear(wvec, p):
    # WSLinear: linear(x * scale) + bias
    return (wvec * p["scale"]) @ p["w"] + p["b"]


# =============================================================================
# Parameter initialization (deterministic, synthetic)
# =============================================================================

def init_wsconv3x3(key, cin, cout, gain=2.0):
    return {"w": jax.random.normal(key, (3, 3, cin, cout), jnp.float32),
            "b": jnp.zeros((cout,), jnp.float32),
            "scale": float((gain / (cin * 9)) ** 0.5)}


def init_wsconv1x1(key, cin, cout, gain=1.0):
    return {"w": jax.random.normal(key, (cin, cout), jnp.float32),
            "b": jnp.zeros((cout,), jnp.float32),
            "scale": float((gain / cin) ** 0.5)}


def init_wslinear(key, fin, fout, gain=2.0):
    return {"w": jax.random.normal(key, (fin, fout), jnp.float32),
            "b": jnp.zeros((fout,), jnp.float32),
            "scale": float((gain / fin) ** 0.5)}


def init_synthesis_block(key, cin, cout, w_dim, is_first):
    ks = jax.random.split(key, 4)
    p = {"is_first": is_first}
    if is_first:
        p["conv"] = init_wsconv3x3(ks[0], cin, cout)
    else:
        p["conv1"] = init_wsconv3x3(ks[0], cin, cout)
        p["conv2"] = init_wsconv3x3(ks[1], cout, cout)
    p["noise1_w"] = jnp.zeros((cout,), jnp.float32)      # StyleGAN: zero-init noise weights
    p["noise2_w"] = jnp.zeros((cout,), jnp.float32)
    p["style_scale"] = init_wslinear(ks[2], w_dim, cout)  # shared AdaIN module per block
    p["style_shift"] = init_wslinear(ks[3], w_dim, cout)
    return p


def init_synthesis_network(key, w_dim):
    keys = jax.random.split(key, 16)
    params = {"learned_constant": jax.random.normal(keys[0], (1, 4, 4, 256), jnp.float32)}
    params["init_block"] = init_synthesis_block(keys[1], w_dim, 256, w_dim, True)
    chans = [(256, 256), (256, 128), (128, 64), (64, 32), (32, 16)]
    params["upscale_blocks"] = [
        init_synthesis_block(keys[2 + i], ci, co, w_dim, False)
        for i, (ci, co) in enumerate(chans)
    ]
    rgb_in = [256, 256, 128, 64, 32, 16]
    params["to_rgb"] = [init_wsconv1x1(keys[8 + i], c, 3, gain=1.0)
                        for i, c in enumerate(rgb_in)]
    return params


# =============================================================================
# Forward pass
# =============================================================================

def synthesis_block_forward(p, x, w1, w2, apply_noise, noise_key):
    if w2 is None:
        w2 = w1
    s1 = style_linear(w1, p["style_scale"])
    t1 = style_linear(w1, p["style_shift"])
    s2 = style_linear(w2, p["style_scale"])
    t2 = style_linear(w2, p["style_shift"])
    if p["is_first"]:
        return init_block_apply(x, p, s1, t1, s2, t2, apply_noise, noise_key)
    x = upsample2x_bilinear_nhwc(x)
    return upscale_block_apply(x, p, s1, t1, s2, t2, apply_noise, noise_key)


def synthesis_forward(params, w, current_level, alpha, apply_noise, noise_key):
    """w: (N, w_dim). Returns RGB in NCHW: (N, 3, 4*2**current_level, ...)."""
    x = synthesis_block_forward(params["init_block"], params["learned_constant"],
                                w, w, apply_noise, jax.random.fold_in(noise_key, 0))
    if current_level == 0:
        return to_rgb_nchw(x, params["to_rgb"][0])

    prev_rgb = None
    for level in range(1, current_level + 1):
        if alpha < 1.0 and level == current_level:
            # Only the blend level's previous-resolution RGB is ever used.
            prev_rgb = to_rgb_nchw(x, params["to_rgb"][level - 1])
        x = synthesis_block_forward(params["upscale_blocks"][level - 1], x, w, w,
                                    apply_noise, jax.random.fold_in(noise_key, level))
    rgb = to_rgb_nchw(x, params["to_rgb"][current_level])
    if alpha < 1.0:
        N, _, H, W = rgb.shape
        prev_up = jax.image.resize(prev_rgb, (N, 3, H, W), method="bilinear")
        rgb = alpha * rgb + (1.0 - alpha) * prev_up
    return rgb


# =============================================================================
# Demo
# =============================================================================

if __name__ == "__main__":
    # w_dim must be 256 so that the init block's WSConv2d(in_channel=w_dim)
    # is consistent with the 256-channel learned constant (as in the module).
    w_dim = 256
    batch = 2
    current_level = 2    # output resolution 4 * 2**2 = 16
    alpha = 0.5          # exercise the progressive-growing blend path
    apply_noise = True   # noise weights are zero-initialized, as in StyleGAN

    params = init_synthesis_network(jax.random.PRNGKey(0), w_dim)
    w = jax.random.normal(jax.random.PRNGKey(1), (batch, w_dim), jnp.float32)

    rgb = synthesis_forward(params, w, current_level, alpha, apply_noise,
                            noise_key=jax.random.PRNGKey(2))
    rgb = jax.block_until_ready(rgb)

    assert rgb.shape == (batch, 3, 16, 16), rgb.shape
    assert rgb.dtype == jnp.float32
    assert bool(jnp.all(jnp.isfinite(rgb)))
    print("KERNEL_OK")
</pallas_src>

<mosaic_0001>
module attributes {stable_mosaic.version = 11 : i64} {
  func.func @_init_block_kernel(%arg0: i32, %arg1: memref<1x16x256xf32, #tpu.memory_space<vmem>>, %arg2: memref<9x256x256xbf16, #tpu.memory_space<vmem>>, %arg3: memref<1x256xf32, #tpu.memory_space<vmem>>, %arg4: memref<1x24x1xf32, #tpu.memory_space<vmem>>, %arg5: memref<1x16x1xf32, #tpu.memory_space<vmem>>, %arg6: memref<1x1x256xf32, #tpu.memory_space<vmem>>, %arg7: memref<1x24x1xf32, #tpu.memory_space<vmem>>, %arg8: memref<1x1x256xf32, #tpu.memory_space<vmem>>, %arg9: memref<1x1x256xf32, #tpu.memory_space<vmem>>, %arg10: memref<1x1x256xf32, #tpu.memory_space<vmem>>, %arg11: memref<1x1x256xf32, #tpu.memory_space<vmem>>, %arg12: memref<1x1x256xf32, #tpu.memory_space<vmem>>, %arg13: memref<1x16x256xbf16, #tpu.memory_space<vmem>>, %arg14: memref<44x256xbf16, #tpu.memory_space<vmem>>) attributes {dimension_semantics = [#tpu.dimension_semantics<parallel>], iteration_bounds = array<i64: 2>, scalar_prefetch = 0 : i64, scratch_operands = 1 : i64, tpu.core_type = #tpu.core_type<tc>, window_params = [{pipeline_mode = #tpu.pipeline_mode<synchronous>, transform_indices = @transform_0, window_bounds = array<i64: 1, 16, 256>}, {pipeline_mode = #tpu.pipeline_mode<synchronous>, transform_indices = @transform_1, window_bounds = array<i64: 9, 256, 256>}, {pipeline_mode = #tpu.pipeline_mode<synchronous>, transform_indices = @transform_2, window_bounds = array<i64: 1, 256>}, {pipeline_mode = #tpu.pipeline_mode<synchronous>, transform_indices = @transform_3, window_bounds = array<i64: 1, 24, 1>}, {transform_indices = @transform_4, window_bounds = array<i64: 1, 16, 1>}, {pipeline_mode = #tpu.pipeline_mode<synchronous>, transform_indices = @transform_5, window_bounds = array<i64: 1, 1, 256>}, {transform_indices = @transform_6, window_bounds = array<i64: 1, 24, 1>}, {pipeline_mode = #tpu.pipeline_mode<synchronous>, transform_indices = @transform_7, window_bounds = array<i64: 1, 1, 256>}, {transform_indices = @transform_8, window_bounds = array<i64: 1, 1, 256>}, {transform_indices = @transform_9, window_bounds = array<i64: 1, 1, 256>}, {transform_indices = @transform_10, window_bounds = array<i64: 1, 1, 256>}, {transform_indices = @transform_11, window_bounds = array<i64: 1, 1, 256>}, {transform_indices = @transform_12, window_bounds = array<i64: 1, 16, 256>}]} {
    %c0 = arith.constant 0 : index
    %c0_0 = arith.constant 0 : index
    %c0_1 = arith.constant 0 : index
    %0 = vector.load %arg1[%c0, %c0_0, %c0_1] : memref<1x16x256xf32, #tpu.memory_space<vmem>>, vector<1x16x256xf32>
    %1 = vector.shape_cast %0 : vector<1x16x256xf32> to vector<16x256xf32>
    %c0_2 = arith.constant 0 : index
    %c0_3 = arith.constant 0 : index
    %c0_4 = arith.constant 0 : index
    %2 = vector.load %arg5[%c0_2, %c0_3, %c0_4] : memref<1x16x1xf32, #tpu.memory_space<vmem>>, vector<1x16x1xf32>
    %3 = vector.shape_cast %2 : vector<1x16x1xf32> to vector<16x1xf32>
    %c0_5 = arith.constant 0 : index
    %c0_6 = arith.constant 0 : index
    %c0_7 = arith.constant 0 : index
    %4 = vector.load %arg6[%c0_5, %c0_6, %c0_7] : memref<1x1x256xf32, #tpu.memory_space<vmem>>, vector<1x1x256xf32>
    %5 = vector.shape_cast %4 : vector<1x1x256xf32> to vector<1x256xf32>
    %c0_8 = arith.constant 0 : index
    %c0_9 = arith.constant 0 : index
    %c0_10 = arith.constant 0 : index
    %6 = vector.load %arg9[%c0_8, %c0_9, %c0_10] : memref<1x1x256xf32, #tpu.memory_space<vmem>>, vector<1x1x256xf32>
    %7 = vector.shape_cast %6 : vector<1x1x256xf32> to vector<1x256xf32>
    %c0_11 = arith.constant 0 : index
    %c0_12 = arith.constant 0 : index
    %c0_13 = arith.constant 0 : index
    %8 = vector.load %arg10[%c0_11, %c0_12, %c0_13] : memref<1x1x256xf32, #tpu.memory_space<vmem>>, vector<1x1x256xf32>
    %9 = vector.shape_cast %8 : vector<1x1x256xf32> to vector<1x256xf32>
    %10 = vector.broadcast %3 : vector<16x1xf32> to vector<16x256xf32>
    %11 = vector.broadcast %5 : vector<1x256xf32> to vector<16x256xf32>
    %12 = arith.mulf %10, %11 : vector<16x256xf32>
    %13 = arith.addf %1, %12 : vector<16x256xf32>
    %cst = arith.constant dense<0.000000e+00> : vector<256xf32>
    %14 = vector.multi_reduction <add>, %13, %cst [0] : vector<16x256xf32> to vector<256xf32>
    %15 = vector.shape_cast %14 : vector<256xf32> to vector<1x256xf32>
    %cst_14 = arith.constant 1.600000e+01 : f32
    %16 = vector.broadcast %cst_14 : f32 to vector<1x256xf32>
    %17 = arith.divf %15, %16 : vector<1x256xf32>
    %18 = vector.broadcast %17 : vector<1x256xf32> to vector<16x256xf32>
    %19 = arith.subf %13, %18 : vector<16x256xf32>
    %20 = arith.mulf %19, %19 : vector<16x256xf32>
    %cst_15 = arith.constant dense<0.000000e+00> : vector<256xf32>
    %21 = vector.multi_reduction <add>, %20, %cst_15 [0] : vector<16x256xf32> to vector<256xf32>
    %22 = vector.shape_cast %21 : vector<256xf32> to vector<1x256xf32>
    %cst_16 = arith.constant 1.600000e+01 : f32
    %23 = vector.broadcast %cst_16 : f32 to vector<1x256xf32>
    %24 = arith.divf %22, %23 : vector<1x256xf32>
    %cst_17 = arith.constant 9.99999974E-6 : f32
    %25 = vector.broadcast %cst_17 : f32 to vector<1x256xf32>
    %26 = arith.addf %24, %25 : vector<1x256xf32>
    %27 = math.rsqrt %26 : vector<1x256xf32>
    %28 = vector.broadcast %27 : vector<1x256xf32> to vector<16x256xf32>
    %29 = arith.mulf %19, %28 : vector<16x256xf32>
    %30 = vector.broadcast %7 : vector<1x256xf32> to vector<16x256xf32>
    %31 = arith.mulf %30, %29 : vector<16x256xf32>
    %32 = vector.broadcast %9 : vector<1x256xf32> to vector<16x256xf32>
    %33 = arith.addf %31, %32 : vector<16x256xf32>
    %cst_18 = arith.constant 2.000000e-01 : f32
    %34 = vector.broadcast %cst_18 : f32 to vector<16x256xf32>
    %35 = arith.mulf %34, %33 : vector<16x256xf32>
    %36 = arith.maximumf %33, %35 : vector<16x256xf32>
    %37 = arith.truncf %36 : vector<16x256xf32> to vector<16x256xbf16>
    %cst_19 = arith.constant 0.000000e+00 : bf16
    %38 = vector.broadcast %cst_19 : bf16 to vector<44x256xbf16>
    %c0_20 = arith.constant 0 : index
    %c0_21 = arith.constant 0 : index
    %39 = vector.load %arg14[%c0_20, %c0_21] : memref<44x256xbf16, #tpu.memory_space<vmem>>, vector<44x256xbf16>
    tpu.vector_store %arg14[%c0_20, %c0_21], %38 {strides = array<i32>} : memref<44x256xbf16, #tpu.memory_space<vmem>>, vector<44x256xbf16>,
    %40 = vector.extract_strided_slice %37 {offsets = [0, 0], sizes = [4, 256], strides = [1, 1]} : vector<16x256xbf16> to vector<4x256xbf16>
    %c7 = arith.constant 7 : index
    %c0_22 = arith.constant 0 : index
    %41 = vector.load %arg14[%c7, %c0_22] : memref<44x256xbf16, #tpu.memory_space<vmem>>, vector<4x256xbf16>
    tpu.vector_store %arg14[%c7, %c0_22], %40 {strides = array<i32>} : memref<44x256xbf16, #tpu.memory_space<vmem>>, vector<4x256xbf16>,
    %42 = vector.extract_strided_slice %37 {offsets = [4, 0], sizes = [4, 256], strides = [1, 1]} : vector<16x256xbf16> to vector<4x256xbf16>
    %c13 = arith.constant 13 : index
    %c0_23 = arith.constant 0 : index
    %43 = vector.load %arg14[%c13, %c0_23] : memref<44x256xbf16, #tpu.memory_space<vmem>>, vector<4x256xbf16>
    tpu.vector_store %arg14[%c13, %c0_23], %42 {strides = array<i32>} : memref<44x256xbf16, #tpu.memory_space<vmem>>, vector<4x256xbf16>,
    %44 = vector.extract_strided_slice %37 {offsets = [8, 0], sizes = [4, 256], strides = [1, 1]} : vector<16x256xbf16> to vector<4x256xbf16>
    %c19 = arith.constant 19 : index
    %c0_24 = arith.constant 0 : index
    %45 = vector.load %arg14[%c19, %c0_24] : memref<44x256xbf16, #tpu.memory_space<vmem>>, vector<4x256xbf16>
    tpu.vector_store %arg14[%c19, %c0_24], %44 {strides = array<i32>} : memref<44x256xbf16, #tpu.memory_space<vmem>>, vector<4x256xbf16>,
    %46 = vector.extract_strided_slice %37 {offsets = [12, 0], sizes = [4, 256], strides = [1, 1]} : vector<16x256xbf16> to vector<4x256xbf16>
    %c25 = arith.constant 25 : index
    %c0_25 = arith.constant 0 : index
    %47 = vector.load %arg14[%c25, %c0_25] : memref<44x256xbf16, #tpu.memory_space<vmem>>, vector<4x256xbf16>
    tpu.vector_store %arg14[%c25, %c0_25], %46 {strides = array<i32>} : memref<44x256xbf16, #tpu.memory_space<vmem>>, vector<4x256xbf16>,
    %c0_26 = arith.constant 0 : index
    %c0_27 = arith.constant 0 : index
    %48 = vector.load %arg14[%c0_26, %c0_27] : memref<44x256xbf16, #tpu.memory_space<vmem>>, vector<24x256xbf16>
    %c0_28 = arith.constant 0 : index
    %c0_29 = arith.constant 0 : index
    %c0_30 = arith.constant 0 : index
    %49 = vector.load %arg2[%c0_28, %c0_29, %c0_30] : memref<9x256x256xbf16, #tpu.memory_space<vmem>>, vector<1x256x256xbf16>
    %50 = vector.shape_cast %49 : vector<1x256x256xbf16> to vector<256x256xbf16>
    %cst_31 = arith.constant dense<0.000000e+00> : vector<24x256xf32>
    %51 = tpu.matmul %48, %50, %cst_31 {dimension_numbers = #tpu.dot_dimension_numbers<[1], [0], [0], [1], [0, 0, 1, 1], [], []>} : vector<24x256xbf16>, vector<256x256xbf16>, vector<24x256xf32> -> vector<24x256xf32>
    %c1 = arith.constant 1 : index
    %c0_32 = arith.constant 0 : index
    %52 = vector.load %arg14[%c1, %c0_32] : memref<44x256xbf16, #tpu.memory_space<vmem>>, vector<24x256xbf16>
    %c1_33 = arith.constant 1 : index
    %c0_34 = arith.constant 0 : index
    %c0_35 = arith.constant 0 : index
    %53 = vector.load %arg2[%c1_33, %c0_34, %c0_35] : memref<9x256x256xbf16, #tpu.memory_space<vmem>>, vector<1x256x256xbf16>
    %54 = vector.shape_cast %53 : vector<1x256x256xbf16> to vector<256x256xbf16>
    %cst_36 = arith.constant dense<0.000000e+00> : vector<24x256xf32>
    %55 = tpu.matmul %52, %54, %cst_36 {dimension_numbers = #tpu.dot_dimension_numbers<[1], [0], [0], [1], [0, 0, 1, 1], [], []>} : vector<24x256xbf16>, vector<256x256xbf16>, vector<24x256xf32> -> vector<24x256xf32>
    %56 = arith.addf %51, %55 : vector<24x256xf32>
    %c2 = arith.constant 2 : index
    %c0_37 = arith.constant 0 : index
    %57 = vector.load %arg14[%c2, %c0_37] : memref<44x256xbf16, #tpu.memory_space<vmem>>, vector<24x256xbf16>
    %c2_38 = arith.constant 2 : index
    %c0_39 = arith.constant 0 : index
    %c0_40 = arith.constant 0 : index
    %58 = vector.load %arg2[%c2_38, %c0_39, %c0_40] : memref<9x256x256xbf16, #tpu.memory_space<vmem>>, vector<1x256x256xbf16>
    %59 = vector.shape_cast %58 : vector<1x256x256xbf16> to vector<256x256xbf16>
    %cst_41 = arith.constant dense<0.000000e+00> : vector<24x256xf32>
    %60 = tpu.matmul %57, %59, %cst_41 {dimension_numbers = #tpu.dot_dimension_numbers<[1], [0], [0], [1], [0, 0, 1, 1], [], []>} : vector<24x256xbf16>, vector<256x256xbf16>, vector<24x256xf32> -> vector<24x256xf32>
    %61 = arith.addf %56, %60 : vector<24x256xf32>
    %c6 = arith.constant 6 : index
    %c0_42 = arith.constant 0 : index
    %62 = vector.load %arg14[%c6, %c0_42] : memref<44x256xbf16, #tpu.memory_space<vmem>>, vector<24x256xbf16>
    %c3 = arith.constant 3 : index
    %c0_43 = arith.constant 0 : index
    %c0_44 = arith.constant 0 : index
    %63 = vector.load %arg2[%c3, %c0_43, %c0_44] : memref<9x256x256xbf16, #tpu.memory_space<vmem>>, vector<1x256x256xbf16>
    %64 = vector.shape_cast %63 : vector<1x256x256xbf16> to vector<256x256xbf16>
    %cst_45 = arith.constant dense<0.000000e+00> : vector<24x256xf32>
    %65 = tpu.matmul %62, %64, %cst_45 {dimension_numbers = #tpu.dot_dimension_numbers<[1], [0], [0], [1], [0, 0, 1, 1], [], []>} : vector<24x256xbf16>, vector<256x256xbf16>, vector<24x256xf32> -> vector<24x256xf32>
    %66 = arith.addf %61, %65 : vector<24x256xf32>
    %c7_46 = arith.constant 7 : index
    %c0_47 = arith.constant 0 : index
    %67 = vector.load %arg14[%c7_46, %c0_47] : memref<44x256xbf16, #tpu.memory_space<vmem>>, vector<24x256xbf16>
    %c4 = arith.constant 4 : index
    %c0_48 = arith.constant 0 : index
    %c0_49 = arith.constant 0 : index
    %68 = vector.load %arg2[%c4, %c0_48, %c0_49] : memref<9x256x256xbf16, #tpu.memory_space<vmem>>, vector<1x256x256xbf16>
    %69 = vector.shape_cast %68 : vector<1x256x256xbf16> to vector<256x256xbf16>
    %cst_50 = arith.constant dense<0.000000e+00> : vector<24x256xf32>
    %70 = tpu.matmul %67, %69, %cst_50 {dimension_numbers = #tpu.dot_dimension_numbers<[1], [0], [0], [1], [0, 0, 1, 1], [], []>} : vector<24x256xbf16>, vector<256x256xbf16>, vector<24x256xf32> -> vector<24x256xf32>
    %71 = arith.addf %66, %70 : vector<24x256xf32>
    %c8 = arith.constant 8 : index
    %c0_51 = arith.constant 0 : index
    %72 = vector.load %arg14[%c8, %c0_51] : memref<44x256xbf16, #tpu.memory_space<vmem>>, vector<24x256xbf16>
    %c5 = arith.constant 5 : index
    %c0_52 = arith.constant 0 : index
    %c0_53 = arith.constant 0 : index
    %73 = vector.load %arg2[%c5, %c0_52, %c0_53] : memref<9x256x256xbf16, #tpu.memory_space<vmem>>, vector<1x256x256xbf16>
    %74 = vector.shape_cast %73 : vector<1x256x256xbf16> to vector<256x256xbf16>
    %cst_54 = arith.constant dense<0.000000e+00> : vector<24x256xf32>
    %75 = tpu.matmul %72, %74, %cst_54 {dimension_numbers = #tpu.dot_dimension_numbers<[1], [0], [0], [1], [0, 0, 1, 1], [], []>} : vector<24x256xbf16>, vector<256x256xbf16>, vector<24x256xf32> -> vector<24x256xf32>
    %76 = arith.addf %71, %75 : vector<24x256xf32>
    %c12 = arith.constant 12 : index
    %c0_55 = arith.constant 0 : index
    %77 = vector.load %arg14[%c12, %c0_55] : memref<44x256xbf16, #tpu.memory_space<vmem>>, vector<24x256xbf16>
    %c6_56 = arith.constant 6 : index
    %c0_57 = arith.constant 0 : index
    %c0_58 = arith.constant 0 : index
    %78 = vector.load %arg2[%c6_56, %c0_57, %c0_58] : memref<9x256x256xbf16, #tpu.memory_space<vmem>>, vector<1x256x256xbf16>
    %79 = vector.shape_cast %78 : vector<1x256x256xbf16> to vector<256x256xbf16>
    %cst_59 = arith.constant dense<0.000000e+00> : vector<24x256xf32>
    %80 = tpu.matmul %77, %79, %cst_59 {dimension_numbers = #tpu.dot_dimension_numbers<[1], [0], [0], [1], [0, 0, 1, 1], [], []>} : vector<24x256xbf16>, vector<256x256xbf16>, vector<24x256xf32> -> vector<24x256xf32>
    %81 = arith.addf %76, %80 : vector<24x256xf32>
    %c13_60 = arith.constant 13 : index
    %c0_61 = arith.constant 0 : index
    %82 = vector.load %arg14[%c13_60, %c0_61] : memref<44x256xbf16, #tpu.memory_space<vmem>>, vector<24x256xbf16>
    %c7_62 = arith.constant 7 : index
    %c0_63 = arith.constant 0 : index
    %c0_64 = arith.constant 0 : index
    %83 = vector.load %arg2[%c7_62, %c0_63, %c0_64] : memref<9x256x256xbf16, #tpu.memory_space<vmem>>, vector<1x256x256xbf16>
    %84 = vector.shape_cast %83 : vector<1x256x256xbf16> to vector<256x256xbf16>
    %cst_65 = arith.constant dense<0.000000e+00> : vector<24x256xf32>
    %85 = tpu.matmul %82, %84, %cst_65 {dimension_numbers = #tpu.dot_dimension_numbers<[1], [0], [0], [1], [0, 0, 1, 1], [], []>} : vector<24x256xbf16>, vector<256x256xbf16>, vector<24x256xf32> -> vector<24x256xf32>
    %86 = arith.addf %81, %85 : vector<24x256xf32>
    %c14 = arith.constant 14 : index
    %c0_66 = arith.constant 0 : index
    %87 = vector.load %arg14[%c14, %c0_66] : memref<44x256xbf16, #tpu.memory_space<vmem>>, vector<24x256xbf16>
    %c8_67 = arith.constant 8 : index
    %c0_68 = arith.constant 0 : index
    %c0_69 = arith.constant 0 : index
    %88 = vector.load %arg2[%c8_67, %c0_68, %c0_69] : memref<9x256x256xbf16, #tpu.memory_space<vmem>>, vector<1x256x256xbf16>
    %89 = vector.shape_cast %88 : vector<1x256x256xbf16> to vector<256x256xbf16>
    %cst_70 = arith.constant dense<0.000000e+00> : vector<24x256xf32>
    %90 = tpu.matmul %87, %89, %cst_70 {dimension_numbers = #tpu.dot_dimension_numbers<[1], [0], [0], [1], [0, 0, 1, 1], [], []>} : vector<24x256xbf16>, vector<256x256xbf16>, vector<24x256xf32> -> vector<24x256xf32>
    %91 = arith.addf %86, %90 : vector<24x256xf32>
    %c0_71 = arith.constant 0 : index
    %c0_72 = arith.constant 0 : index
    %92 = vector.load %arg3[%c0_71, %c0_72] : memref<1x256xf32, #tpu.memory_space<vmem>>, vector<1x256xf32>
    %93 = vector.broadcast %92 : vector<1x256xf32> to vector<24x256xf32>
    %94 = arith.addf %91, %93 : vector<24x256xf32>
    %c0_73 = arith.constant 0 : index
    %c0_74 = arith.constant 0 : index
    %c0_75 = arith.constant 0 : index
    %95 = vector.load %arg7[%c0_73, %c0_74, %c0_75] : memref<1x24x1xf32, #tpu.memory_space<vmem>>, vector<1x24x1xf32>
    %96 = vector.shape_cast %95 : vector<1x24x1xf32> to vector<24x1xf32>
    %c0_76 = arith.constant 0 : index
    %c0_77 = arith.constant 0 : index
    %c0_78 = arith.constant 0 : index
    %97 = vector.load %arg8[%c0_76, %c0_77, %c0_78] : memref<1x1x256xf32, #tpu.memory_space<vmem>>, vector<1x1x256xf32>
    %98 = vector.shape_cast %97 : vector<1x1x256xf32> to vector<1x256xf32>
    %c0_79 = arith.constant 0 : index
    %c0_80 = arith.constant 0 : index
    %c0_81 = arith.constant 0 : index
    %99 = vector.load %arg11[%c0_79, %c0_80, %c0_81] : memref<1x1x256xf32, #tpu.memory_space<vmem>>, vector<1x1x256xf32>
    %100 = vector.shape_cast %99 : vector<1x1x256xf32> to vector<1x256xf32>
    %c0_82 = arith.constant 0 : index
    %c0_83 = arith.constant 0 : index
    %c0_84 = arith.constant 0 : index
    %101 = vector.load %arg12[%c0_82, %c0_83, %c0_84] : memref<1x1x256xf32, #tpu.memory_space<vmem>>, vector<1x1x256xf32>
    %102 = vector.shape_cast %101 : vector<1x1x256xf32> to vector<1x256xf32>
    %c0_85 = arith.constant 0 : index
    %c0_86 = arith.constant 0 : index
    %c0_87 = arith.constant 0 : index
    %103 = vector.load %arg4[%c0_85, %c0_86, %c0_87] : memref<1x24x1xf32, #tpu.memory_space<vmem>>, vector<1x24x1xf32>
    %104 = vector.shape_cast %103 : vector<1x24x1xf32> to vector<24x1xf32>
    %105 = vector.broadcast %96 : vector<24x1xf32> to vector<24x256xf32>
    %106 = vector.broadcast %98 : vector<1x256xf32> to vector<24x256xf32>
    %107 = arith.mulf %105, %106 : vector<24x256xf32>
    %108 = arith.addf %94, %107 : vector<24x256xf32>
    %109 = vector.broadcast %104 : vector<24x1xf32> to vector<24x256xf32>
    %110 = arith.mulf %108, %109 : vector<24x256xf32>
    %cst_88 = arith.constant dense<0.000000e+00> : vector<256xf32>
    %111 = vector.multi_reduction <add>, %110, %cst_88 [0] : vector<24x256xf32> to vector<256xf32>
    %112 = vector.shape_cast %111 : vector<256xf32> to vector<1x256xf32>
    %cst_89 = arith.constant 6.250000e-02 : f32
    %113 = vector.broadcast %cst_89 : f32 to vector<1x256xf32>
    %114 = arith.mulf %112, %113 : vector<1x256xf32>
    %115 = vector.broadcast %114 : vector<1x256xf32> to vector<24x256xf32>
    %116 = arith.subf %108, %115 : vector<24x256xf32>
    %117 = arith.mulf %116, %116 : vector<24x256xf32>
    %118 = vector.broadcast %104 : vector<24x1xf32> to vector<24x256xf32>
    %119 = arith.mulf %117, %118 : vector<24x256xf32>
    %cst_90 = arith.constant dense<0.000000e+00> : vector<256xf32>
    %120 = vector.multi_reduction <add>, %119, %cst_90 [0] : vector<24x256xf32> to vector<256xf32>
    %121 = vector.shape_cast %120 : vector<256xf32> to vector<1x256xf32>
    %cst_91 = arith.constant 6.250000e-02 : f32
    %122 = vector.broadcast %cst_91 : f32 to vector<1x256xf32>
    %123 = arith.mulf %121, %122 : vector<1x256xf32>
    %cst_92 = arith.constant 9.99999974E-6 : f32
    %124 = vector.broadcast %cst_92 : f32 to vector<1x256xf32>
    %125 = arith.addf %123, %124 : vector<1x256xf32>
    %126 = math.rsqrt %125 : vector<1x256xf32>
    %127 = vector.broadcast %126 : vector<1x256xf32> to vector<24x256xf32>
    %128 = arith.mulf %116, %127 : vector<24x256xf32>
    %129 = vector.broadcast %100 : vector<1x256xf32> to vector<24x256xf32>
    %130 = arith.mulf %129, %128 : vector<24x256xf32>
    %131 = vector.broadcast %102 : vector<1x256xf32> to vector<24x256xf32>
    %132 = arith.addf %130, %131 : vector<24x256xf32>
    %cst_93 = arith.constant 2.000000e-01 : f32
    %133 = vector.broadcast %cst_93 : f32 to vector<24x256xf32>
    %134 = arith.mulf %133, %132 : vector<24x256xf32>
    %135 = arith.maximumf %132, %134 : vector<24x256xf32>
    %136 = arith.truncf %135 : vector<24x256xf32> to vector<24x256xbf16>
    %137 = vector.extract_strided_slice %136 {offsets = [0, 0], sizes = [4, 256], strides = [1, 1]} : vector<24x256xbf16> to vector<4x256xbf16>
    %c0_94 = arith.constant 0 : index
    %c0_95 = arith.constant 0 : index
    %c0_96 = arith.constant 0 : index
    %138 = vector.load %arg13[%c0_94, %c0_95, %c0_96] : memref<1x16x256xbf16, #tpu.memory_space<vmem>>, vector<1x4x256xbf16>
    %139 = vector.shape_cast %138 : vector<1x4x256xbf16> to vector<4x256xbf16>
    %140 = vector.shape_cast %137 : vector<4x256xbf16> to vector<1x4x256xbf16>
    tpu.vector_store %arg13[%c0_94, %c0_95, %c0_96], %140 {strides = array<i32>} : memref<1x16x256xbf16, #tpu.memory_space<vmem>>, vector<1x4x256xbf16>,
    %141 = vector.extract_strided_slice %136 {offsets = [6, 0], sizes = [4, 256], strides = [1, 1]} : vector<24x256xbf16> to vector<4x256xbf16>
    %c0_97 = arith.constant 0 : index
    %c4_98 = arith.constant 4 : index
    %c0_99 = arith.constant 0 : index
    %142 = vector.load %arg13[%c0_97, %c4_98, %c0_99] : memref<1x16x256xbf16, #tpu.memory_space<vmem>>, vector<1x4x256xbf16>
    %143 = vector.shape_cast %142 : vector<1x4x256xbf16> to vector<4x256xbf16>
    %144 = vector.shape_cast %141 : vector<4x256xbf16> to vector<1x4x256xbf16>
    tpu.vector_store %arg13[%c0_97, %c4_98, %c0_99], %144 {strides = array<i32>} : memref<1x16x256xbf16, #tpu.memory_space<vmem>>, vector<1x4x256xbf16>,
    %145 = vector.extract_strided_slice %136 {offsets = [12, 0], sizes = [4, 256], strides = [1, 1]} : vector<24x256xbf16> to vector<4x256xbf16>
    %c0_100 = arith.constant 0 : index
    %c8_101 = arith.constant 8 : index
    %c0_102 = arith.constant 0 : index
    %146 = vector.load %arg13[%c0_100, %c8_101, %c0_102] : memref<1x16x256xbf16, #tpu.memory_space<vmem>>, vector<1x4x256xbf16>
    %147 = vector.shape_cast %146 : vector<1x4x256xbf16> to vector<4x256xbf16>
    %148 = vector.shape_cast %145 : vector<4x256xbf16> to vector<1x4x256xbf16>
    tpu.vector_store %arg13[%c0_100, %c8_101, %c0_102], %148 {strides = array<i32>} : memref<1x16x256xbf16, #tpu.memory_space<vmem>>, vector<1x4x256xbf16>,
    %149 = vector.extract_strided_slice %136 {offsets = [18, 0], sizes = [4, 256], strides = [1, 1]} : vector<24x256xbf16> to vector<4x256xbf16>
    %c0_103 = arith.constant 0 : index
    %c12_104 = arith.constant 12 : index
    %c0_105 = arith.constant 0 : index
    %150 = vector.load %arg13[%c0_103, %c12_104, %c0_105] : memref<1x16x256xbf16, #tpu.memory_space<vmem>>, vector<1x4x256xbf16>
    %151 = vector.shape_cast %150 : vector<1x4x256xbf16> to vector<4x256xbf16>
    %152 = vector.shape_cast %149 : vector<4x256xbf16> to vector<1x4x256xbf16>
    tpu.vector_store %arg13[%c0_103, %c12_104, %c0_105], %152 {strides = array<i32>} : memref<1x16x256xbf16, #tpu.memory_space<vmem>>, vector<1x4x256xbf16>,
    return
  }
  func.func @transform_0(%arg0: i32) -> (i32, i32, i32) {
    %c0_i32 = arith.constant 0 : i32
    %c0_i32_0 = arith.constant 0 : i32
    %c0_i32_1 = arith.constant 0 : i32
    %c0_i32_2 = arith.constant 0 : i32
    return %c0_i32, %c0_i32_0, %c0_i32_1 : i32, i32, i32
  }
  func.func @transform_1(%arg0: i32) -> (i32, i32, i32) {
    %c0_i32 = arith.constant 0 : i32
    %c0_i32_0 = arith.constant 0 : i32
    %c0_i32_1 = arith.constant 0 : i32
    %c0_i32_2 = arith.constant 0 : i32
    return %c0_i32, %c0_i32_0, %c0_i32_1 : i32, i32, i32
  }
  func.func @transform_2(%arg0: i32) -> (i32, i32) {
    %c0_i32 = arith.constant 0 : i32
    %c0_i32_0 = arith.constant 0 : i32
    %c0_i32_1 = arith.constant 0 : i32
    return %c0_i32, %c0_i32_0 : i32, i32
  }
  func.func @transform_3(%arg0: i32) -> (i32, i32, i32) {
    %c0_i32 = arith.constant 0 : i32
    %c0_i32_0 = arith.constant 0 : i32
    %c0_i32_1 = arith.constant 0 : i32
    %c0_i32_2 = arith.constant 0 : i32
    return %c0_i32, %c0_i32_0, %c0_i32_1 : i32, i32, i32
  }
  func.func @transform_4(%arg0: i32) -> (i32, i32, i32) {
    %c0_i32 = arith.constant 0 : i32
    %c0_i32_0 = arith.constant 0 : i32
    %c0_i32_1 = arith.constant 0 : i32
    return %arg0, %c0_i32, %c0_i32_0 : i32, i32, i32
  }
  func.func @transform_5(%arg0: i32) -> (i32, i32, i32) {
    %c0_i32 = arith.constant 0 : i32
    %c0_i32_0 = arith.constant 0 : i32
    %c0_i32_1 = arith.constant 0 : i32
    %c0_i32_2 = arith.constant 0 : i32
    return %c0_i32, %c0_i32_0, %c0_i32_1 : i32, i32, i32
  }
  func.func @transform_6(%arg0: i32) -> (i32, i32, i32) {
    %c0_i32 = arith.constant 0 : i32
    %c0_i32_0 = arith.constant 0 : i32
    %c0_i32_1 = arith.constant 0 : i32
    return %arg0, %c0_i32, %c0_i32_0 : i32, i32, i32
  }
  func.func @transform_7(%arg0: i32) -> (i32, i32, i32) {
    %c0_i32 = arith.constant 0 : i32
    %c0_i32_0 = arith.constant 0 : i32
    %c0_i32_1 = arith.constant 0 : i32
    %c0_i32_2 = arith.constant 0 : i32
    return %c0_i32, %c0_i32_0, %c0_i32_1 : i32, i32, i32
  }
  func.func @transform_8(%arg0: i32) -> (i32, i32, i32) {
    %c0_i32 = arith.constant 0 : i32
    %c0_i32_0 = arith.constant 0 : i32
    %c0_i32_1 = arith.constant 0 : i32
    return %arg0, %c0_i32, %c0_i32_0 : i32, i32, i32
  }
  func.func @transform_9(%arg0: i32) -> (i32, i32, i32) {
    %c0_i32 = arith.constant 0 : i32
    %c0_i32_0 = arith.constant 0 : i32
    %c0_i32_1 = arith.constant 0 : i32
    return %arg0, %c0_i32, %c0_i32_0 : i32, i32, i32
  }
  func.func @transform_10(%arg0: i32) -> (i32, i32, i32) {
    %c0_i32 = arith.constant 0 : i32
    %c0_i32_0 = arith.constant 0 : i32
    %c0_i32_1 = arith.constant 0 : i32
    return %arg0, %c0_i32, %c0_i32_0 : i32, i32, i32
  }
  func.func @transform_11(%arg0: i32) -> (i32, i32, i32) {
    %c0_i32 = arith.constant 0 : i32
    %c0_i32_0 = arith.constant 0 : i32
    %c0_i32_1 = arith.constant 0 : i32
    return %arg0, %c0_i32, %c0_i32_0 : i32, i32, i32
  }
  func.func @transform_12(%arg0: i32) -> (i32, i32, i32) {
    %c0_i32 = arith.constant 0 : i32
    %c0_i32_0 = arith.constant 0 : i32
    %c0_i32_1 = arith.constant 0 : i32
    return %arg0, %c0_i32, %c0_i32_0 : i32, i32, i32
  }
}

</mosaic_0001>

<llo_original>
// kernel: tpu_custom_call.1
$region0: #{tpu_custom_call.1}
  #allocation0 [shape = 'u32[]', space=smem, size = 0x4, offset = 0x4, fixed_abs, tag = 'smem constant byte address 0x4 - core index']
  #allocation1 [shape = 'u32[144,128]{1,0:T(1,128)}', space=vmem, size = 0x12000, scoped, tag = 'internal scratch']
  #allocation2 [shape = 'bf16[44,256]{1,0:T(8,128)(2,1)}', space=vmem, size = 0x6000, scoped, tag = 'scratch operand']
  %s0 = inlined_call_operand.hbm [shape: f32[1,16,256], index: 0, kind: input, shape index: {}]
  %s1 = inlined_call_operand.hbm [shape: bf16[9,256,256], index: 1, kind: input, shape index: {}]
  %s2 = inlined_call_operand.hbm [shape: f32[1,256], index: 2, kind: input, shape index: {}]
  %s3 = inlined_call_operand.hbm [shape: f32[1,24,1], index: 3, kind: input, shape index: {}]
  %s4 = inlined_call_operand.hbm [shape: f32[2,16,1], index: 4, kind: input, shape index: {}]
  %s5 = inlined_call_operand.hbm [shape: f32[1,1,256], index: 5, kind: input, shape index: {}]
  %s6 = inlined_call_operand.hbm [shape: f32[2,24,1], index: 6, kind: input, shape index: {}]
  %s7 = inlined_call_operand.hbm [shape: f32[1,1,256], index: 7, kind: input, shape index: {}]
  %s8 = inlined_call_operand.hbm [shape: f32[2,1,256], index: 8, kind: input, shape index: {}]
  %s9 = inlined_call_operand.hbm [shape: f32[2,1,256], index: 9, kind: input, shape index: {}]
  %s10 = inlined_call_operand.hbm [shape: f32[2,1,256], index: 10, kind: input, shape index: {}]
  %s11 = inlined_call_operand.hbm [shape: f32[2,1,256], index: 11, kind: input, shape index: {}]
  %s12 = inlined_call_operand.hbm [shape: bf16[2,16,256], index: 12, kind: output, shape index: {}]
  %s13 = sld [smem:[#allocation0]]
  $region129: #{tpu_custom_call.1} parent=0
    _
  %s15 = ssub.s32 1, %s13
  %s16 = scalar_select 0, %s15, %s13
  $region1: #{tpu_custom_call.1} parent=0
    #allocation3 [shape = 'u8[16384]{0}', space=vmem, size = 0x4000, scoped, tag = 'input window, operand 0, single buffered']
    #allocation4 [shape = 's32[2]{0}', space=sflag, size = 0x8, scoped, tag = 'scoped memory for tpu_custom_call.1']
    #allocation5 [shape = 's32[2]{0}', space=sflag, size = 0x8, scoped, tag = 'scoped memory for tpu_custom_call.1']
    #allocation6 [shape = 'u8[1179648]{0}', space=vmem, size = 0x120000, scoped, tag = 'input window, operand 1, single buffered']
    #allocation7 [shape = 's32[1]{0}', space=sflag, size = 0x4, scoped, tag = 'scoped memory for tpu_custom_call.1']
    #allocation8 [shape = 'u8[1024]{0}', space=vmem, size = 0x400, scoped, tag = 'input window, operand 2, single buffered']
    #allocation9 [shape = 'u8[12288]{0}', space=vmem, size = 0x3000, scoped, tag = 'input window, operand 3, single buffered']
    #allocation10 [shape = 's32[1]{0}', space=sflag, size = 0x4, scoped, tag = 'scoped memory for tpu_custom_call.1']
    #allocation11 [shape = 'u8[16384]{0}', space=vmem, size = 0x4000, scoped, tag = 'input window, operand 4']
    #allocation12 [shape = 'u8[1024]{0}', space=vmem, size = 0x400, scoped, tag = 'input window, operand 5, single buffered']
    #allocation13 [shape = 'u8[24576]{0}', space=vmem, size = 0x6000, scoped, tag = 'input window, operand 6']
    #allocation14 [shape = 'u8[1024]{0}', space=vmem, size = 0x400, scoped, tag = 'input window, operand 7, single buffered']
    #allocation15 [shape = 'u8[2048]{0}', space=vmem, size = 0x800, scoped, tag = 'input window, operand 8']
    #allocation16 [shape = 'u8[2048]{0}', space=vmem, size = 0x800, scoped, tag = 'input window, operand 9']
    #allocation17 [shape = 'u8[2048]{0}', space=vmem, size = 0x800, scoped, tag = 'input window, operand 10']
    #allocation18 [shape = 'u8[2048]{0}', space=vmem, size = 0x800, scoped, tag = 'input window, operand 11']
    #allocation19 [shape = 'u8[16384]{0}', space=vmem, size = 0x4000, scoped, tag = 'output window, operand 0']
    %17 = vsyncpa [#allocation4], 0
    %18 = vsyncpa [#allocation7], 0
    %19 = vsyncpa [#allocation10], 0
    %20 = vsyncpa [#allocation5], 0
    %s21 = scalar_lea.sflag [#allocation5], 1
    %22 = vsyncpa %s21, 0
    loop: start=0, step=1, limit=4
    $region2: #{tpu_custom_call.1} parent=1 // loop_pre_header
      _
    $region3: #{tpu_custom_call.1} parent=1 // loop_header
      %s24 = sphi 0, %s28
      %p25 = scmp.ge.s32.totalorder %s24, 4
      %s32 = sphi 0, %s32
      %s34 = sphi 0, %s32
      %s35 = sphi 0, %s34
      %s49 = sphi 0, %s35
      %s53 = sphi 0, %s53
      %s55 = sphi 0, %s53
      %s56 = sphi 0, %s55
      %s70 = sphi 0, %s56
      %s74 = sphi 0, %s74
      %s76 = sphi 0, %s74
      %s77 = sphi 0, %s76
      %s91 = sphi 0, %s77
      %s95 = sphi 0, %s95
      %s97 = sphi 0, %s95
      %s98 = sphi 0, %s97
      %s112 = sphi 0, %s98
      %s118 = sphi 0, %s120
      %s121 = sphi 0, %s118
      %s122 = sphi 0, %s121
      %s138 = sphi 0, %s122
      %s142 = sphi 0, %s142
      %s144 = sphi 0, %s142
      %s145 = sphi 0, %s144
      %s159 = sphi 0, %s145
      %s165 = sphi 0, %s167
      %s168 = sphi 0, %s165
      %s169 = sphi 0, %s168
      %s185 = sphi 0, %s169
      %s189 = sphi 0, %s189
      %s191 = sphi 0, %s189
      %s192 = sphi 0, %s191
      %s206 = sphi 0, %s192
      %s212 = sphi 0, %s214
      %s215 = sphi 0, %s212
      %s216 = sphi 0, %s215
      %s232 = sphi 0, %s216
      %s238 = sphi 0, %s240
      %s241 = sphi 0, %s238
      %s242 = sphi 0, %s241
      %s258 = sphi 0, %s242
      %s264 = sphi 0, %s266
      %s267 = sphi 0, %s264
      %s268 = sphi 0, %s267
      %s284 = sphi 0, %s268
      %s290 = sphi 0, %s292
      %s293 = sphi 0, %s290
      %s294 = sphi 0, %s293
      %s310 = sphi 0, %s294
      %s316 = sphi 0, %s318
      %s319 = sphi 0, %s316
      %s320 = sphi 0, %s319
      %s336 = sphi 0, %s320
    $region4: #{tpu_custom_call.1} parent=1 // loop_header_branch
      %27 = sbr.rel (%p25) target = $region8
    $region5: #{tpu_custom_call.1} parent=1 // loop_body
      %s29 = ssub.s32 %s24, 1
      %s30 = ssub.s32 %s24, 2
      %s31 = sadd.s32 %s24, 1
      %s33 = sadd.s32 %s32, 1
      %p36 = scmp.eq.s32.totalorder %s24, 1
      %p37 = scmp.ne.s32.totalorder %s32, %s34
      %p38 = scmp.eq.s32.totalorder %s24, 0
      %p39 = por %p37, %p38
      %p40 = scmp.ne.s32.totalorder %s32, %s34
      %p41 = scmp.eq.s32.totalorder %s29, 1
      %p42 = por %p40, %p41
      %p43 = scmp.ne.s32.totalorder %s34, %s35
      %p44 = scmp.eq.s32.totalorder %s29, 0
      %p45 = por %p43, %p44
      %p46 = scmp.ne.s32.totalorder %s34, %s35
      %p47 = scmp.eq.s32.totalorder %s30, 1
      %p48 = por %p46, %p47
      %p50 = scmp.ne.s32.totalorder %s35, %s49
      %p51 = scmp.eq.s32.totalorder %s30, 0
      %p52 = por %p50, %p51
      %s54 = sadd.s32 %s53, 1
      %p57 = scmp.eq.s32.totalorder %s24, 1
      %p58 = scmp.ne.s32.totalorder %s53, %s55
      %p59 = scmp.eq.s32.totalorder %s24, 0
      %p60 = por %p58, %p59
      %p61 = scmp.ne.s32.totalorder %s53, %s55
      %p62 = scmp.eq.s32.totalorder %s29, 1
      %p63 = por %p61, %p62
      %p64 = scmp.ne.s32.totalorder %s55, %s56
      %p65 = scmp.eq.s32.totalorder %s29, 0
      %p66 = por %p64, %p65
      %p67 = scmp.ne.s32.totalorder %s55, %s56
      %p68 = scmp.eq.s32.totalorder %s30, 1
      %p69 = por %p67, %p68
      %p71 = scmp.ne.s32.totalorder %s56, %s70
      %p72 = scmp.eq.s32.totalorder %s30, 0
      %p73 = por %p71, %p72
      %s75 = sadd.s32 %s74, 1
      %p78 = scmp.eq.s32.totalorder %s24, 1
      %p79 = scmp.ne.s32.totalorder %s74, %s76
      %p80 = scmp.eq.s32.totalorder %s24, 0
      %p81 = por %p79, %p80
      %p82 = scmp.ne.s32.totalorder %s74, %s76
      %p83 = scmp.eq.s32.totalorder %s29, 1
      %p84 = por %p82, %p83
      %p85 = scmp.ne.s32.totalorder %s76, %s77
      %p86 = scmp.eq.s32.totalorder %s29, 0
      %p87 = por %p85, %p86
      %p88 = scmp.ne.s32.totalorder %s76, %s77
      %p89 = scmp.eq.s32.totalorder %s30, 1
      %p90 = por %p88, %p89
      %p92 = scmp.ne.s32.totalorder %s77, %s91
      %p93 = scmp.eq.s32.totalorder %s30, 0
      %p94 = por %p92, %p93
      %s96 = sadd.s32 %s95, 1
      %p99 = scmp.eq.s32.totalorder %s24, 1
      %p100 = scmp.ne.s32.totalorder %s95, %s97
      %p101 = scmp.eq.s32.totalorder %s24, 0
      %p102 = por %p100, %p101
      %p103 = scmp.ne.s32.totalorder %s95, %s97
      %p104 = scmp.eq.s32.totalorder %s29, 1
      %p105 = por %p103, %p104
      %p106 = scmp.ne.s32.totalorder %s97, %s98
      %p107 = scmp.eq.s32.totalorder %s29, 0
      %p108 = por %p106, %p107
      %p109 = scmp.ne.s32.totalorder %s97, %s98
      %p110 = scmp.eq.s32.totalorder %s30, 1
      %p111 = por %p109, %p110
      %p113 = scmp.ne.s32.totalorder %s98, %s112
      %p114 = scmp.eq.s32.totalorder %s30, 0
      %p115 = por %p113, %p114
      %s116 = ssub.s32 %s24, %s31
      %p117 = scmp.eq.s32.totalorder %s116, 0
      %s119 = sadd.s32 %s118, 1
      %s120 = scalar_select %p117, %s118, %s119
      %p123 = pneg %p117
      %p124 = scmp.eq.s32.totalorder %s24, 1
      %p125 = por %p123, %p124
      %p126 = scmp.ne.s32.totalorder %s118, %s121
      %p127 = scmp.eq.s32.totalorder %s24, 0
      %p128 = por %p126, %p127
      %p129 = scmp.ne.s32.totalorder %s118, %s121
      %p130 = scmp.eq.s32.totalorder %s29, 1
      %p131 = por %p129, %p130
      %p132 = scmp.ne.s32.totalorder %s121, %s122
      %p133 = scmp.eq.s32.totalorder %s29, 0
      %p134 = por %p132, %p133
      %p135 = scmp.ne.s32.totalorder %s121, %s122
      %p136 = scmp.eq.s32.totalorder %s30, 1
      %p137 = por %p135, %p136
      %p139 = scmp.ne.s32.totalorder %s122, %s138
      %p140 = scmp.eq.s32.totalorder %s30, 0
      %p141 = por %p139, %p140
      %s143 = sadd.s32 %s142, 1
      %p146 = scmp.eq.s32.totalorder %s24, 1
      %p147 = scmp.ne.s32.totalorder %s142, %s144
      %p148 = scmp.eq.s32.totalorder %s24, 0
      %p149 = por %p147, %p148
      %p150 = scmp.ne.s32.totalorder %s142, %s144
      %p151 = scmp.eq.s32.totalorder %s29, 1
      %p152 = por %p150, %p151
      %p153 = scmp.ne.s32.totalorder %s144, %s145
      %p154 = scmp.eq.s32.totalorder %s29, 0
      %p155 = por %p153, %p154
      %p156 = scmp.ne.s32.totalorder %s144, %s145
      %p157 = scmp.eq.s32.totalorder %s30, 1
      %p158 = por %p156, %p157
      %p160 = scmp.ne.s32.totalorder %s145, %s159
      %p161 = scmp.eq.s32.totalorder %s30, 0
      %p162 = por %p160, %p161
      %s163 = ssub.s32 %s24, %s31
      %p164 = scmp.eq.s32.totalorder %s163, 0
      %s166 = sadd.s32 %s165, 1
      %s167 = scalar_select %p164, %s165, %s166
      %p170 = pneg %p164
      %p171 = scmp.eq.s32.totalorder %s24, 1
      %p172 = por %p170, %p171
      %p173 = scmp.ne.s32.totalorder %s165, %s168
      %p174 = scmp.eq.s32.totalorder %s24, 0
      %p175 = por %p173, %p174
      %p176 = scmp.ne.s32.totalorder %s165, %s168
      %p177 = scmp.eq.s32.totalorder %s29, 1
      %p178 = por %p176, %p177
      %p179 = scmp.ne.s32.totalorder %s168, %s169
      %p180 = scmp.eq.s32.totalorder %s29, 0
      %p181 = por %p179, %p180
      %p182 = scmp.ne.s32.totalorder %s168, %s169
      %p183 = scmp.eq.s32.totalorder %s30, 1
      %p184 = por %p182, %p183
      %p186 = scmp.ne.s32.totalorder %s169, %s185
      %p187 = scmp.eq.s32.totalorder %s30, 0
      %p188 = por %p186, %p187
      %s190 = sadd.s32 %s189, 1
      %p193 = scmp.eq.s32.totalorder %s24, 1
      %p194 = scmp.ne.s32.totalorder %s189, %s191
      %p195 = scmp.eq.s32.totalorder %s24, 0
      %p196 = por %p194, %p195
      %p197 = scmp.ne.s32.totalorder %s189, %s191
      %p198 = scmp.eq.s32.totalorder %s29, 1
      %p199 = por %p197, %p198
      %p200 = scmp.ne.s32.totalorder %s191, %s192
      %p201 = scmp.eq.s32.totalorder %s29, 0
      %p202 = por %p200, %p201
      %p203 = scmp.ne.s32.totalorder %s191, %s192
      %p204 = scmp.eq.s32.totalorder %s30, 1
      %p205 = por %p203, %p204
      %p207 = scmp.ne.s32.totalorder %s192, %s206
      %p208 = scmp.eq.s32.totalorder %s30, 0
      %p209 = por %p207, %p208
      %s210 = ssub.s32 %s24, %s31
      %p211 = scmp.eq.s32.totalorder %s210, 0
      %s213 = sadd.s32 %s212, 1
      %s214 = scalar_select %p211, %s212, %s213
      %p217 = pneg %p211
      %p218 = scmp.eq.s32.totalorder %s24, 1
      %p219 = por %p217, %p218
      %p220 = scmp.ne.s32.totalorder %s212, %s215
      %p221 = scmp.eq.s32.totalorder %s24, 0
      %p222 = por %p220, %p221
      %p223 = scmp.ne.s32.totalorder %s212, %s215
      %p224 = scmp.eq.s32.totalorder %s29, 1
      %p225 = por %p223, %p224
      %p226 = scmp.ne.s32.totalorder %s215, %s216
      %p227 = scmp.eq.s32.totalorder %s29, 0
      %p228 = por %p226, %p227
      %p229 = scmp.ne.s32.totalorder %s215, %s216
      %p230 = scmp.eq.s32.totalorder %s30, 1
      %p231 = por %p229, %p230
      %p233 = scmp.ne.s32.totalorder %s216, %s232
      %p234 = scmp.eq.s32.totalorder %s30, 0
      %p235 = por %p233, %p234
      %s236 = ssub.s32 %s24, %s31
      %p237 = scmp.eq.s32.totalorder %s236, 0
      %s239 = sadd.s32 %s238, 1
      %s240 = scalar_select %p237, %s238, %s239
      %p243 = pneg %p237
      %p244 = scmp.eq.s32.totalorder %s24, 1
      %p245 = por %p243, %p244
      %p246 = scmp.ne.s32.totalorder %s238, %s241
      %p247 = scmp.eq.s32.totalorder %s24, 0
      %p248 = por %p246, %p247
      %p249 = scmp.ne.s32.totalorder %s238, %s241
      %p250 = scmp.eq.s32.totalorder %s29, 1
      %p251 = por %p249, %p250
      %p252 = scmp.ne.s32.totalorder %s241, %s242
      %p253 = scmp.eq.s32.totalorder %s29, 0
      %p254 = por %p252, %p253
      %p255 = scmp.ne.s32.totalorder %s241, %s242
      %p256 = scmp.eq.s32.totalorder %s30, 1
      %p257 = por %p255, %p256
      %p259 = scmp.ne.s32.totalorder %s242, %s258
      %p260 = scmp.eq.s32.totalorder %s30, 0
      %p261 = por %p259, %p260
      %s262 = ssub.s32 %s24, %s31
      %p263 = scmp.eq.s32.totalorder %s262, 0
      %s265 = sadd.s32 %s264, 1
      %s266 = scalar_select %p263, %s264, %s265
      %p269 = pneg %p263
      %p270 = scmp.eq.s32.totalorder %s24, 1
      %p271 = por %p269, %p270
      %p272 = scmp.ne.s32.totalorder %s264, %s267
      %p273 = scmp.eq.s32.totalorder %s24, 0
      %p274 = por %p272, %p273
      %p275 = scmp.ne.s32.totalorder %s264, %s267
      %p276 = scmp.eq.s32.totalorder %s29, 1
      %p277 = por %p275, %p276
      %p278 = scmp.ne.s32.totalorder %s267, %s268
      %p279 = scmp.eq.s32.totalorder %s29, 0
      %p280 = por %p278, %p279
      %p281 = scmp.ne.s32.totalorder %s267, %s268
      %p282 = scmp.eq.s32.totalorder %s30, 1
      %p283 = por %p281, %p282
      %p285 = scmp.ne.s32.totalorder %s268, %s284
      %p286 = scmp.eq.s32.totalorder %s30, 0
      %p287 = por %p285, %p286
      %s288 = ssub.s32 %s24, %s31
      %p289 = scmp.eq.s32.totalorder %s288, 0
      %s291 = sadd.s32 %s290, 1
      %s292 = scalar_select %p289, %s290, %s291
      %p295 = pneg %p289
      %p296 = scmp.eq.s32.totalorder %s24, 1
      %p297 = por %p295, %p296
      %p298 = scmp.ne.s32.totalorder %s290, %s293
      %p299 = scmp.eq.s32.totalorder %s24, 0
      %p300 = por %p298, %p299
      %p301 = scmp.ne.s32.totalorder %s290, %s293
      %p302 = scmp.eq.s32.totalorder %s29, 1
      %p303 = por %p301, %p302
      %p304 = scmp.ne.s32.totalorder %s293, %s294
      %p305 = scmp.eq.s32.totalorder %s29, 0
      %p306 = por %p304, %p305
      %p307 = scmp.ne.s32.totalorder %s293, %s294
      %p308 = scmp.eq.s32.totalorder %s30, 1
      %p309 = por %p307, %p308
      %p311 = scmp.ne.s32.totalorder %s294, %s310
      %p312 = scmp.eq.s32.totalorder %s30, 0
      %p313 = por %p311, %p312
      %s314 = ssub.s32 %s24, %s31
      %p315 = scmp.eq.s32.totalorder %s314, 0
      %s317 = sadd.s32 %s316, 1
      %s318 = scalar_select %p315, %s316, %s317
      %p321 = pneg %p315
      %p322 = scmp.eq.s32.totalorder %s24, 1
      %p323 = por %p321, %p322
      %p324 = scmp.ne.s32.totalorder %s316, %s319
      %p325 = scmp.eq.s32.totalorder %s24, 0
      %p326 = por %p324, %p325
      %p327 = scmp.ne.s32.totalorder %s316, %s319
      %p328 = scmp.eq.s32.totalorder %s29, 1
      %p329 = por %p327, %p328
      %p330 = scmp.ne.s32.totalorder %s319, %s320
      %p331 = scmp.eq.s32.totalorder %s29, 0
      %p332 = por %p330, %p331
      %p333 = scmp.ne.s32.totalorder %s319, %s320
      %p334 = scmp.eq.s32.totalorder %s30, 1
      %p335 = por %p333, %p334
      %p337 = scmp.ne.s32.totalorder %s320, %s336
      %p338 = scmp.eq.s32.totalorder %s30, 0
      %p339 = por %p337, %p338
      %p340 = scmp.le.s32.totalorder 1, %s24
      %p341 = scmp.lt.s32.totalorder %s24, 3
      %p342 = pnand %p340, %p341
      %p343 = pneg %p342
      // Predicated region
      $region9: #{tpu_custom_call.1} parent=5 // pred_check
        _
      $region10: #{tpu_custom_call.1} parent=5 // pred_check_branch
        %345 = sbr.rel (%p342) target = $region12
      $region11: #{tpu_custom_call.1} parent=5 // pred_region
        %s346 = ssub.s32 %s24, 1
        // Predicated region
        $region13: #{tpu_custom_call.1} parent=11 // pred_check
          %p347 = pneg %p45
        $region14: #{tpu_custom_call.1} parent=11 // pred_check_branch
          %349 = sbr.rel (%p347) target = $region16
        $region15: #{tpu_custom_call.1} parent=11 // pred_region
          %s351 = ssub.s32 512, 512
          %352 = vsyncadd [#allocation4], %s351
          %s353 = sshll.u32 [#allocation3], 4
          %s354 = int_to_ptr.vmem [resolvable:$true] %s353
          %359 = dma.hbm_to_vmem [thread:$0]  %s0, 512, %s354, [#allocation4], 256, 256, 16
        $region16: #{tpu_custom_call.1} parent=11 // pred_fallthru
          _
        // Predicated region
        $region17: #{tpu_custom_call.1} parent=11 // pred_check
          %p360 = pneg %p66
        $region18: #{tpu_custom_call.1} parent=11 // pred_check_branch
          %362 = sbr.rel (%p360) target = $region20
        $region19: #{tpu_custom_call.1} parent=11 // pred_region
          %s364 = ssub.s32 36864, 36864
          %365 = vsyncadd [#allocation7], %s364
          %s366 = sshll.u32 [#allocation6], 4
          %s367 = int_to_ptr.vmem [resolvable:$true] %s366
          %372 = dma.hbm_to_vmem [thread:$0]  %s1, 36864, %s367, [#allocation7], 128, 128, 8
        $region20: #{tpu_custom_call.1} parent=11 // pred_fallthru
          _
        // Predicated region
        $region21: #{tpu_custom_call.1} parent=11 // pred_check
          %p373 = pneg %p87
        $region22: #{tpu_custom_call.1} parent=11 // pred_check_branch
          %375 = sbr.rel (%p373) target = $region24
        $region23: #{tpu_custom_call.1} parent=11 // pred_region
          %s377 = ssub.s32 32, 32
          %378 = vsyncadd [#allocation7], %s377
          %s380 = sshll.u32 [#allocation8], 4
          %s381 = int_to_ptr.vmem [resolvable:$true] %s380
          %383 = dma.hbm_to_vmem [thread:$0]  %s2, 32, %s381, [#allocation7]
        $region24: #{tpu_custom_call.1} parent=11 // pred_fallthru
          _
        // Predicated region
        $region25: #{tpu_custom_call.1} parent=11 // pred_check
          %p384 = pneg %p108
        $region26: #{tpu_custom_call.1} parent=11 // pred_check_branch
          %386 = sbr.rel (%p384) target = $region28
        $region27: #{tpu_custom_call.1} parent=11 // pred_region
          %s388 = ssub.s32 384, 384
          %389 = vsyncadd [#allocation10], %s388
          %s390 = sshll.u32 [#allocation9], 4
          %s391 = int_to_ptr.vmem [resolvable:$true] %s390
          %396 = dma.hbm_to_vmem [thread:$0]  %s3, 384, %s391, [#allocation10], 128, 128, 8
        $region28: #{tpu_custom_call.1} parent=11 // pred_fallthru
          _
        // Predicated region
        $region29: #{tpu_custom_call.1} parent=11 // pred_check
          %p397 = pneg %p155
        $region30: #{tpu_custom_call.1} parent=11 // pred_check_branch
          %399 = sbr.rel (%p397) target = $region32
        $region31: #{tpu_custom_call.1} parent=11 // pred_region
          %s401 = ssub.s32 32, 32
          %402 = vsyncadd [#allocation7], %s401
          %s404 = sshll.u32 [#allocation12], 4
          %s405 = int_to_ptr.vmem [resolvable:$true] %s404
          %407 = dma.hbm_to_vmem [thread:$0]  %s5, 32, %s405, [#allocation7]
        $region32: #{tpu_custom_call.1} parent=11 // pred_fallthru
          _
        // Predicated region
        $region33: #{tpu_custom_call.1} parent=11 // pred_check
          %p408 = pneg %p202
        $region34: #{tpu_custom_call.1} parent=11 // pred_check_branch
          %410 = sbr.rel (%p408) target = $region36
        $region35: #{tpu_custom_call.1} parent=11 // pred_region
          %s412 = ssub.s32 32, 32
          %413 = vsyncadd [#allocation7], %s412
          %s415 = sshll.u32 [#allocation14], 4
          %s416 = int_to_ptr.vmem [resolvable:$true] %s415
          %418 = dma.hbm_to_vmem [thread:$0]  %s7, 32, %s416, [#allocation7]
        $region36: #{tpu_custom_call.1} parent=11 // pred_fallthru
          _
      $region12: #{tpu_custom_call.1} parent=5 // pred_fallthru
        _
      %p419 = scmp.lt.s32.totalorder %s24, 2
      // Predicated region
      $region37: #{tpu_custom_call.1} parent=5 // pred_check
        %p420 = pneg %p419
      $region38: #{tpu_custom_call.1} parent=5 // pred_check_branch
        %422 = sbr.rel (%p420) target = $region40
      $region39: #{tpu_custom_call.1} parent=5 // pred_region
        // Predicated region
        $region41: #{tpu_custom_call.1} parent=39 // pred_check
          %p423 = pneg %p128
        $region42: #{tpu_custom_call.1} parent=39 // pred_check_branch
          %425 = sbr.rel (%p423) target = $region44
        $region43: #{tpu_custom_call.1} parent=39 // pred_region
          %s426 = sand.u32 %s24, 1
          %s427 = scalar_lea.sflag [#allocation4], %s426
          %s428 = sand.u32 %s118, 1
          %s429 = smul.addr %s428, 16
          %s430 = scalar_lea.vmem [#allocation11], %s429
          %s432 = ssub.s32 256, 256
          %433 = vsyncadd %s427, %s432
          %s434 = smul.addr %s24, 2
          %s435 = smul.addr %s434, 128
          %s436 = scalar_lea.hbm %s4, %s435
          %s437 = sshll.u32 %s430, 4
          %s438 = int_to_ptr.vmem [resolvable:$true] %s437
          %443 = dma.hbm_to_vmem [thread:$0]  %s436, 256, %s438, %s427, 128, 128, 8
        $region44: #{tpu_custom_call.1} parent=39 // pred_fallthru
          _
        // Predicated region
        $region45: #{tpu_custom_call.1} parent=39 // pred_check
          %p444 = pneg %p175
        $region46: #{tpu_custom_call.1} parent=39 // pred_check_branch
          %446 = sbr.rel (%p444) target = $region48
        $region47: #{tpu_custom_call.1} parent=39 // pred_region
          %s447 = sand.u32 %s24, 1
          %s448 = scalar_lea.sflag [#allocation4], %s447
          %s449 = sand.u32 %s165, 1
          %s450 = smul.addr %s449, 24
          %s451 = scalar_lea.vmem [#allocation13], %s450
          %s453 = ssub.s32 384, 384
          %454 = vsyncadd %s448, %s453
          %s455 = smul.addr %s24, 3
          %s456 = smul.addr %s455, 128
          %s457 = scalar_lea.hbm %s6, %s456
          %s458 = sshll.u32 %s451, 4
          %s459 = int_to_ptr.vmem [resolvable:$true] %s458
          %464 = dma.hbm_to_vmem [thread:$0]  %s457, 384, %s459, %s448, 128, 128, 8
        $region48: #{tpu_custom_call.1} parent=39 // pred_fallthru
          _
        // Predicated region
        $region49: #{tpu_custom_call.1} parent=39 // pred_check
          %p465 = pneg %p222
        $region50: #{tpu_custom_call.1} parent=39 // pred_check_branch
          %467 = sbr.rel (%p465) target = $region52
        $region51: #{tpu_custom_call.1} parent=39 // pred_region
          %s468 = sand.u32 %s24, 1
          %s469 = scalar_lea.sflag [#allocation4], %s468
          %s470 = sand.u32 %s212, 1
          %s471 = smul.addr %s470, 2
          %s472 = scalar_lea.vmem [#allocation15], %s471
          %s474 = ssub.s32 32, 32
          %475 = vsyncadd %s469, %s474
          %s476 = smul.addr %s24, 2
          %s477 = smul.addr %s476, 16
          %s478 = scalar_lea.hbm %s8, %s477
          %s480 = sshll.u32 %s472, 4
          %s481 = int_to_ptr.vmem [resolvable:$true] %s480
          %483 = dma.hbm_to_vmem [thread:$0]  %s478, 32, %s481, %s469
        $region52: #{tpu_custom_call.1} parent=39 // pred_fallthru
          _
        // Predicated region
        $region53: #{tpu_custom_call.1} parent=39 // pred_check
          %p484 = pneg %p248
        $region54: #{tpu_custom_call.1} parent=39 // pred_check_branch
          %486 = sbr.rel (%p484) target = $region56
        $region55: #{tpu_custom_call.1} parent=39 // pred_region
          %s487 = sand.u32 %s24, 1
          %s488 = scalar_lea.sflag [#allocation4], %s487
          %s489 = sand.u32 %s238, 1
          %s490 = smul.addr %s489, 2
          %s491 = scalar_lea.vmem [#allocation16], %s490
          %s493 = ssub.s32 32, 32
          %494 = vsyncadd %s488, %s493
          %s495 = smul.addr %s24, 2
          %s496 = smul.addr %s495, 16
          %s497 = scalar_lea.hbm %s9, %s496
          %s499 = sshll.u32 %s491, 4
          %s500 = int_to_ptr.vmem [resolvable:$true] %s499
          %502 = dma.hbm_to_vmem [thread:$0]  %s497, 32, %s500, %s488
        $region56: #{tpu_custom_call.1} parent=39 // pred_fallthru
          _
        // Predicated region
        $region57: #{tpu_custom_call.1} parent=39 // pred_check
          %p503 = pneg %p274
        $region58: #{tpu_custom_call.1} parent=39 // pred_check_branch
          %505 = sbr.rel (%p503) target = $region60
        $region59: #{tpu_custom_call.1} parent=39 // pred_region
          %s506 = sand.u32 %s24, 1
          %s507 = scalar_lea.sflag [#allocation4], %s506
          %s508 = sand.u32 %s264, 1
          %s509 = smul.addr %s508, 2
          %s510 = scalar_lea.vmem [#allocation17], %s509
          %s512 = ssub.s32 32, 32
          %513 = vsyncadd %s507, %s512
          %s514 = smul.addr %s24, 2
          %s515 = smul.addr %s514, 16
          %s516 = scalar_lea.hbm %s10, %s515
          %s518 = sshll.u32 %s510, 4
          %s519 = int_to_ptr.vmem [resolvable:$true] %s518
          %521 = dma.hbm_to_vmem [thread:$0]  %s516, 32, %s519, %s507
        $region60: #{tpu_custom_call.1} parent=39 // pred_fallthru
          _
        // Predicated region
        $region61: #{tpu_custom_call.1} parent=39 // pred_check
          %p522 = pneg %p300
        $region62: #{tpu_custom_call.1} parent=39 // pred_check_branch
          %524 = sbr.rel (%p522) target = $region64
        $region63: #{tpu_custom_call.1} parent=39 // pred_region
          %s525 = sand.u32 %s24, 1
          %s526 = scalar_lea.sflag [#allocation4], %s525
          %s527 = sand.u32 %s290, 1
          %s528 = smul.addr %s527, 2
          %s529 = scalar_lea.vmem [#allocation18], %s528
          %s531 = ssub.s32 32, 32
          %532 = vsyncadd %s526, %s531
          %s533 = smul.addr %s24, 2
          %s534 = smul.addr %s533, 16
          %s535 = scalar_lea.hbm %s11, %s534
          %s537 = sshll.u32 %s529, 4
          %s538 = int_to_ptr.vmem [resolvable:$true] %s537
          %540 = dma.hbm_to_vmem [thread:$0]  %s535, 32, %s538, %s526
        $region64: #{tpu_custom_call.1} parent=39 // pred_fallthru
          _
      $region40: #{tpu_custom_call.1} parent=5 // pred_fallthru
        _
      %p541 = scmp.le.s32.totalorder 1, %s24
      %p542 = scmp.lt.s32.totalorder %s24, 3
      %p543 = pnand %p541, %p542
      %p544 = pneg %p543
      // Predicated region
      $region65: #{tpu_custom_call.1} parent=5 // pred_check
        _
      $region66: #{tpu_custom_call.1} parent=5 // pred_check_branch
        %546 = sbr.rel (%p543) target = $region68
      $region67: #{tpu_custom_call.1} parent=5 // pred_region
        %s547 = ssub.s32 %s24, 1
        // Predicated region
        $region69: #{tpu_custom_call.1} parent=67 // pred_check
          %p548 = pneg %p45
        $region70: #{tpu_custom_call.1} parent=67 // pred_check_branch
          %550 = sbr.rel (%p548) target = $region72
        $region71: #{tpu_custom_call.1} parent=67 // pred_region
          %551 = dma.done [#allocation4], 512
        $region72: #{tpu_custom_call.1} parent=67 // pred_fallthru
          _
        // Predicated region
        $region73: #{tpu_custom_call.1} parent=67 // pred_check
          %p552 = pneg %p66
        $region74: #{tpu_custom_call.1} parent=67 // pred_check_branch
          %554 = sbr.rel (%p552) target = $region76
        $region75: #{tpu_custom_call.1} parent=67 // pred_region
          %555 = dma.done [#allocation7], 36864
        $region76: #{tpu_custom_call.1} parent=67 // pred_fallthru
          _
        // Predicated region
        $region77: #{tpu_custom_call.1} parent=67 // pred_check
          %p556 = pneg %p87
        $region78: #{tpu_custom_call.1} parent=67 // pred_check_branch
          %558 = sbr.rel (%p556) target = $region80
        $region79: #{tpu_custom_call.1} parent=67 // pred_region
          %559 = dma.done [#allocation7], 32
        $region80: #{tpu_custom_call.1} parent=67 // pred_fallthru
          _
        // Predicated region
        $region81: #{tpu_custom_call.1} parent=67 // pred_check
          %p560 = pneg %p108
        $region82: #{tpu_custom_call.1} parent=67 // pred_check_branch
          %562 = sbr.rel (%p560) target = $region84
        $region83: #{tpu_custom_call.1} parent=67 // pred_region
          %563 = dma.done [#allocation10], 384
        $region84: #{tpu_custom_call.1} parent=67 // pred_fallthru
          _
        %s564 = sand.u32 %s29, 1
        %s565 = scalar_lea.sflag [#allocation4], %s564
        %s566 = sand.u32 %s121, 1
        %s567 = smul.addr %s566, 16
        %s568 = scalar_lea.vmem [#allocation11], %s567
        // Predicated region
        $region85: #{tpu_custom_call.1} parent=67 // pred_check
          %p569 = pneg %p134
        $region86: #{tpu_custom_call.1} parent=67 // pred_check_branch
          %571 = sbr.rel (%p569) target = $region88
        $region87: #{tpu_custom_call.1} parent=67 // pred_region
          %572 = dma.done %s565, 256
        $region88: #{tpu_custom_call.1} parent=67 // pred_fallthru
          _
        // Predicated region
        $region89: #{tpu_custom_call.1} parent=67 // pred_check
          %p573 = pneg %p155
        $region90: #{tpu_custom_call.1} parent=67 // pred_check_branch
          %575 = sbr.rel (%p573) target = $region92
        $region91: #{tpu_custom_call.1} parent=67 // pred_region
          %576 = dma.done [#allocation7], 32
        $region92: #{tpu_custom_call.1} parent=67 // pred_fallthru
          _
        %s577 = sand.u32 %s29, 1
        %s578 = scalar_lea.sflag [#allocation4], %s577
        %s579 = sand.u32 %s168, 1
        %s580 = smul.addr %s579, 24
        %s581 = scalar_lea.vmem [#allocation13], %s580
        // Predicated region
        $region93: #{tpu_custom_call.1} parent=67 // pred_check
          %p582 = pneg %p181
        $region94: #{tpu_custom_call.1} parent=67 // pred_check_branch
          %584 = sbr.rel (%p582) target = $region96
        $region95: #{tpu_custom_call.1} parent=67 // pred_region
          %585 = dma.done %s578, 384
        $region96: #{tpu_custom_call.1} parent=67 // pred_fallthru
          _
        // Predicated region
        $region97: #{tpu_custom_call.1} parent=67 // pred_check
          %p586 = pneg %p202
        $region98: #{tpu_custom_call.1} parent=67 // pred_check_branch
          %588 = sbr.rel (%p586) target = $region100
        $region99: #{tpu_custom_call.1} parent=67 // pred_region
          %589 = dma.done [#allocation7], 32
        $region100: #{tpu_custom_call.1} parent=67 // pred_fallthru
          _
        %s590 = sand.u32 %s29, 1
        %s591 = scalar_lea.sflag [#allocation4], %s590
        %s592 = sand.u32 %s215, 1
        %s593 = smul.addr %s592, 2
        %s594 = scalar_lea.vmem [#allocation15], %s593
        // Predicated region
        $region101: #{tpu_custom_call.1} parent=67 // pred_check
          %p595 = pneg %p228
        $region102: #{tpu_custom_call.1} parent=67 // pred_check_branch
          %597 = sbr.rel (%p595) target = $region104
        $region103: #{tpu_custom_call.1} parent=67 // pred_region
          %598 = dma.done %s591, 32
        $region104: #{tpu_custom_call.1} parent=67 // pred_fallthru
          _
        %s599 = sand.u32 %s29, 1
        %s600 = scalar_lea.sflag [#allocation4], %s599
        %s601 = sand.u32 %s241, 1
        %s602 = smul.addr %s601, 2
        %s603 = scalar_lea.vmem [#allocation16], %s602
        // Predicated region
        $region105: #{tpu_custom_call.1} parent=67 // pred_check
          %p604 = pneg %p254
        $region106: #{tpu_custom_call.1} parent=67 // pred_check_branch
          %606 = sbr.rel (%p604) target = $region108
        $region107: #{tpu_custom_call.1} parent=67 // pred_region
          %607 = dma.done %s600, 32
        $region108: #{tpu_custom_call.1} parent=67 // pred_fallthru
          _
        %s608 = sand.u32 %s29, 1
        %s609 = scalar_lea.sflag [#allocation4], %s608
        %s610 = sand.u32 %s267, 1
        %s611 = smul.addr %s610, 2
        %s612 = scalar_lea.vmem [#allocation17], %s611
        // Predicated region
        $region109: #{tpu_custom_call.1} parent=67 // pred_check
          %p613 = pneg %p280
        $region110: #{tpu_custom_call.1} parent=67 // pred_check_branch
          %615 = sbr.rel (%p613) target = $region112
        $region111: #{tpu_custom_call.1} parent=67 // pred_region
          %616 = dma.done %s609, 32
        $region112: #{tpu_custom_call.1} parent=67 // pred_fallthru
          _
        %s617 = sand.u32 %s29, 1
        %s618 = scalar_lea.sflag [#allocation4], %s617
        %s619 = sand.u32 %s293, 1
        %s620 = smul.addr %s619, 2
        %s621 = scalar_lea.vmem [#allocation18], %s620
        // Predicated region
        $region113: #{tpu_custom_call.1} parent=67 // pred_check
          %p622 = pneg %p306
        $region114: #{tpu_custom_call.1} parent=67 // pred_check_branch
          %624 = sbr.rel (%p622) target = $region116
        $region115: #{tpu_custom_call.1} parent=67 // pred_region
          %625 = dma.done %s618, 32
        $region116: #{tpu_custom_call.1} parent=67 // pred_fallthru
          _
        %p626 = pneg %p45
        %p627 = pneg %p42
        %p628 = pneg %p66
        %p629 = pneg %p63
        %p630 = pneg %p87
        %p631 = pneg %p84
        %p632 = pneg %p108
        %p633 = pneg %p105
        %s634 = sand.u32 %s29, 1
        %s635 = scalar_lea.sflag [#allocation4], %s634
        %s636 = sand.u32 %s121, 1
        %s637 = smul.addr %s636, 16
        %s638 = scalar_lea.vmem [#allocation11], %s637
        %p639 = pneg %p134
        %p640 = pneg %p131
        %p641 = pneg %p155
        %p642 = pneg %p152
        %s643 = sand.u32 %s29, 1
        %s644 = scalar_lea.sflag [#allocation4], %s643
        %s645 = sand.u32 %s168, 1
        %s646 = smul.addr %s645, 24
        %s647 = scalar_lea.vmem [#allocation13], %s646
        %p648 = pneg %p181
        %p649 = pneg %p178
        %p650 = pneg %p202
        %p651 = pneg %p199
        %s652 = sand.u32 %s29, 1
        %s653 = scalar_lea.sflag [#allocation4], %s652
        %s654 = sand.u32 %s215, 1
        %s655 = smul.addr %s654, 2
        %s656 = scalar_lea.vmem [#allocation15], %s655
        %p657 = pneg %p228
        %p658 = pneg %p225
        %s659 = sand.u32 %s29, 1
        %s660 = scalar_lea.sflag [#allocation4], %s659
        %s661 = sand.u32 %s241, 1
        %s662 = smul.addr %s661, 2
        %s663 = scalar_lea.vmem [#allocation16], %s662
        %p664 = pneg %p254
        %p665 = pneg %p251
        %s666 = sand.u32 %s29, 1
        %s667 = scalar_lea.sflag [#allocation4], %s666
        %s668 = sand.u32 %s267, 1
        %s669 = smul.addr %s668, 2
        %s670 = scalar_lea.vmem [#allocation17], %s669
        %p671 = pneg %p280
        %p672 = pneg %p277
        %s673 = sand.u32 %s29, 1
        %s674 = scalar_lea.sflag [#allocation4], %s673
        %s675 = sand.u32 %s293, 1
        %s676 = smul.addr %s675, 2
        %s677 = scalar_lea.vmem [#allocation18], %s676
        %p678 = pneg %p306
        %p679 = pneg %p303
        %p680 = pneg %p332
        %p681 = pneg %p329
        %s682 = sand.u32 %s319, 1
        %s683 = scalar_lea.sflag [#allocation5], %s682
        %s684 = sand.u32 %s319, 1
        %s685 = smul.addr %s684, 16
        %s686 = scalar_lea.vmem [#allocation19], %s685
        %v688 = vld [vmem:[#allocation3] sm:$0xff]
        %v689 = vld [vmem:[#allocation3 + $0x8] sm:$0xff]
        %v690 = vld [vmem:[#allocation3 + $0x10] sm:$0xff]
        %v691 = vld [vmem:[#allocation3 + $0x18] sm:$0xff]
        %v692 = vld [vmem:[%s568] sm:$0xff]
        %v693 = vld [vmem:[%s568 + $0x8] sm:$0xff]
        %v694 = vld [vmem:[#allocation12] sm:$0x3]
        %v695 = vld [vmem:[%s594] sm:$0x3]
        %v696 = vld [vmem:[%s603] sm:$0x3]
        %698 = vset.pattern.permute.xlu0 0
        %699 = vperm.xlu0 %698, %v692
        %v700 = vpop.permute.xlu0 %699
        %703 = vset.pattern.permute.xlu0 0
        %704 = vperm.xlu0 %703, %v693
        %v705 = vpop.permute.xlu0 %704
        %v708 = vlaneseq
        %v709 = vshrl.u32 %v708, 7
        %v710 = vsub.s32 0, %v709
        %v711 = vrot.slane %v694, %v710
        %v712 = vlaneseq
        %v713 = vshrl.u32 %v712, 7
        %v714 = vsub.s32 1, %v713
        %v715 = vrot.slane %v694, %v714
        %v718 = vmul.f32 %v700, %v711
        %v719 = vmul.f32 %v700, %v715
        %v720 = vmul.f32 %v705, %v711
        %v721 = vmul.f32 %v705, %v715
        %v722 = vadd.f32 %v688, %v718
        %v723 = vadd.f32 %v689, %v719
        %v724 = vadd.f32 %v690, %v720
        %v725 = vadd.f32 %v691, %v721
        %v726 = vadd.f32 %v722, %v724
        %v727 = vrot.slane %v726, 4
        %v728 = vadd.f32 %v726, %v727
        %v729 = vrot.slane %v728, 2
        %v730 = vadd.f32 %v728, %v729
        %v731 = vrot.slane %v730, 1
        %v732 = vadd.f32 %v730, %v731
        %v733 = vadd.f32 %v723, %v725
        %v734 = vrot.slane %v733, 4
        %v735 = vadd.f32 %v733, %v734
        %v736 = vrot.slane %v735, 2
        %v737 = vadd.f32 %v735, %v736
        %v738 = vrot.slane %v737, 1
        %v739 = vadd.f32 %v737, %v738
        %v740 = vrcp.pop 16.0
        %v741 = vmul.f32 %v732, %v740
        %v742 = vmul.f32 %v739, %v740
        %v743 = vsub.f32 %v722, %v741
        %v744 = vsub.f32 %v723, %v742
        %v745 = vsub.f32 %v724, %v741
        %v746 = vsub.f32 %v725, %v742
        %v747 = vmul.f32 %v743, %v743
        %v748 = vmul.f32 %v744, %v744
        %v749 = vmul.f32 %v745, %v745
        %v750 = vmul.f32 %v746, %v746
        %v751 = vadd.f32 %v747, %v749
        %v752 = vrot.slane %v751, 4
        %v753 = vadd.f32 %v751, %v752
        %v754 = vrot.slane %v753, 2
        %v755 = vadd.f32 %v753, %v754
        %v756 = vrot.slane %v755, 1
        %v757 = vadd.f32 %v755, %v756
        %v758 = vadd.f32 %v748, %v750
        %v759 = vrot.slane %v758, 4
        %v760 = vadd.f32 %v758, %v759
        %v761 = vrot.slane %v760, 2
        %v762 = vadd.f32 %v760, %v761
        %v763 = vrot.slane %v762, 1
        %v764 = vadd.f32 %v762, %v763
        %v765 = vmul.f32 %v757, %v740
        %v766 = vmul.f32 %v764, %v740
        %v767 = vadd.f32 %v765, 1e-05
        %v768 = vadd.f32 %v766, 1e-05
        %v769 = vrsqrt.pop %v767
        %v770 = vrsqrt.pop %v768
        %v771 = vmul.f32 %v743, %v769
        %v772 = vmul.f32 %v744, %v770
        %v773 = vmul.f32 %v745, %v769
        %v774 = vmul.f32 %v746, %v770
        %v776 = vlaneseq
        %v777 = vshrl.u32 %v776, 7
        %v778 = vsub.s32 0, %v777
        %v779 = vrot.slane %v695, %v778
        %v780 = vlaneseq
        %v781 = vshrl.u32 %v780, 7
        %v782 = vsub.s32 1, %v781
        %v783 = vrot.slane %v695, %v782
        %v786 = vmul.f32 %v779, %v771
        %v787 = vmul.f32 %v783, %v772
        %v788 = vmul.f32 %v779, %v773
        %v789 = vmul.f32 %v783, %v774
        %v791 = vlaneseq
        %v792 = vshrl.u32 %v791, 7
        %v793 = vsub.s32 0, %v792
        %v794 = vrot.slane %v696, %v793
        %v795 = vlaneseq
        %v796 = vshrl.u32 %v795, 7
        %v797 = vsub.s32 1, %v796
        %v798 = vrot.slane %v696, %v797
        %v801 = vadd.f32 %v786, %v794
        %v802 = vadd.f32 %v787, %v798
        %v803 = vadd.f32 %v788, %v794
        %v804 = vadd.f32 %v789, %v798
        %v805 = vmul.f32 %v801, 0.2
        %v806 = vmul.f32 %v802, 0.2
        %v807 = vmul.f32 %v803, 0.2
        %v808 = vmul.f32 %v804, 0.2
        %v809 = vmax.f32 %v801, %v805
        %v810 = vmax.f32 %v802, %v806
        %v811 = vmax.f32 %v803, %v807
        %v812 = vmax.f32 %v804, %v808
        %v813 = vpack.c.bf16 %v811, %v809
        %v814 = vpack.c.bf16 %v812, %v810
        %815 = vst [vmem:[#allocation2] sm:$0xff] 0
        %816 = vst [vmem:[#allocation2 + $0x8] sm:$0xff] 0
        %817 = vst [vmem:[#allocation2 + $0x10] sm:$0xff] 0
        %818 = vst [vmem:[#allocation2 + $0x18] sm:$0xff] 0
        %819 = vst [vmem:[#allocation2 + $0x20] sm:$0xff] 0
        %820 = vst [vmem:[#allocation2 + $0x28] sm:$0x33] 0
        %v823 = vunpack.c.l.b16 %v813
        %v824 = vunpack.c.l.b16 %v814
        %v825 = vpack.c.b16 %v824, %v823
        %v827 = vshll.u32 %v825, 16
        %v829 = vrot.slane %v827, 5
        %v830 = vshrl.u32 %v825, 16
        %v832 = vrot.slane %v830, 4
        %v833 = vor.u32 %v832, %v829
        %v834 = vrot.slane %v833, 4
        %vm837 = vcmask 1043459
        %vm838 = vsmask.f32 7950
        %vm839 = vmand %vm837, %vm838
        %vm840 = vcmask 1047559
        %vm841 = vsmask.f32 7966
        %vm842 = vmand %vm840, %vm841
        %vm843 = vmor %vm842, %vm839
        %v844 = vld [vmem:[#allocation2] sm:$0x88]
        %v845 = vsel %vm843, %v829, %v844
        %846 = vst [vmem:[#allocation2] sm:$0x88] %v845
        %vm847 = vcmask 1041408
        %vm848 = vsmask.f32 1280
        %vm849 = vmand %vm847, %vm848
        %vm850 = vcmask 1045508
        %vm851 = vsmask.f32 5376
        %vm852 = vmand %vm850, %vm851
        %vm853 = vmor %vm852, %vm849
        %v854 = vld [vmem:[#allocation2 + $0x8] sm:$0x33]
        %v855 = vsel %vm853, %v834, %v854
        %856 = vst [vmem:[#allocation2 + $0x8] sm:$0x33] %v855
        %v857 = vrot.slane %v830, 7
        %v858 = vor.u32 %v857, %v827
        %v859 = vrot.slane %v857, 4
        %vm862 = vcmask 1043458
        %vm863 = vsmask.f32 7946
        %vm864 = vmand %vm862, %vm863
        %vm865 = vcmask 1047558
        %vm866 = vsmask.f32 7962
        %vm867 = vmand %vm865, %vm866
        %vm868 = vmor %vm867, %vm864
        %v869 = vld [vmem:[#allocation2 + $0x8] sm:$0xcc]
        %v870 = vsel %vm868, %v858, %v869
        %871 = vst [vmem:[#allocation2 + $0x8] sm:$0xcc] %v870
        %vm872 = vcmask 1040384
        %vm873 = vsmask.f32 256
        %vm874 = vmand %vm872, %vm873
        %vm875 = vcmask 1044484
        %vm876 = vsmask.f32 4352
        %vm877 = vmand %vm875, %vm876
        %vm878 = vmor %vm877, %vm874
        %v879 = vld [vmem:[#allocation2 + $0x10] sm:$0x11]
        %v880 = vsel %vm878, %v859, %v879
        %881 = vst [vmem:[#allocation2 + $0x10] sm:$0x11] %v880
        %v882 = vunpack.c.h.b16 %v813
        %v883 = vunpack.c.h.b16 %v814
        %v884 = vpack.c.b16 %v883, %v882
        %v886 = vshrl.u32 %v884, 16
        %v888 = vrot.slane %v886, 6
        %v889 = vshll.u32 %v884, 16
        %v891 = vrot.slane %v889, 7
        %v892 = vor.u32 %v888, %v891
        %vm894 = vcmask 1043457
        %vm895 = vsmask.f32 3334
        %vm896 = vmand %vm894, %vm895
        %vm897 = vcmask 1047557
        %vm898 = vsmask.f32 7446
        %vm899 = vmand %vm897, %vm898
        %vm900 = vmor %vm899, %vm896
        %v901 = vld [vmem:[#allocation2 + $0x10] sm:$0xee]
        %v902 = vsel %vm900, %v892, %v901
        %903 = vst [vmem:[#allocation2 + $0x10] sm:$0xee] %v902
        %v904 = vrot.slane %v886, 5
        %v905 = vrot.slane %v889, 6
        %v906 = vor.u32 %v904, %v905
        %v907 = vrot.slane %v906, 4
        %vm909 = vcmask 1042432
        %vm910 = vsmask.f32 2306
        %vm911 = vmand %vm909, %vm910
        %vm912 = vcmask 1046532
        %vm913 = vsmask.f32 6418
        %vm914 = vmand %vm912, %vm913
        %vm915 = vmor %vm914, %vm911
        %v916 = vld [vmem:[#allocation2 + $0x18] sm:$0x77]
        %v917 = vsel %vm915, %v907, %v916
        %918 = vst [vmem:[#allocation2 + $0x18] sm:$0x77] %v917
        %v919 = vld [vmem:[#allocation2] sm:$0xff]
        %v920 = vld [vmem:[#allocation2 + $0x8] sm:$0xff]
        %v921 = vld [vmem:[#allocation2 + $0x10] sm:$0xff]
        %v922 = vld [vmem:[#allocation6] sm:$0xff]
        %v923 = vld [vmem:[#allocation6 + $0x8] sm:$0xff]
        %v924 = vld [vmem:[#allocation6 + $0x10] sm:$0xff]
        %v925 = vld [vmem:[#allocation6 + $0x18] sm:$0xff]
        %v926 = vld [vmem:[#allocation6 + $0x20] sm:$0xff]
        %v927 = vld [vmem:[#allocation6 + $0x28] sm:$0xff]
        %v928 = vld [vmem:[#allocation6 + $0x30] sm:$0xff]
        %v929 = vld [vmem:[#allocation6 + $0x38] sm:$0xff]
        %v930 = vld [vmem:[#allocation6 + $0x40] sm:$0xff]
        %v931 = vld [vmem:[#allocation6 + $0x48] sm:$0xff]
        %v932 = vld [vmem:[#allocation6 + $0x50] sm:$0xff]
        %v933 = vld [vmem:[#allocation6 + $0x58] sm:$0xff]
        %v934 = vld [vmem:[#allocation6 + $0x60] sm:$0xff]
        %v935 = vld [vmem:[#allocation6 + $0x68] sm:$0xff]
        %v936 = vld [vmem:[#allocation6 + $0x70] sm:$0xff]
        %v937 = vld [vmem:[#allocation6 + $0x78] sm:$0xff]
        %v938 = vld [vmem:[#allocation6 + $0x80] sm:$0xff]
        %v939 = vld [vmem:[#allocation6 + $0x88] sm:$0xff]
        %v940 = vld [vmem:[#allocation6 + $0x90] sm:$0xff]
        %v941 = vld [vmem:[#allocation6 + $0x98] sm:$0xff]
        %v942 = vld [vmem:[#allocation6 + $0xa0] sm:$0xff]
        %v943 = vld [vmem:[#allocation6 + $0xa8] sm:$0xff]
        %v944 = vld [vmem:[#allocation6 + $0xb0] sm:$0xff]
        %v945 = vld [vmem:[#allocation6 + $0xb8] sm:$0xff]
        %v946 = vld [vmem:[#allocation6 + $0xc0] sm:$0xff]
        %v947 = vld [vmem:[#allocation6 + $0xc8] sm:$0xff]
        %v948 = vld [vmem:[#allocation6 + $0xd0] sm:$0xff]
        %v949 = vld [vmem:[#allocation6 + $0xd8] sm:$0xff]
        %v950 = vld [vmem:[#allocation6 + $0xe0] sm:$0xff]
        %v951 = vld [vmem:[#allocation6 + $0xe8] sm:$0xff]
        %v952 = vld [vmem:[#allocation6 + $0xf0] sm:$0xff]
        %v953 = vld [vmem:[#allocation6 + $0xf8] sm:$0xff]
        %v954 = vld [vmem:[#allocation2 + $0x18] sm:$0x11]
        %s955 = scalar_lea.vmem [#allocation6], 256
        %v956 = vld [vmem:[%s955] sm:$0xff]
        %v957 = vld [vmem:[%s955 + $0x8] sm:$0xff]
        %v958 = vld [vmem:[%s955 + $0x10] sm:$0xff]
        %v959 = vld [vmem:[%s955 + $0x18] sm:$0xff]
        %v960 = vld [vmem:[%s955 + $0x20] sm:$0xff]
        %v961 = vld [vmem:[%s955 + $0x28] sm:$0xff]
        %v962 = vld [vmem:[%s955 + $0x30] sm:$0xff]
        %v963 = vld [vmem:[%s955 + $0x38] sm:$0xff]
        %v964 = vld [vmem:[%s955 + $0x40] sm:$0xff]
        %v965 = vld [vmem:[%s955 + $0x48] sm:$0xff]
        %v966 = vld [vmem:[%s955 + $0x50] sm:$0xff]
        %v967 = vld [vmem:[%s955 + $0x58] sm:$0xff]
        %v968 = vld [vmem:[%s955 + $0x60] sm:$0xff]
        %v969 = vld [vmem:[%s955 + $0x68] sm:$0xff]
        %v970 = vld [vmem:[%s955 + $0x70] sm:$0xff]
        %v971 = vld [vmem:[%s955 + $0x78] sm:$0xff]
        %v972 = vld [vmem:[%s955 + $0x80] sm:$0xff]
        %v973 = vld [vmem:[%s955 + $0x88] sm:$0xff]
        %v974 = vld [vmem:[%s955 + $0x90] sm:$0xff]
        %v975 = vld [vmem:[%s955 + $0x98] sm:$0xff]
        %v976 = vld [vmem:[%s955 + $0xa0] sm:$0xff]
        %v977 = vld [vmem:[%s955 + $0xa8] sm:$0xff]
        %v978 = vld [vmem:[%s955 + $0xb0] sm:$0xff]
        %v979 = vld [vmem:[%s955 + $0xb8] sm:$0xff]
        %v980 = vld [vmem:[%s955 + $0xc0] sm:$0xff]
        %v981 = vld [vmem:[%s955 + $0xc8] sm:$0xff]
        %v982 = vld [vmem:[%s955 + $0xd0] sm:$0xff]
        %v983 = vld [vmem:[%s955 + $0xd8] sm:$0xff]
        %v984 = vld [vmem:[%s955 + $0xe0] sm:$0xff]
        %v985 = vld [vmem:[%s955 + $0xe8] sm:$0xff]
        %v986 = vld [vmem:[%s955 + $0xf0] sm:$0xff]
        %v987 = vld [vmem:[%s955 + $0xf8] sm:$0xff]
        %v992 = vunpack.c.l.b16 %v919
        %v993 = vunpack.c.h.b16 %v919
        %v994 = vunpack.c.l.b16 %v920
        %v995 = vunpack.c.h.b16 %v920
        %v996 = vunpack.c.l.b16 %v921
        %v997 = vunpack.c.h.b16 %v921
        %v998 = vunpack.c.l.b16 %v954
        %v999 = vunpack.c.h.b16 %v954
        %v1000 = vpack.c.b16 %v994, %v992
        %v1001 = vpack.c.b16 %v995, %v993
        %v1002 = vpack.c.b16 %v998, %v996
        %v1003 = vpack.c.b16 %v999, %v997
        %vm1004 = vsmask.f32 7424
        %v1006 = vshrl.u32 %v1000, 16
        %v1008 = vshll.u32 %v1000, 16
        %v1010 = vrot.slane %v1008, 1
        %v1011 = vor.u32 %v1006, %v1010
        %v1013 = vshll.u32 %v1002, 16
        %v1015 = vrot.slane %v1013, 1
        %v1016 = vsel %vm1004, %v1011, %v1015
        %v1018 = vshrl.u32 %v1001, 16
        %v1020 = vshll.u32 %v1001, 16
        %v1022 = vrot.slane %v1020, 1
        %v1023 = vor.u32 %v1018, %v1022
        %v1025 = vshll.u32 %v1003, 16
        %v1027 = vrot.slane %v1025, 1
        %v1028 = vsel %vm1004, %v1023, %v1027
        %v1029 = vshrl.u32 %v1002, 16
        %v1031 = vor.u32 %v1029, %v1015
        %v1032 = vshrl.u32 %v1003, 16
        %v1034 = vor.u32 %v1032, %v1027
        %v1071 = vunpack.c.l.b16 %v956
        %v1072 = vunpack.c.h.b16 %v956
        %v1073 = vunpack.c.l.b16 %v957
        %v1074 = vunpack.c.h.b16 %v957
        %v1075 = vunpack.c.l.b16 %v958
        %v1076 = vunpack.c.h.b16 %v958
        %v1077 = vunpack.c.l.b16 %v959
        %v1078 = vunpack.c.h.b16 %v959
        %v1079 = vunpack.c.l.b16 %v960
        %v1080 = vunpack.c.h.b16 %v960
        %v1081 = vunpack.c.l.b16 %v961
        %v1082 = vunpack.c.h.b16 %v961
        %v1083 = vunpack.c.l.b16 %v962
        %v1084 = vunpack.c.h.b16 %v962
        %v1085 = vunpack.c.l.b16 %v963
        %v1086 = vunpack.c.h.b16 %v963
        %v1087 = vunpack.c.l.b16 %v964
        %v1088 = vunpack.c.h.b16 %v964
        %v1089 = vunpack.c.l.b16 %v965
        %v1090 = vunpack.c.h.b16 %v965
        %v1091 = vunpack.c.l.b16 %v966
        %v1092 = vunpack.c.h.b16 %v966
        %v1093 = vunpack.c.l.b16 %v967
        %v1094 = vunpack.c.h.b16 %v967
        %v1095 = vunpack.c.l.b16 %v968
        %v1096 = vunpack.c.h.b16 %v968
        %v1097 = vunpack.c.l.b16 %v969
        %v1098 = vunpack.c.h.b16 %v969
        %v1099 = vunpack.c.l.b16 %v970
        %v1100 = vunpack.c.h.b16 %v970
        %v1101 = vunpack.c.l.b16 %v971
        %v1102 = vunpack.c.h.b16 %v971
        %v1103 = vunpack.c.l.b16 %v972
        %v1104 = vunpack.c.h.b16 %v972
        %v1105 = vunpack.c.l.b16 %v973
        %v1106 = vunpack.c.h.b16 %v973
        %v1107 = vunpack.c.l.b16 %v974
        %v1108 = vunpack.c.h.b16 %v974
        %v1109 = vunpack.c.l.b16 %v975
        %v1110 = vunpack.c.h.b16 %v975
        %v1111 = vunpack.c.l.b16 %v976
        %v1112 = vunpack.c.h.b16 %v976
        %v1113 = vunpack.c.l.b16 %v977
        %v1114 = vunpack.c.h.b16 %v977
        %v1115 = vunpack.c.l.b16 %v978
        %v1116 = vunpack.c.h.b16 %v978
        %v1117 = vunpack.c.l.b16 %v979
        %v1118 = vunpack.c.h.b16 %v979
        %v1119 = vunpack.c.l.b16 %v980
        %v1120 = vunpack.c.h.b16 %v980
        %v1121 = vunpack.c.l.b16 %v981
        %v1122 = vunpack.c.h.b16 %v981
        %v1123 = vunpack.c.l.b16 %v982
        %v1124 = vunpack.c.h.b16 %v982
        %v1125 = vunpack.c.l.b16 %v983
        %v1126 = vunpack.c.h.b16 %v983
        %v1127 = vunpack.c.l.b16 %v984
        %v1128 = vunpack.c.h.b16 %v984
        %v1129 = vunpack.c.l.b16 %v985
        %v1130 = vunpack.c.h.b16 %v985
        %v1131 = vunpack.c.l.b16 %v986
        %v1132 = vunpack.c.h.b16 %v986
        %v1133 = vunpack.c.l.b16 %v987
        %v1134 = vunpack.c.h.b16 %v987
        %v1135 = vpack.c.b16 %v1073, %v1071
        %v1136 = vpack.c.b16 %v1074, %v1072
        %v1137 = vpack.c.b16 %v1077, %v1075
        %v1138 = vpack.c.b16 %v1078, %v1076
        %v1139 = vpack.c.b16 %v1081, %v1079
        %v1140 = vpack.c.b16 %v1082, %v1080
        %v1141 = vpack.c.b16 %v1085, %v1083
        %v1142 = vpack.c.b16 %v1086, %v1084
        %v1143 = vpack.c.b16 %v1089, %v1087
        %v1144 = vpack.c.b16 %v1090, %v1088
        %v1145 = vpack.c.b16 %v1093, %v1091
        %v1146 = vpack.c.b16 %v1094, %v1092
        %v1147 = vpack.c.b16 %v1097, %v1095
        %v1148 = vpack.c.b16 %v1098, %v1096
        %v1149 = vpack.c.b16 %v1101, %v1099
        %v1150 = vpack.c.b16 %v1102, %v1100
        %v1151 = vpack.c.b16 %v1105, %v1103
        %v1152 = vpack.c.b16 %v1106, %v1104
        %v1153 = vpack.c.b16 %v1109, %v1107
        %v1154 = vpack.c.b16 %v1110, %v1108
        %v1155 = vpack.c.b16 %v1113, %v1111
        %v1156 = vpack.c.b16 %v1114, %v1112
        %v1157 = vpack.c.b16 %v1117, %v1115
        %v1158 = vpack.c.b16 %v1118, %v1116
        %v1159 = vpack.c.b16 %v1121, %v1119
        %v1160 = vpack.c.b16 %v1122, %v1120
        %v1161 = vpack.c.b16 %v1125, %v1123
        %v1162 = vpack.c.b16 %v1126, %v1124
        %v1163 = vpack.c.b16 %v1129, %v1127
        %v1164 = vpack.c.b16 %v1130, %v1128
        %v1165 = vpack.c.b16 %v1133, %v1131
        %v1166 = vpack.c.b16 %v1134, %v1132
        %1199 = vmatprep.subr.bf16.mxu0 %v1136
        %1200 = vmatpush1.bf16.msra.mxu0 %v1135
        %1201 = vmatprep.subr.bf16.mxu0 %v1138
        %1202 = vmatpush1.bf16.msra.mxu0 %v1137
        %1203 = vmatprep.subr.bf16.mxu0 %v1140
        %1204 = vmatpush1.bf16.msra.mxu0 %v1139
        %1205 = vmatprep.subr.bf16.mxu0 %v1142
        %1206 = vmatpush1.bf16.msra.mxu0 %v1141
        %1207 = vmatprep.subr.bf16.mxu0 %v1144
        %1208 = vmatpush1.bf16.msra.mxu0 %v1143
        %1209 = vmatprep.subr.bf16.mxu0 %v1146
        %1210 = vmatpush1.bf16.msra.mxu0 %v1145
        %1211 = vmatprep.subr.bf16.mxu0 %v1148
        %1212 = vmatpush1.bf16.msra.mxu0 %v1147
        %1213 = vmatprep.subr.bf16.mxu0 %v1150
        %1214 = vmatpush1.bf16.msra.mxu0 %v1149
        %1215 = vmatprep.subr.bf16.mxu0 %v1152
        %1216 = vmatpush1.bf16.msra.mxu0 %v1151
        %1217 = vmatprep.subr.bf16.mxu0 %v1154
        %1218 = vmatpush1.bf16.msra.mxu0 %v1153
        %1219 = vmatprep.subr.bf16.mxu0 %v1156
        %1220 = vmatpush1.bf16.msra.mxu0 %v1155
        %1221 = vmatprep.subr.bf16.mxu0 %v1158
        %1222 = vmatpush1.bf16.msra.mxu0 %v1157
        %1223 = vmatprep.subr.bf16.mxu0 %v1160
        %1224 = vmatpush1.bf16.msra.mxu0 %v1159
        %1225 = vmatprep.subr.bf16.mxu0 %v1162
        %1226 = vmatpush1.bf16.msra.mxu0 %v1161
        %1227 = vmatprep.subr.bf16.mxu0 %v1164
        %1228 = vmatpush1.bf16.msra.mxu0 %v1163
        %1229 = vmatprep.subr.bf16.mxu0 %v1166
        %1230 = vmatpush1.bf16.msra.mxu0 %v1165
        %1231 = vmatprep.mubr.bf16.mxu0 %v1028
        %1232 = vmatmul.mubr.bf16.gmra.mrb[0].mxu0 %v1016
        %v1233 = vpop.f32.mrb[0].mxu0
        %v1234 = vadd.f32 0.0, %v1233
        %v1235 = vpop.f32.mrb[0].mxu0
        %v1236 = vadd.f32 0.0, %v1235
        %v1237 = vpop.f32.mrb[0].mxu0
        %v1238 = vadd.f32 0.0, %v1237
        %v1239 = vpop.f32.mrb[0].mxu0
        %v1240 = vadd.f32 0.0, %v1239
        %1241 = vmatprep.mubr.bf16.mxu0 %v1034
        %1242 = vmatmul.mubr.bf16.gmra.mrb[0].mxu0 %v1031
        %v1243 = vpop.f32.mrb[0].mxu0
        %v1244 = vadd.f32 0.0, %v1243
        %v1245 = vpop.f32.mrb[0].mxu0
        %v1246 = vadd.f32 0.0, %v1245
        %v1247 = vpop.f32.mrb[0].mxu0
        %v1248 = vpop.f32.mrb[0].mxu0
        %1249 = vdwg.mxu0
        %v1250 = vpack.c.b16 %v996, %v996
        %v1251 = vpack.c.b16 %v997, %v997
        %v1288 = vunpack.c.l.b16 %v922
        %v1289 = vunpack.c.h.b16 %v922
        %v1290 = vunpack.c.l.b16 %v923
        %v1291 = vunpack.c.h.b16 %v923
        %v1292 = vunpack.c.l.b16 %v924
        %v1293 = vunpack.c.h.b16 %v924
        %v1294 = vunpack.c.l.b16 %v925
        %v1295 = vunpack.c.h.b16 %v925
        %v1296 = vunpack.c.l.b16 %v926
        %v1297 = vunpack.c.h.b16 %v926
        %v1298 = vunpack.c.l.b16 %v927
        %v1299 = vunpack.c.h.b16 %v927
        %v1300 = vunpack.c.l.b16 %v928
        %v1301 = vunpack.c.h.b16 %v928
        %v1302 = vunpack.c.l.b16 %v929
        %v1303 = vunpack.c.h.b16 %v929
        %v1304 = vunpack.c.l.b16 %v930
        %v1305 = vunpack.c.h.b16 %v930
        %v1306 = vunpack.c.l.b16 %v931
        %v1307 = vunpack.c.h.b16 %v931
        %v1308 = vunpack.c.l.b16 %v932
        %v1309 = vunpack.c.h.b16 %v932
        %v1310 = vunpack.c.l.b16 %v933
        %v1311 = vunpack.c.h.b16 %v933
        %v1312 = vunpack.c.l.b16 %v934
        %v1313 = vunpack.c.h.b16 %v934
        %v1314 = vunpack.c.l.b16 %v935
        %v1315 = vunpack.c.h.b16 %v935
        %v1316 = vunpack.c.l.b16 %v936
        %v1317 = vunpack.c.h.b16 %v936
        %v1318 = vunpack.c.l.b16 %v937
        %v1319 = vunpack.c.h.b16 %v937
        %v1320 = vunpack.c.l.b16 %v938
        %v1321 = vunpack.c.h.b16 %v938
        %v1322 = vunpack.c.l.b16 %v939
        %v1323 = vunpack.c.h.b16 %v939
        %v1324 = vunpack.c.l.b16 %v940
        %v1325 = vunpack.c.h.b16 %v940
        %v1326 = vunpack.c.l.b16 %v941
        %v1327 = vunpack.c.h.b16 %v941
        %v1328 = vunpack.c.l.b16 %v942
        %v1329 = vunpack.c.h.b16 %v942
        %v1330 = vunpack.c.l.b16 %v943
        %v1331 = vunpack.c.h.b16 %v943
        %v1332 = vunpack.c.l.b16 %v944
        %v1333 = vunpack.c.h.b16 %v944
        %v1334 = vunpack.c.l.b16 %v945
        %v1335 = vunpack.c.h.b16 %v945
        %v1336 = vunpack.c.l.b16 %v946
        %v1337 = vunpack.c.h.b16 %v946
        %v1338 = vunpack.c.l.b16 %v947
        %v1339 = vunpack.c.h.b16 %v947
        %v1340 = vunpack.c.l.b16 %v948
        %v1341 = vunpack.c.h.b16 %v948
        %v1342 = vunpack.c.l.b16 %v949
        %v1343 = vunpack.c.h.b16 %v949
        %v1344 = vunpack.c.l.b16 %v950
        %v1345 = vunpack.c.h.b16 %v950
        %v1346 = vunpack.c.l.b16 %v951
        %v1347 = vunpack.c.h.b16 %v951
        %v1348 = vunpack.c.l.b16 %v952
        %v1349 = vunpack.c.h.b16 %v952
        %v1350 = vunpack.c.l.b16 %v953
        %v1351 = vunpack.c.h.b16 %v953
        %v1352 = vpack.c.b16 %v1290, %v1288
        %v1353 = vpack.c.b16 %v1291, %v1289
        %v1354 = vpack.c.b16 %v1294, %v1292
        %v1355 = vpack.c.b16 %v1295, %v1293
        %v1356 = vpack.c.b16 %v1298, %v1296
        %v1357 = vpack.c.b16 %v1299, %v1297
        %v1358 = vpack.c.b16 %v1302, %v1300
        %v1359 = vpack.c.b16 %v1303, %v1301
        %v1360 = vpack.c.b16 %v1306, %v1304
        %v1361 = vpack.c.b16 %v1307, %v1305
        %v1362 = vpack.c.b16 %v1310, %v1308
        %v1363 = vpack.c.b16 %v1311, %v1309
        %v1364 = vpack.c.b16 %v1314, %v1312
        %v1365 = vpack.c.b16 %v1315, %v1313
        %v1366 = vpack.c.b16 %v1318, %v1316
        %v1367 = vpack.c.b16 %v1319, %v1317
        %v1368 = vpack.c.b16 %v1322, %v1320
        %v1369 = vpack.c.b16 %v1323, %v1321
        %v1370 = vpack.c.b16 %v1326, %v1324
        %v1371 = vpack.c.b16 %v1327, %v1325
        %v1372 = vpack.c.b16 %v1330, %v1328
        %v1373 = vpack.c.b16 %v1331, %v1329
        %v1374 = vpack.c.b16 %v1334, %v1332
        %v1375 = vpack.c.b16 %v1335, %v1333
        %v1376 = vpack.c.b16 %v1338, %v1336
        %v1377 = vpack.c.b16 %v1339, %v1337
        %v1378 = vpack.c.b16 %v1342, %v1340
        %v1379 = vpack.c.b16 %v1343, %v1341
        %v1380 = vpack.c.b16 %v1346, %v1344
        %v1381 = vpack.c.b16 %v1347, %v1345
        %v1382 = vpack.c.b16 %v1350, %v1348
        %v1383 = vpack.c.b16 %v1351, %v1349
        %1416 = vmatprep.subr.bf16.mxu0 %v1353
        %1417 = vmatpush1.bf16.msra.mxu0 %v1352
        %1418 = vmatprep.subr.bf16.mxu0 %v1355
        %1419 = vmatpush1.bf16.msra.mxu0 %v1354
        %1420 = vmatprep.subr.bf16.mxu0 %v1357
        %1421 = vmatpush1.bf16.msra.mxu0 %v1356
        %1422 = vmatprep.subr.bf16.mxu0 %v1359
        %1423 = vmatpush1.bf16.msra.mxu0 %v1358
        %1424 = vmatprep.subr.bf16.mxu0 %v1361
        %1425 = vmatpush1.bf16.msra.mxu0 %v1360
        %1426 = vmatprep.subr.bf16.mxu0 %v1363
        %1427 = vmatpush1.bf16.msra.mxu0 %v1362
        %1428 = vmatprep.subr.bf16.mxu0 %v1365
        %1429 = vmatpush1.bf16.msra.mxu0 %v1364
        %1430 = vmatprep.subr.bf16.mxu0 %v1367
        %1431 = vmatpush1.bf16.msra.mxu0 %v1366
        %1432 = vmatprep.subr.bf16.mxu0 %v1369
        %1433 = vmatpush1.bf16.msra.mxu0 %v1368
        %1434 = vmatprep.subr.bf16.mxu0 %v1371
        %1435 = vmatpush1.bf16.msra.mxu0 %v1370
        %1436 = vmatprep.subr.bf16.mxu0 %v1373
        %1437 = vmatpush1.bf16.msra.mxu0 %v1372
        %1438 = vmatprep.subr.bf16.mxu0 %v1375
        %1439 = vmatpush1.bf16.msra.mxu0 %v1374
        %1440 = vmatprep.subr.bf16.mxu0 %v1377
        %1441 = vmatpush1.bf16.msra.mxu0 %v1376
        %1442 = vmatprep.subr.bf16.mxu0 %v1379
        %1443 = vmatpush1.bf16.msra.mxu0 %v1378
        %1444 = vmatprep.subr.bf16.mxu0 %v1381
        %1445 = vmatpush1.bf16.msra.mxu0 %v1380
        %1446 = vmatprep.subr.bf16.mxu0 %v1383
        %1447 = vmatpush1.bf16.msra.mxu0 %v1382
        %1448 = vmatprep.mubr.bf16.mxu0 %v1001
        %1449 = vmatmul.mubr.bf16.gmra.mrb[0].mxu0 %v1000
        %v1450 = vpop.f32.mrb[0].mxu0
        %v1451 = vadd.f32 %v1234, %v1450
        %v1452 = vpop.f32.mrb[0].mxu0
        %v1453 = vadd.f32 %v1236, %v1452
        %v1454 = vpop.f32.mrb[0].mxu0
        %v1455 = vadd.f32 %v1238, %v1454
        %v1456 = vpop.f32.mrb[0].mxu0
        %v1457 = vadd.f32 %v1240, %v1456
        %1458 = vmatprep.mubr.bf16.mxu0 %v1251
        %1459 = vmatmul.mubr.bf16.gmra.mrb[0].mxu0 %v1250
        %v1460 = vpop.f32.mrb[0].mxu0
        %v1461 = vadd.f32 %v1244, %v1460
        %v1462 = vpop.f32.mrb[0].mxu0
        %v1463 = vadd.f32 %v1246, %v1462
        %v1464 = vpop.f32.mrb[0].mxu0
        %v1465 = vpop.f32.mrb[0].mxu0
        %1466 = vdwg.mxu0
        %v1467 = vld [vmem:[#allocation2] sm:$0xee]
        %s1468 = scalar_lea.vmem [#allocation6], 512
        %v1469 = vld [vmem:[%s1468] sm:$0xff]
        %v1470 = vld [vmem:[%s1468 + $0x8] sm:$0xff]
        %v1471 = vld [vmem:[%s1468 + $0x10] sm:$0xff]
        %v1472 = vld [vmem:[%s1468 + $0x18] sm:$0xff]
        %v1473 = vld [vmem:[%s1468 + $0x20] sm:$0xff]
        %v1474 = vld [vmem:[%s1468 + $0x28] sm:$0xff]
        %v1475 = vld [vmem:[%s1468 + $0x30] sm:$0xff]
        %v1476 = vld [vmem:[%s1468 + $0x38] sm:$0xff]
        %v1477 = vld [vmem:[%s1468 + $0x40] sm:$0xff]
        %v1478 = vld [vmem:[%s1468 + $0x48] sm:$0xff]
        %v1479 = vld [vmem:[%s1468 + $0x50] sm:$0xff]
        %v1480 = vld [vmem:[%s1468 + $0x58] sm:$0xff]
        %v1481 = vld [vmem:[%s1468 + $0x60] sm:$0xff]
        %v1482 = vld [vmem:[%s1468 + $0x68] sm:$0xff]
        %v1483 = vld [vmem:[%s1468 + $0x70] sm:$0xff]
        %v1484 = vld [vmem:[%s1468 + $0x78] sm:$0xff]
        %v1485 = vld [vmem:[%s1468 + $0x80] sm:$0xff]
        %v1486 = vld [vmem:[%s1468 + $0x88] sm:$0xff]
        %v1487 = vld [vmem:[%s1468 + $0x90] sm:$0xff]
        %v1488 = vld [vmem:[%s1468 + $0x98] sm:$0xff]
        %v1489 = vld [vmem:[%s1468 + $0xa0] sm:$0xff]
        %v1490 = vld [vmem:[%s1468 + $0xa8] sm:$0xff]
        %v1491 = vld [vmem:[%s1468 + $0xb0] sm:$0xff]
        %v1492 = vld [vmem:[%s1468 + $0xb8] sm:$0xff]
        %v1493 = vld [vmem:[%s1468 + $0xc0] sm:$0xff]
        %v1494 = vld [vmem:[%s1468 + $0xc8] sm:$0xff]
        %v1495 = vld [vmem:[%s1468 + $0xd0] sm:$0xff]
        %v1496 = vld [vmem:[%s1468 + $0xd8] sm:$0xff]
        %v1497 = vld [vmem:[%s1468 + $0xe0] sm:$0xff]
        %v1498 = vld [vmem:[%s1468 + $0xe8] sm:$0xff]
        %v1499 = vld [vmem:[%s1468 + $0xf0] sm:$0xff]
        %v1500 = vld [vmem:[%s1468 + $0xf8] sm:$0xff]
        %v1502 = vunpack.c.l.b16 %v1467
        %v1503 = vunpack.c.h.b16 %v1467
        %v1504 = vpack.c.b16 %v994, %v1502
        %v1505 = vpack.c.b16 %v995, %v1503
        %vm1506 = vcmask 1046528
        %v1507 = vrot.slane %v1504, 1
        %v1508 = vrot.slane %v1002, 1
        %v1509 = vsel %vm1506, %v1507, %v1508
        %v1510 = vrot.slane %v1505, 1
        %v1511 = vrot.slane %v1003, 1
        %v1512 = vsel %vm1506, %v1510, %v1511
        %v1549 = vunpack.c.l.b16 %v1469
        %v1550 = vunpack.c.h.b16 %v1469
        %v1551 = vunpack.c.l.b16 %v1470
        %v1552 = vunpack.c.h.b16 %v1470
        %v1553 = vunpack.c.l.b16 %v1471
        %v1554 = vunpack.c.h.b16 %v1471
        %v1555 = vunpack.c.l.b16 %v1472
        %v1556 = vunpack.c.h.b16 %v1472
        %v1557 = vunpack.c.l.b16 %v1473
        %v1558 = vunpack.c.h.b16 %v1473
        %v1559 = vunpack.c.l.b16 %v1474
        %v1560 = vunpack.c.h.b16 %v1474
        %v1561 = vunpack.c.l.b16 %v1475
        %v1562 = vunpack.c.h.b16 %v1475
        %v1563 = vunpack.c.l.b16 %v1476
        %v1564 = vunpack.c.h.b16 %v1476
        %v1565 = vunpack.c.l.b16 %v1477
        %v1566 = vunpack.c.h.b16 %v1477
        %v1567 = vunpack.c.l.b16 %v1478
        %v1568 = vunpack.c.h.b16 %v1478
        %v1569 = vunpack.c.l.b16 %v1479
        %v1570 = vunpack.c.h.b16 %v1479
        %v1571 = vunpack.c.l.b16 %v1480
        %v1572 = vunpack.c.h.b16 %v1480
        %v1573 = vunpack.c.l.b16 %v1481
        %v1574 = vunpack.c.h.b16 %v1481
        %v1575 = vunpack.c.l.b16 %v1482
        %v1576 = vunpack.c.h.b16 %v1482
        %v1577 = vunpack.c.l.b16 %v1483
        %v1578 = vunpack.c.h.b16 %v1483
        %v1579 = vunpack.c.l.b16 %v1484
        %v1580 = vunpack.c.h.b16 %v1484
        %v1581 = vunpack.c.l.b16 %v1485
        %v1582 = vunpack.c.h.b16 %v1485
        %v1583 = vunpack.c.l.b16 %v1486
        %v1584 = vunpack.c.h.b16 %v1486
        %v1585 = vunpack.c.l.b16 %v1487
        %v1586 = vunpack.c.h.b16 %v1487
        %v1587 = vunpack.c.l.b16 %v1488
        %v1588 = vunpack.c.h.b16 %v1488
        %v1589 = vunpack.c.l.b16 %v1489
        %v1590 = vunpack.c.h.b16 %v1489
        %v1591 = vunpack.c.l.b16 %v1490
        %v1592 = vunpack.c.h.b16 %v1490
        %v1593 = vunpack.c.l.b16 %v1491
        %v1594 = vunpack.c.h.b16 %v1491
        %v1595 = vunpack.c.l.b16 %v1492
        %v1596 = vunpack.c.h.b16 %v1492
        %v1597 = vunpack.c.l.b16 %v1493
        %v1598 = vunpack.c.h.b16 %v1493
        %v1599 = vunpack.c.l.b16 %v1494
        %v1600 = vunpack.c.h.b16 %v1494
        %v1601 = vunpack.c.l.b16 %v1495
        %v1602 = vunpack.c.h.b16 %v1495
        %v1603 = vunpack.c.l.b16 %v1496
        %v1604 = vunpack.c.h.b16 %v1496
        %v1605 = vunpack.c.l.b16 %v1497
        %v1606 = vunpack.c.h.b16 %v1497
        %v1607 = vunpack.c.l.b16 %v1498
        %v1608 = vunpack.c.h.b16 %v1498
        %v1609 = vunpack.c.l.b16 %v1499
        %v1610 = vunpack.c.h.b16 %v1499
        %v1611 = vunpack.c.l.b16 %v1500
        %v1612 = vunpack.c.h.b16 %v1500
        %v1613 = vpack.c.b16 %v1551, %v1549
        %v1614 = vpack.c.b16 %v1552, %v1550
        %v1615 = vpack.c.b16 %v1555, %v1553
        %v1616 = vpack.c.b16 %v1556, %v1554
        %v1617 = vpack.c.b16 %v1559, %v1557
        %v1618 = vpack.c.b16 %v1560, %v1558
        %v1619 = vpack.c.b16 %v1563, %v1561
        %v1620 = vpack.c.b16 %v1564, %v1562
        %v1621 = vpack.c.b16 %v1567, %v1565
        %v1622 = vpack.c.b16 %v1568, %v1566
        %v1623 = vpack.c.b16 %v1571, %v1569
        %v1624 = vpack.c.b16 %v1572, %v1570
        %v1625 = vpack.c.b16 %v1575, %v1573
        %v1626 = vpack.c.b16 %v1576, %v1574
        %v1627 = vpack.c.b16 %v1579, %v1577
        %v1628 = vpack.c.b16 %v1580, %v1578
        %v1629 = vpack.c.b16 %v1583, %v1581
        %v1630 = vpack.c.b16 %v1584, %v1582
        %v1631 = vpack.c.b16 %v1587, %v1585
        %v1632 = vpack.c.b16 %v1588, %v1586
        %v1633 = vpack.c.b16 %v1591, %v1589
        %v1634 = vpack.c.b16 %v1592, %v1590
        %v1635 = vpack.c.b16 %v1595, %v1593
        %v1636 = vpack.c.b16 %v1596, %v1594
        %v1637 = vpack.c.b16 %v1599, %v1597
        %v1638 = vpack.c.b16 %v1600, %v1598
        %v1639 = vpack.c.b16 %v1603, %v1601
        %v1640 = vpack.c.b16 %v1604, %v1602
        %v1641 = vpack.c.b16 %v1607, %v1605
        %v1642 = vpack.c.b16 %v1608, %v1606
        %v1643 = vpack.c.b16 %v1611, %v1609
        %v1644 = vpack.c.b16 %v1612, %v1610
        %1677 = vmatprep.subr.bf16.mxu0 %v1614
        %1678 = vmatpush1.bf16.msra.mxu0 %v1613
        %1679 = vmatprep.subr.bf16.mxu0 %v1616
        %1680 = vmatpush1.bf16.msra.mxu0 %v1615
        %1681 = vmatprep.subr.bf16.mxu0 %v1618
        %1682 = vmatpush1.bf16.msra.mxu0 %v1617
        %1683 = vmatprep.subr.bf16.mxu0 %v1620
        %1684 = vmatpush1.bf16.msra.mxu0 %v1619
        %1685 = vmatprep.subr.bf16.mxu0 %v1622
        %1686 = vmatpush1.bf16.msra.mxu0 %v1621
        %1687 = vmatprep.subr.bf16.mxu0 %v1624
        %1688 = vmatpush1.bf16.msra.mxu0 %v1623
        %1689 = vmatprep.subr.bf16.mxu0 %v1626
        %1690 = vmatpush1.bf16.msra.mxu0 %v1625
        %1691 = vmatprep.subr.bf16.mxu0 %v1628
        %1692 = vmatpush1.bf16.msra.mxu0 %v1627
        %1693 = vmatprep.subr.bf16.mxu0 %v1630
        %1694 = vmatpush1.bf16.msra.mxu0 %v1629
        %1695 = vmatprep.subr.bf16.mxu0 %v1632
        %1696 = vmatpush1.bf16.msra.mxu0 %v1631
        %1697 = vmatprep.subr.bf16.mxu0 %v1634
        %1698 = vmatpush1.bf16.msra.mxu0 %v1633
        %1699 = vmatprep.subr.bf16.mxu0 %v1636
        %1700 = vmatpush1.bf16.msra.mxu0 %v1635
        %1701 = vmatprep.subr.bf16.mxu0 %v1638
        %1702 = vmatpush1.bf16.msra.mxu0 %v1637
        %1703 = vmatprep.subr.bf16.mxu0 %v1640
        %1704 = vmatpush1.bf16.msra.mxu0 %v1639
        %1705 = vmatprep.subr.bf16.mxu0 %v1642
        %1706 = vmatpush1.bf16.msra.mxu0 %v1641
        %1707 = vmatprep.subr.bf16.mxu0 %v1644
        %1708 = vmatpush1.bf16.msra.mxu0 %v1643
        %1709 = vmatprep.mubr.bf16.mxu0 %v1512
        %1710 = vmatmul.mubr.bf16.gmra.mrb[0].mxu0 %v1509
        %v1711 = vpop.f32.mrb[0].mxu0
        %v1712 = vadd.f32 0.0, %v1711
        %v1713 = vpop.f32.mrb[0].mxu0
        %v1714 = vadd.f32 0.0, %v1713
        %v1715 = vpop.f32.mrb[0].mxu0
        %v1716 = vadd.f32 0.0, %v1715
        %v1717 = vpop.f32.mrb[0].mxu0
        %v1718 = vadd.f32 0.0, %v1717
        %1719 = vmatprep.mubr.bf16.mxu0 %v1511
        %1720 = vmatmul.mubr.bf16.gmra.mrb[0].mxu0 %v1508
        %v1721 = vpop.f32.mrb[0].mxu0
        %v1722 = vadd.f32 0.0, %v1721
        %v1723 = vpop.f32.mrb[0].mxu0
        %v1724 = vadd.f32 0.0, %v1723
        %v1725 = vpop.f32.mrb[0].mxu0
        %v1726 = vpop.f32.mrb[0].mxu0
        %1727 = vdwg.mxu0
        %v1728 = vadd.f32 %v1451, %v1712
        %v1729 = vadd.f32 %v1453, %v1714
        %v1730 = vadd.f32 %v1455, %v1716
        %v1731 = vadd.f32 %v1457, %v1718
        %v1732 = vadd.f32 %v1461, %v1722
        %v1733 = vadd.f32 %v1463, %v1724
        %v1734 = vld [vmem:[#allocation2] sm:$0x88]
        %v1735 = vld [vmem:[#allocation2 + $0x18] sm:$0x77]
        %s1736 = scalar_lea.vmem [#allocation6], 768
        %v1737 = vld [vmem:[%s1736] sm:$0xff]
        %v1738 = vld [vmem:[%s1736 + $0x8] sm:$0xff]
        %v1739 = vld [vmem:[%s1736 + $0x10] sm:$0xff]
        %v1740 = vld [vmem:[%s1736 + $0x18] sm:$0xff]
        %v1741 = vld [vmem:[%s1736 + $0x20] sm:$0xff]
        %v1742 = vld [vmem:[%s1736 + $0x28] sm:$0xff]
        %v1743 = vld [vmem:[%s1736 + $0x30] sm:$0xff]
        %v1744 = vld [vmem:[%s1736 + $0x38] sm:$0xff]
        %v1745 = vld [vmem:[%s1736 + $0x40] sm:$0xff]
        %v1746 = vld [vmem:[%s1736 + $0x48] sm:$0xff]
        %v1747 = vld [vmem:[%s1736 + $0x50] sm:$0xff]
        %v1748 = vld [vmem:[%s1736 + $0x58] sm:$0xff]
        %v1749 = vld [vmem:[%s1736 + $0x60] sm:$0xff]
        %v1750 = vld [vmem:[%s1736 + $0x68] sm:$0xff]
        %v1751 = vld [vmem:[%s1736 + $0x70] sm:$0xff]
        %v1752 = vld [vmem:[%s1736 + $0x78] sm:$0xff]
        %v1753 = vld [vmem:[%s1736 + $0x80] sm:$0xff]
        %v1754 = vld [vmem:[%s1736 + $0x88] sm:$0xff]
        %v1755 = vld [vmem:[%s1736 + $0x90] sm:$0xff]
        %v1756 = vld [vmem:[%s1736 + $0x98] sm:$0xff]
        %v1757 = vld [vmem:[%s1736 + $0xa0] sm:$0xff]
        %v1758 = vld [vmem:[%s1736 + $0xa8] sm:$0xff]
        %v1759 = vld [vmem:[%s1736 + $0xb0] sm:$0xff]
        %v1760 = vld [vmem:[%s1736 + $0xb8] sm:$0xff]
        %v1761 = vld [vmem:[%s1736 + $0xc0] sm:$0xff]
        %v1762 = vld [vmem:[%s1736 + $0xc8] sm:$0xff]
        %v1763 = vld [vmem:[%s1736 + $0xd0] sm:$0xff]
        %v1764 = vld [vmem:[%s1736 + $0xd8] sm:$0xff]
        %v1765 = vld [vmem:[%s1736 + $0xe0] sm:$0xff]
        %v1766 = vld [vmem:[%s1736 + $0xe8] sm:$0xff]
        %v1767 = vld [vmem:[%s1736 + $0xf0] sm:$0xff]
        %v1768 = vld [vmem:[%s1736 + $0xf8] sm:$0xff]
        %v1771 = vunpack.c.l.b16 %v1734
        %v1772 = vunpack.c.h.b16 %v1734
        %v1773 = vunpack.c.l.b16 %v1735
        %v1774 = vunpack.c.h.b16 %v1735
        %v1775 = vpack.c.b16 %v994, %v1771
        %v1776 = vpack.c.b16 %v995, %v1772
        %v1777 = vpack.c.b16 %v1773, %v996
        %v1778 = vpack.c.b16 %v1774, %v997
        %vm1779 = vcmask 1044480
        %v1780 = vrot.slane %v1775, 3
        %v1781 = vrot.slane %v1777, 3
        %v1782 = vsel %vm1779, %v1780, %v1781
        %v1783 = vrot.slane %v1776, 3
        %v1784 = vrot.slane %v1778, 3
        %v1785 = vsel %vm1779, %v1783, %v1784
        %v1822 = vunpack.c.l.b16 %v1737
        %v1823 = vunpack.c.h.b16 %v1737
        %v1824 = vunpack.c.l.b16 %v1738
        %v1825 = vunpack.c.h.b16 %v1738
        %v1826 = vunpack.c.l.b16 %v1739
        %v1827 = vunpack.c.h.b16 %v1739
        %v1828 = vunpack.c.l.b16 %v1740
        %v1829 = vunpack.c.h.b16 %v1740
        %v1830 = vunpack.c.l.b16 %v1741
        %v1831 = vunpack.c.h.b16 %v1741
        %v1832 = vunpack.c.l.b16 %v1742
        %v1833 = vunpack.c.h.b16 %v1742
        %v1834 = vunpack.c.l.b16 %v1743
        %v1835 = vunpack.c.h.b16 %v1743
        %v1836 = vunpack.c.l.b16 %v1744
        %v1837 = vunpack.c.h.b16 %v1744
        %v1838 = vunpack.c.l.b16 %v1745
        %v1839 = vunpack.c.h.b16 %v1745
        %v1840 = vunpack.c.l.b16 %v1746
        %v1841 = vunpack.c.h.b16 %v1746
        %v1842 = vunpack.c.l.b16 %v1747
        %v1843 = vunpack.c.h.b16 %v1747
        %v1844 = vunpack.c.l.b16 %v1748
        %v1845 = vunpack.c.h.b16 %v1748
        %v1846 = vunpack.c.l.b16 %v1749
        %v1847 = vunpack.c.h.b16 %v1749
        %v1848 = vunpack.c.l.b16 %v1750
        %v1849 = vunpack.c.h.b16 %v1750
        %v1850 = vunpack.c.l.b16 %v1751
        %v1851 = vunpack.c.h.b16 %v1751
        %v1852 = vunpack.c.l.b16 %v1752
        %v1853 = vunpack.c.h.b16 %v1752
        %v1854 = vunpack.c.l.b16 %v1753
        %v1855 = vunpack.c.h.b16 %v1753
        %v1856 = vunpack.c.l.b16 %v1754
        %v1857 = vunpack.c.h.b16 %v1754
        %v1858 = vunpack.c.l.b16 %v1755
        %v1859 = vunpack.c.h.b16 %v1755
        %v1860 = vunpack.c.l.b16 %v1756
        %v1861 = vunpack.c.h.b16 %v1756
        %v1862 = vunpack.c.l.b16 %v1757
        %v1863 = vunpack.c.h.b16 %v1757
        %v1864 = vunpack.c.l.b16 %v1758
        %v1865 = vunpack.c.h.b16 %v1758
        %v1866 = vunpack.c.l.b16 %v1759
        %v1867 = vunpack.c.h.b16 %v1759
        %v1868 = vunpack.c.l.b16 %v1760
        %v1869 = vunpack.c.h.b16 %v1760
        %v1870 = vunpack.c.l.b16 %v1761
        %v1871 = vunpack.c.h.b16 %v1761
        %v1872 = vunpack.c.l.b16 %v1762
        %v1873 = vunpack.c.h.b16 %v1762
        %v1874 = vunpack.c.l.b16 %v1763
        %v1875 = vunpack.c.h.b16 %v1763
        %v1876 = vunpack.c.l.b16 %v1764
        %v1877 = vunpack.c.h.b16 %v1764
        %v1878 = vunpack.c.l.b16 %v1765
        %v1879 = vunpack.c.h.b16 %v1765
        %v1880 = vunpack.c.l.b16 %v1766
        %v1881 = vunpack.c.h.b16 %v1766
        %v1882 = vunpack.c.l.b16 %v1767
        %v1883 = vunpack.c.h.b16 %v1767
        %v1884 = vunpack.c.l.b16 %v1768
        %v1885 = vunpack.c.h.b16 %v1768
        %v1886 = vpack.c.b16 %v1824, %v1822
        %v1887 = vpack.c.b16 %v1825, %v1823
        %v1888 = vpack.c.b16 %v1828, %v1826
        %v1889 = vpack.c.b16 %v1829, %v1827
        %v1890 = vpack.c.b16 %v1832, %v1830
        %v1891 = vpack.c.b16 %v1833, %v1831
        %v1892 = vpack.c.b16 %v1836, %v1834
        %v1893 = vpack.c.b16 %v1837, %v1835
        %v1894 = vpack.c.b16 %v1840, %v1838
        %v1895 = vpack.c.b16 %v1841, %v1839
        %v1896 = vpack.c.b16 %v1844, %v1842
        %v1897 = vpack.c.b16 %v1845, %v1843
        %v1898 = vpack.c.b16 %v1848, %v1846
        %v1899 = vpack.c.b16 %v1849, %v1847
        %v1900 = vpack.c.b16 %v1852, %v1850
        %v1901 = vpack.c.b16 %v1853, %v1851
        %v1902 = vpack.c.b16 %v1856, %v1854
        %v1903 = vpack.c.b16 %v1857, %v1855
        %v1904 = vpack.c.b16 %v1860, %v1858
        %v1905 = vpack.c.b16 %v1861, %v1859
        %v1906 = vpack.c.b16 %v1864, %v1862
        %v1907 = vpack.c.b16 %v1865, %v1863
        %v1908 = vpack.c.b16 %v1868, %v1866
        %v1909 = vpack.c.b16 %v1869, %v1867
        %v1910 = vpack.c.b16 %v1872, %v1870
        %v1911 = vpack.c.b16 %v1873, %v1871
        %v1912 = vpack.c.b16 %v1876, %v1874
        %v1913 = vpack.c.b16 %v1877, %v1875
        %v1914 = vpack.c.b16 %v1880, %v1878
        %v1915 = vpack.c.b16 %v1881, %v1879
        %v1916 = vpack.c.b16 %v1884, %v1882
        %v1917 = vpack.c.b16 %v1885, %v1883
        %1950 = vmatprep.subr.bf16.mxu0 %v1887
        %1951 = vmatpush1.bf16.msra.mxu0 %v1886
        %1952 = vmatprep.subr.bf16.mxu0 %v1889
        %1953 = vmatpush1.bf16.msra.mxu0 %v1888
        %1954 = vmatprep.subr.bf16.mxu0 %v1891
        %1955 = vmatpush1.bf16.msra.mxu0 %v1890
        %1956 = vmatprep.subr.bf16.mxu0 %v1893
        %1957 = vmatpush1.bf16.msra.mxu0 %v1892
        %1958 = vmatprep.subr.bf16.mxu0 %v1895
        %1959 = vmatpush1.bf16.msra.mxu0 %v1894
        %1960 = vmatprep.subr.bf16.mxu0 %v1897
        %1961 = vmatpush1.bf16.msra.mxu0 %v1896
        %1962 = vmatprep.subr.bf16.mxu0 %v1899
        %1963 = vmatpush1.bf16.msra.mxu0 %v1898
        %1964 = vmatprep.subr.bf16.mxu0 %v1901
        %1965 = vmatpush1.bf16.msra.mxu0 %v1900
        %1966 = vmatprep.subr.bf16.mxu0 %v1903
        %1967 = vmatpush1.bf16.msra.mxu0 %v1902
        %1968 = vmatprep.subr.bf16.mxu0 %v1905
        %1969 = vmatpush1.bf16.msra.mxu0 %v1904
        %1970 = vmatprep.subr.bf16.mxu0 %v1907
        %1971 = vmatpush1.bf16.msra.mxu0 %v1906
        %1972 = vmatprep.subr.bf16.mxu0 %v1909
        %1973 = vmatpush1.bf16.msra.mxu0 %v1908
        %1974 = vmatprep.subr.bf16.mxu0 %v1911
        %1975 = vmatpush1.bf16.msra.mxu0 %v1910
        %1976 = vmatprep.subr.bf16.mxu0 %v1913
        %1977 = vmatpush1.bf16.msra.mxu0 %v1912
        %1978 = vmatprep.subr.bf16.mxu0 %v1915
        %1979 = vmatpush1.bf16.msra.mxu0 %v1914
        %1980 = vmatprep.subr.bf16.mxu0 %v1917
        %1981 = vmatpush1.bf16.msra.mxu0 %v1916
        %1982 = vmatprep.mubr.bf16.mxu0 %v1785
        %1983 = vmatmul.mubr.bf16.gmra.mrb[0].mxu0 %v1782
        %v1984 = vpop.f32.mrb[0].mxu0
        %v1985 = vadd.f32 0.0, %v1984
        %v1986 = vpop.f32.mrb[0].mxu0
        %v1987 = vadd.f32 0.0, %v1986
        %v1988 = vpop.f32.mrb[0].mxu0
        %v1989 = vadd.f32 0.0, %v1988
        %v1990 = vpop.f32.mrb[0].mxu0
        %v1991 = vadd.f32 0.0, %v1990
        %1992 = vmatprep.mubr.bf16.mxu0 %v1784
        %1993 = vmatmul.mubr.bf16.gmra.mrb[0].mxu0 %v1781
        %v1994 = vpop.f32.mrb[0].mxu0
        %v1995 = vadd.f32 0.0, %v1994
        %v1996 = vpop.f32.mrb[0].mxu0
        %v1997 = vadd.f32 0.0, %v1996
        %v1998 = vpop.f32.mrb[0].mxu0
        %v1999 = vpop.f32.mrb[0].mxu0
        %2000 = vdwg.mxu0
        %v2001 = vadd.f32 %v1728, %v1985
        %v2002 = vadd.f32 %v1729, %v1987
        %v2003 = vadd.f32 %v1730, %v1989
        %v2004 = vadd.f32 %v1731, %v1991
        %v2005 = vadd.f32 %v1732, %v1995
        %v2006 = vadd.f32 %v1733, %v1997
        %v2007 = vld [vmem:[#allocation2 + $0x18] sm:$0xff]
        %s2008 = scalar_lea.vmem [#allocation6], 1024
        %v2009 = vld [vmem:[%s2008] sm:$0xff]
        %v2010 = vld [vmem:[%s2008 + $0x8] sm:$0xff]
        %v2011 = vld [vmem:[%s2008 + $0x10] sm:$0xff]
        %v2012 = vld [vmem:[%s2008 + $0x18] sm:$0xff]
        %v2013 = vld [vmem:[%s2008 + $0x20] sm:$0xff]
        %v2014 = vld [vmem:[%s2008 + $0x28] sm:$0xff]
        %v2015 = vld [vmem:[%s2008 + $0x30] sm:$0xff]
        %v2016 = vld [vmem:[%s2008 + $0x38] sm:$0xff]
        %v2017 = vld [vmem:[%s2008 + $0x40] sm:$0xff]
        %v2018 = vld [vmem:[%s2008 + $0x48] sm:$0xff]
        %v2019 = vld [vmem:[%s2008 + $0x50] sm:$0xff]
        %v2020 = vld [vmem:[%s2008 + $0x58] sm:$0xff]
        %v2021 = vld [vmem:[%s2008 + $0x60] sm:$0xff]
        %v2022 = vld [vmem:[%s2008 + $0x68] sm:$0xff]
        %v2023 = vld [vmem:[%s2008 + $0x70] sm:$0xff]
        %v2024 = vld [vmem:[%s2008 + $0x78] sm:$0xff]
        %v2025 = vld [vmem:[%s2008 + $0x80] sm:$0xff]
        %v2026 = vld [vmem:[%s2008 + $0x88] sm:$0xff]
        %v2027 = vld [vmem:[%s2008 + $0x90] sm:$0xff]
        %v2028 = vld [vmem:[%s2008 + $0x98] sm:$0xff]
        %v2029 = vld [vmem:[%s2008 + $0xa0] sm:$0xff]
        %v2030 = vld [vmem:[%s2008 + $0xa8] sm:$0xff]
        %v2031 = vld [vmem:[%s2008 + $0xb0] sm:$0xff]
        %v2032 = vld [vmem:[%s2008 + $0xb8] sm:$0xff]
        %v2033 = vld [vmem:[%s2008 + $0xc0] sm:$0xff]
        %v2034 = vld [vmem:[%s2008 + $0xc8] sm:$0xff]
        %v2035 = vld [vmem:[%s2008 + $0xd0] sm:$0xff]
        %v2036 = vld [vmem:[%s2008 + $0xd8] sm:$0xff]
        %v2037 = vld [vmem:[%s2008 + $0xe0] sm:$0xff]
        %v2038 = vld [vmem:[%s2008 + $0xe8] sm:$0xff]
        %v2039 = vld [vmem:[%s2008 + $0xf0] sm:$0xff]
        %v2040 = vld [vmem:[%s2008 + $0xf8] sm:$0xff]
        %v2042 = vunpack.c.l.b16 %v2007
        %v2043 = vunpack.c.h.b16 %v2007
        %v2044 = vpack.c.b16 %v2042, %v996
        %v2045 = vpack.c.b16 %v2043, %v997
        %v2047 = vshrl.u32 %v1775, 16
        %v2049 = vrot.slane %v2047, 3
        %v2050 = vshll.u32 %v1775, 16
        %v2052 = vrot.slane %v2050, 4
        %v2053 = vor.u32 %v2049, %v2052
        %v2055 = vshrl.u32 %v2044, 16
        %v2057 = vrot.slane %v2055, 3
        %v2058 = vshll.u32 %v2044, 16
        %v2060 = vrot.slane %v2058, 4
        %v2061 = vor.u32 %v2057, %v2060
        %v2062 = vsel %vm876, %v2053, %v2061
        %v2064 = vshrl.u32 %v1776, 16
        %v2066 = vrot.slane %v2064, 3
        %v2067 = vshll.u32 %v1776, 16
        %v2069 = vrot.slane %v2067, 4
        %v2070 = vor.u32 %v2066, %v2069
        %v2072 = vshrl.u32 %v2045, 16
        %v2074 = vrot.slane %v2072, 3
        %v2075 = vshll.u32 %v2045, 16
        %v2077 = vrot.slane %v2075, 4
        %v2078 = vor.u32 %v2074, %v2077
        %v2079 = vsel %vm876, %v2070, %v2078
        %v2116 = vunpack.c.l.b16 %v2009
        %v2117 = vunpack.c.h.b16 %v2009
        %v2118 = vunpack.c.l.b16 %v2010
        %v2119 = vunpack.c.h.b16 %v2010
        %v2120 = vunpack.c.l.b16 %v2011
        %v2121 = vunpack.c.h.b16 %v2011
        %v2122 = vunpack.c.l.b16 %v2012
        %v2123 = vunpack.c.h.b16 %v2012
        %v2124 = vunpack.c.l.b16 %v2013
        %v2125 = vunpack.c.h.b16 %v2013
        %v2126 = vunpack.c.l.b16 %v2014
        %v2127 = vunpack.c.h.b16 %v2014
        %v2128 = vunpack.c.l.b16 %v2015
        %v2129 = vunpack.c.h.b16 %v2015
        %v2130 = vunpack.c.l.b16 %v2016
        %v2131 = vunpack.c.h.b16 %v2016
        %v2132 = vunpack.c.l.b16 %v2017
        %v2133 = vunpack.c.h.b16 %v2017
        %v2134 = vunpack.c.l.b16 %v2018
        %v2135 = vunpack.c.h.b16 %v2018
        %v2136 = vunpack.c.l.b16 %v2019
        %v2137 = vunpack.c.h.b16 %v2019
        %v2138 = vunpack.c.l.b16 %v2020
        %v2139 = vunpack.c.h.b16 %v2020
        %v2140 = vunpack.c.l.b16 %v2021
        %v2141 = vunpack.c.h.b16 %v2021
        %v2142 = vunpack.c.l.b16 %v2022
        %v2143 = vunpack.c.h.b16 %v2022
        %v2144 = vunpack.c.l.b16 %v2023
        %v2145 = vunpack.c.h.b16 %v2023
        %v2146 = vunpack.c.l.b16 %v2024
        %v2147 = vunpack.c.h.b16 %v2024
        %v2148 = vunpack.c.l.b16 %v2025
        %v2149 = vunpack.c.h.b16 %v2025
        %v2150 = vunpack.c.l.b16 %v2026
        %v2151 = vunpack.c.h.b16 %v2026
        %v2152 = vunpack.c.l.b16 %v2027
        %v2153 = vunpack.c.h.b16 %v2027
        %v2154 = vunpack.c.l.b16 %v2028
        %v2155 = vunpack.c.h.b16 %v2028
        %v2156 = vunpack.c.l.b16 %v2029
        %v2157 = vunpack.c.h.b16 %v2029
        %v2158 = vunpack.c.l.b16 %v2030
        %v2159 = vunpack.c.h.b16 %v2030
        %v2160 = vunpack.c.l.b16 %v2031
        %v2161 = vunpack.c.h.b16 %v2031
        %v2162 = vunpack.c.l.b16 %v2032
        %v2163 = vunpack.c.h.b16 %v2032
        %v2164 = vunpack.c.l.b16 %v2033
        %v2165 = vunpack.c.h.b16 %v2033
        %v2166 = vunpack.c.l.b16 %v2034
        %v2167 = vunpack.c.h.b16 %v2034
        %v2168 = vunpack.c.l.b16 %v2035
        %v2169 = vunpack.c.h.b16 %v2035
        %v2170 = vunpack.c.l.b16 %v2036
        %v2171 = vunpack.c.h.b16 %v2036
        %v2172 = vunpack.c.l.b16 %v2037
        %v2173 = vunpack.c.h.b16 %v2037
        %v2174 = vunpack.c.l.b16 %v2038
        %v2175 = vunpack.c.h.b16 %v2038
        %v2176 = vunpack.c.l.b16 %v2039
        %v2177 = vunpack.c.h.b16 %v2039
        %v2178 = vunpack.c.l.b16 %v2040
        %v2179 = vunpack.c.h.b16 %v2040
        %v2180 = vpack.c.b16 %v2118, %v2116
        %v2181 = vpack.c.b16 %v2119, %v2117
        %v2182 = vpack.c.b16 %v2122, %v2120
        %v2183 = vpack.c.b16 %v2123, %v2121
        %v2184 = vpack.c.b16 %v2126, %v2124
        %v2185 = vpack.c.b16 %v2127, %v2125
        %v2186 = vpack.c.b16 %v2130, %v2128
        %v2187 = vpack.c.b16 %v2131, %v2129
        %v2188 = vpack.c.b16 %v2134, %v2132
        %v2189 = vpack.c.b16 %v2135, %v2133
        %v2190 = vpack.c.b16 %v2138, %v2136
        %v2191 = vpack.c.b16 %v2139, %v2137
        %v2192 = vpack.c.b16 %v2142, %v2140
        %v2193 = vpack.c.b16 %v2143, %v2141
        %v2194 = vpack.c.b16 %v2146, %v2144
        %v2195 = vpack.c.b16 %v2147, %v2145
        %v2196 = vpack.c.b16 %v2150, %v2148
        %v2197 = vpack.c.b16 %v2151, %v2149
        %v2198 = vpack.c.b16 %v2154, %v2152
        %v2199 = vpack.c.b16 %v2155, %v2153
        %v2200 = vpack.c.b16 %v2158, %v2156
        %v2201 = vpack.c.b16 %v2159, %v2157
        %v2202 = vpack.c.b16 %v2162, %v2160
        %v2203 = vpack.c.b16 %v2163, %v2161
        %v2204 = vpack.c.b16 %v2166, %v2164
        %v2205 = vpack.c.b16 %v2167, %v2165
        %v2206 = vpack.c.b16 %v2170, %v2168
        %v2207 = vpack.c.b16 %v2171, %v2169
        %v2208 = vpack.c.b16 %v2174, %v2172
        %v2209 = vpack.c.b16 %v2175, %v2173
        %v2210 = vpack.c.b16 %v2178, %v2176
        %v2211 = vpack.c.b16 %v2179, %v2177
        %2244 = vmatprep.subr.bf16.mxu0 %v2181
        %2245 = vmatpush1.bf16.msra.mxu0 %v2180
        %2246 = vmatprep.subr.bf16.mxu0 %v2183
        %2247 = vmatpush1.bf16.msra.mxu0 %v2182
        %2248 = vmatprep.subr.bf16.mxu0 %v2185
        %2249 = vmatpush1.bf16.msra.mxu0 %v2184
        %2250 = vmatprep.subr.bf16.mxu0 %v2187
        %2251 = vmatpush1.bf16.msra.mxu0 %v2186
        %2252 = vmatprep.subr.bf16.mxu0 %v2189
        %2253 = vmatpush1.bf16.msra.mxu0 %v2188
        %2254 = vmatprep.subr.bf16.mxu0 %v2191
        %2255 = vmatpush1.bf16.msra.mxu0 %v2190
        %2256 = vmatprep.subr.bf16.mxu0 %v2193
        %2257 = vmatpush1.bf16.msra.mxu0 %v2192
        %2258 = vmatprep.subr.bf16.mxu0 %v2195
        %2259 = vmatpush1.bf16.msra.mxu0 %v2194
        %2260 = vmatprep.subr.bf16.mxu0 %v2197
        %2261 = vmatpush1.bf16.msra.mxu0 %v2196
        %2262 = vmatprep.subr.bf16.mxu0 %v2199
        %2263 = vmatpush1.bf16.msra.mxu0 %v2198
        %2264 = vmatprep.subr.bf16.mxu0 %v2201
        %2265 = vmatpush1.bf16.msra.mxu0 %v2200
        %2266 = vmatprep.subr.bf16.mxu0 %v2203
        %2267 = vmatpush1.bf16.msra.mxu0 %v2202
        %2268 = vmatprep.subr.bf16.mxu0 %v2205
        %2269 = vmatpush1.bf16.msra.mxu0 %v2204
        %2270 = vmatprep.subr.bf16.mxu0 %v2207
        %2271 = vmatpush1.bf16.msra.mxu0 %v2206
        %2272 = vmatprep.subr.bf16.mxu0 %v2209
        %2273 = vmatpush1.bf16.msra.mxu0 %v2208
        %2274 = vmatprep.subr.bf16.mxu0 %v2211
        %2275 = vmatpush1.bf16.msra.mxu0 %v2210
        %2276 = vmatprep.mubr.bf16.mxu0 %v2079
        %2277 = vmatmul.mubr.bf16.gmra.mrb[0].mxu0 %v2062
        %v2278 = vpop.f32.mrb[0].mxu0
        %v2279 = vadd.f32 0.0, %v2278
        %v2280 = vpop.f32.mrb[0].mxu0
        %v2281 = vadd.f32 0.0, %v2280
        %v2282 = vpop.f32.mrb[0].mxu0
        %v2283 = vadd.f32 0.0, %v2282
        %v2284 = vpop.f32.mrb[0].mxu0
        %v2285 = vadd.f32 0.0, %v2284
        %2286 = vmatprep.mubr.bf16.mxu0 %v2078
        %2287 = vmatmul.mubr.bf16.gmra.mrb[0].mxu0 %v2061
        %v2288 = vpop.f32.mrb[0].mxu0
        %v2289 = vadd.f32 0.0, %v2288
        %v2290 = vpop.f32.mrb[0].mxu0
        %v2291 = vadd.f32 0.0, %v2290
        %v2292 = vpop.f32.mrb[0].mxu0
        %v2293 = vpop.f32.mrb[0].mxu0
        %2294 = vdwg.mxu0
        %v2295 = vadd.f32 %v2001, %v2279
        %v2296 = vadd.f32 %v2002, %v2281
        %v2297 = vadd.f32 %v2003, %v2283
        %v2298 = vadd.f32 %v2004, %v2285
        %v2299 = vadd.f32 %v2005, %v2289
        %v2300 = vadd.f32 %v2006, %v2291
        %s2301 = scalar_lea.vmem [#allocation6], 1280
        %v2302 = vld [vmem:[%s2301] sm:$0xff]
        %v2303 = vld [vmem:[%s2301 + $0x8] sm:$0xff]
        %v2304 = vld [vmem:[%s2301 + $0x10] sm:$0xff]
        %v2305 = vld [vmem:[%s2301 + $0x18] sm:$0xff]
        %v2306 = vld [vmem:[%s2301 + $0x20] sm:$0xff]
        %v2307 = vld [vmem:[%s2301 + $0x28] sm:$0xff]
        %v2308 = vld [vmem:[%s2301 + $0x30] sm:$0xff]
        %v2309 = vld [vmem:[%s2301 + $0x38] sm:$0xff]
        %v2310 = vld [vmem:[%s2301 + $0x40] sm:$0xff]
        %v2311 = vld [vmem:[%s2301 + $0x48] sm:$0xff]
        %v2312 = vld [vmem:[%s2301 + $0x50] sm:$0xff]
        %v2313 = vld [vmem:[%s2301 + $0x58] sm:$0xff]
        %v2314 = vld [vmem:[%s2301 + $0x60] sm:$0xff]
        %v2315 = vld [vmem:[%s2301 + $0x68] sm:$0xff]
        %v2316 = vld [vmem:[%s2301 + $0x70] sm:$0xff]
        %v2317 = vld [vmem:[%s2301 + $0x78] sm:$0xff]
        %v2318 = vld [vmem:[%s2301 + $0x80] sm:$0xff]
        %v2319 = vld [vmem:[%s2301 + $0x88] sm:$0xff]
        %v2320 = vld [vmem:[%s2301 + $0x90] sm:$0xff]
        %v2321 = vld [vmem:[%s2301 + $0x98] sm:$0xff]
        %v2322 = vld [vmem:[%s2301 + $0xa0] sm:$0xff]
        %v2323 = vld [vmem:[%s2301 + $0xa8] sm:$0xff]
        %v2324 = vld [vmem:[%s2301 + $0xb0] sm:$0xff]
        %v2325 = vld [vmem:[%s2301 + $0xb8] sm:$0xff]
        %v2326 = vld [vmem:[%s2301 + $0xc0] sm:$0xff]
        %v2327 = vld [vmem:[%s2301 + $0xc8] sm:$0xff]
        %v2328 = vld [vmem:[%s2301 + $0xd0] sm:$0xff]
        %v2329 = vld [vmem:[%s2301 + $0xd8] sm:$0xff]
        %v2330 = vld [vmem:[%s2301 + $0xe0] sm:$0xff]
        %v2331 = vld [vmem:[%s2301 + $0xe8] sm:$0xff]
        %v2332 = vld [vmem:[%s2301 + $0xf0] sm:$0xff]
        %v2333 = vld [vmem:[%s2301 + $0xf8] sm:$0xff]
        %v2334 = vpack.c.b16 %v996, %v994
        %v2335 = vpack.c.b16 %v997, %v995
        %v2336 = vpack.c.b16 %v2042, %v2042
        %v2337 = vpack.c.b16 %v2043, %v2043
        %v2374 = vunpack.c.l.b16 %v2302
        %v2375 = vunpack.c.h.b16 %v2302
        %v2376 = vunpack.c.l.b16 %v2303
        %v2377 = vunpack.c.h.b16 %v2303
        %v2378 = vunpack.c.l.b16 %v2304
        %v2379 = vunpack.c.h.b16 %v2304
        %v2380 = vunpack.c.l.b16 %v2305
        %v2381 = vunpack.c.h.b16 %v2305
        %v2382 = vunpack.c.l.b16 %v2306
        %v2383 = vunpack.c.h.b16 %v2306
        %v2384 = vunpack.c.l.b16 %v2307
        %v2385 = vunpack.c.h.b16 %v2307
        %v2386 = vunpack.c.l.b16 %v2308
        %v2387 = vunpack.c.h.b16 %v2308
        %v2388 = vunpack.c.l.b16 %v2309
        %v2389 = vunpack.c.h.b16 %v2309
        %v2390 = vunpack.c.l.b16 %v2310
        %v2391 = vunpack.c.h.b16 %v2310
        %v2392 = vunpack.c.l.b16 %v2311
        %v2393 = vunpack.c.h.b16 %v2311
        %v2394 = vunpack.c.l.b16 %v2312
        %v2395 = vunpack.c.h.b16 %v2312
        %v2396 = vunpack.c.l.b16 %v2313
        %v2397 = vunpack.c.h.b16 %v2313
        %v2398 = vunpack.c.l.b16 %v2314
        %v2399 = vunpack.c.h.b16 %v2314
        %v2400 = vunpack.c.l.b16 %v2315
        %v2401 = vunpack.c.h.b16 %v2315
        %v2402 = vunpack.c.l.b16 %v2316
        %v2403 = vunpack.c.h.b16 %v2316
        %v2404 = vunpack.c.l.b16 %v2317
        %v2405 = vunpack.c.h.b16 %v2317
        %v2406 = vunpack.c.l.b16 %v2318
        %v2407 = vunpack.c.h.b16 %v2318
        %v2408 = vunpack.c.l.b16 %v2319
        %v2409 = vunpack.c.h.b16 %v2319
        %v2410 = vunpack.c.l.b16 %v2320
        %v2411 = vunpack.c.h.b16 %v2320
        %v2412 = vunpack.c.l.b16 %v2321
        %v2413 = vunpack.c.h.b16 %v2321
        %v2414 = vunpack.c.l.b16 %v2322
        %v2415 = vunpack.c.h.b16 %v2322
        %v2416 = vunpack.c.l.b16 %v2323
        %v2417 = vunpack.c.h.b16 %v2323
        %v2418 = vunpack.c.l.b16 %v2324
        %v2419 = vunpack.c.h.b16 %v2324
        %v2420 = vunpack.c.l.b16 %v2325
        %v2421 = vunpack.c.h.b16 %v2325
        %v2422 = vunpack.c.l.b16 %v2326
        %v2423 = vunpack.c.h.b16 %v2326
        %v2424 = vunpack.c.l.b16 %v2327
        %v2425 = vunpack.c.h.b16 %v2327
        %v2426 = vunpack.c.l.b16 %v2328
        %v2427 = vunpack.c.h.b16 %v2328
        %v2428 = vunpack.c.l.b16 %v2329
        %v2429 = vunpack.c.h.b16 %v2329
        %v2430 = vunpack.c.l.b16 %v2330
        %v2431 = vunpack.c.h.b16 %v2330
        %v2432 = vunpack.c.l.b16 %v2331
        %v2433 = vunpack.c.h.b16 %v2331
        %v2434 = vunpack.c.l.b16 %v2332
        %v2435 = vunpack.c.h.b16 %v2332
        %v2436 = vunpack.c.l.b16 %v2333
        %v2437 = vunpack.c.h.b16 %v2333
        %v2438 = vpack.c.b16 %v2376, %v2374
        %v2439 = vpack.c.b16 %v2377, %v2375
        %v2440 = vpack.c.b16 %v2380, %v2378
        %v2441 = vpack.c.b16 %v2381, %v2379
        %v2442 = vpack.c.b16 %v2384, %v2382
        %v2443 = vpack.c.b16 %v2385, %v2383
        %v2444 = vpack.c.b16 %v2388, %v2386
        %v2445 = vpack.c.b16 %v2389, %v2387
        %v2446 = vpack.c.b16 %v2392, %v2390
        %v2447 = vpack.c.b16 %v2393, %v2391
        %v2448 = vpack.c.b16 %v2396, %v2394
        %v2449 = vpack.c.b16 %v2397, %v2395
        %v2450 = vpack.c.b16 %v2400, %v2398
        %v2451 = vpack.c.b16 %v2401, %v2399
        %v2452 = vpack.c.b16 %v2404, %v2402
        %v2453 = vpack.c.b16 %v2405, %v2403
        %v2454 = vpack.c.b16 %v2408, %v2406
        %v2455 = vpack.c.b16 %v2409, %v2407
        %v2456 = vpack.c.b16 %v2412, %v2410
        %v2457 = vpack.c.b16 %v2413, %v2411
        %v2458 = vpack.c.b16 %v2416, %v2414
        %v2459 = vpack.c.b16 %v2417, %v2415
        %v2460 = vpack.c.b16 %v2420, %v2418
        %v2461 = vpack.c.b16 %v2421, %v2419
        %v2462 = vpack.c.b16 %v2424, %v2422
        %v2463 = vpack.c.b16 %v2425, %v2423
        %v2464 = vpack.c.b16 %v2428, %v2426
        %v2465 = vpack.c.b16 %v2429, %v2427
        %v2466 = vpack.c.b16 %v2432, %v2430
        %v2467 = vpack.c.b16 %v2433, %v2431
        %v2468 = vpack.c.b16 %v2436, %v2434
        %v2469 = vpack.c.b16 %v2437, %v2435
        %2502 = vmatprep.subr.bf16.mxu0 %v2439
        %2503 = vmatpush1.bf16.msra.mxu0 %v2438
        %2504 = vmatprep.subr.bf16.mxu0 %v2441
        %2505 = vmatpush1.bf16.msra.mxu0 %v2440
        %2506 = vmatprep.subr.bf16.mxu0 %v2443
        %2507 = vmatpush1.bf16.msra.mxu0 %v2442
        %2508 = vmatprep.subr.bf16.mxu0 %v2445
        %2509 = vmatpush1.bf16.msra.mxu0 %v2444
        %2510 = vmatprep.subr.bf16.mxu0 %v2447
        %2511 = vmatpush1.bf16.msra.mxu0 %v2446
        %2512 = vmatprep.subr.bf16.mxu0 %v2449
        %2513 = vmatpush1.bf16.msra.mxu0 %v2448
        %2514 = vmatprep.subr.bf16.mxu0 %v2451
        %2515 = vmatpush1.bf16.msra.mxu0 %v2450
        %2516 = vmatprep.subr.bf16.mxu0 %v2453
        %2517 = vmatpush1.bf16.msra.mxu0 %v2452
        %2518 = vmatprep.subr.bf16.mxu0 %v2455
        %2519 = vmatpush1.bf16.msra.mxu0 %v2454
        %2520 = vmatprep.subr.bf16.mxu0 %v2457
        %2521 = vmatpush1.bf16.msra.mxu0 %v2456
        %2522 = vmatprep.subr.bf16.mxu0 %v2459
        %2523 = vmatpush1.bf16.msra.mxu0 %v2458
        %2524 = vmatprep.subr.bf16.mxu0 %v2461
        %2525 = vmatpush1.bf16.msra.mxu0 %v2460
        %2526 = vmatprep.subr.bf16.mxu0 %v2463
        %2527 = vmatpush1.bf16.msra.mxu0 %v2462
        %2528 = vmatprep.subr.bf16.mxu0 %v2465
        %2529 = vmatpush1.bf16.msra.mxu0 %v2464
        %2530 = vmatprep.subr.bf16.mxu0 %v2467
        %2531 = vmatpush1.bf16.msra.mxu0 %v2466
        %2532 = vmatprep.subr.bf16.mxu0 %v2469
        %2533 = vmatpush1.bf16.msra.mxu0 %v2468
        %2534 = vmatprep.mubr.bf16.mxu0 %v2335
        %2535 = vmatmul.mubr.bf16.gmra.mrb[0].mxu0 %v2334
        %v2536 = vpop.f32.mrb[0].mxu0
        %v2537 = vadd.f32 0.0, %v2536
        %v2538 = vpop.f32.mrb[0].mxu0
        %v2539 = vadd.f32 0.0, %v2538
        %v2540 = vpop.f32.mrb[0].mxu0
        %v2541 = vadd.f32 0.0, %v2540
        %v2542 = vpop.f32.mrb[0].mxu0
        %v2543 = vadd.f32 0.0, %v2542
        %2544 = vmatprep.mubr.bf16.mxu0 %v2337
        %2545 = vmatmul.mubr.bf16.gmra.mrb[0].mxu0 %v2336
        %v2546 = vpop.f32.mrb[0].mxu0
        %v2547 = vadd.f32 0.0, %v2546
        %v2548 = vpop.f32.mrb[0].mxu0
        %v2549 = vadd.f32 0.0, %v2548
        %v2550 = vpop.f32.mrb[0].mxu0
        %v2551 = vpop.f32.mrb[0].mxu0
        %2552 = vdwg.mxu0
        %v2553 = vadd.f32 %v2295, %v2537
        %v2554 = vadd.f32 %v2296, %v2539
        %v2555 = vadd.f32 %v2297, %v2541
        %v2556 = vadd.f32 %v2298, %v2543
        %v2557 = vadd.f32 %v2299, %v2547
        %v2558 = vadd.f32 %v2300, %v2549
        %v2559 = vld [vmem:[#allocation2 + $0x8] sm:$0xcc]
        %v2560 = vld [vmem:[#allocation2 + $0x10] sm:$0xff]
        %v2561 = vld [vmem:[#allocation2 + $0x18] sm:$0xff]
        %v2562 = vld [vmem:[#allocation2 + $0x20] sm:$0x33]
        %s2563 = scalar_lea.vmem [#allocation6], 1536
        %v2564 = vld [vmem:[%s2563] sm:$0xff]
        %v2565 = vld [vmem:[%s2563 + $0x8] sm:$0xff]
        %v2566 = vld [vmem:[%s2563 + $0x10] sm:$0xff]
        %v2567 = vld [vmem:[%s2563 + $0x18] sm:$0xff]
        %v2568 = vld [vmem:[%s2563 + $0x20] sm:$0xff]
        %v2569 = vld [vmem:[%s2563 + $0x28] sm:$0xff]
        %v2570 = vld [vmem:[%s2563 + $0x30] sm:$0xff]
        %v2571 = vld [vmem:[%s2563 + $0x38] sm:$0xff]
        %v2572 = vld [vmem:[%s2563 + $0x40] sm:$0xff]
        %v2573 = vld [vmem:[%s2563 + $0x48] sm:$0xff]
        %v2574 = vld [vmem:[%s2563 + $0x50] sm:$0xff]
        %v2575 = vld [vmem:[%s2563 + $0x58] sm:$0xff]
        %v2576 = vld [vmem:[%s2563 + $0x60] sm:$0xff]
        %v2577 = vld [vmem:[%s2563 + $0x68] sm:$0xff]
        %v2578 = vld [vmem:[%s2563 + $0x70] sm:$0xff]
        %v2579 = vld [vmem:[%s2563 + $0x78] sm:$0xff]
        %v2580 = vld [vmem:[%s2563 + $0x80] sm:$0xff]
        %v2581 = vld [vmem:[%s2563 + $0x88] sm:$0xff]
        %v2582 = vld [vmem:[%s2563 + $0x90] sm:$0xff]
        %v2583 = vld [vmem:[%s2563 + $0x98] sm:$0xff]
        %v2584 = vld [vmem:[%s2563 + $0xa0] sm:$0xff]
        %v2585 = vld [vmem:[%s2563 + $0xa8] sm:$0xff]
        %v2586 = vld [vmem:[%s2563 + $0xb0] sm:$0xff]
        %v2587 = vld [vmem:[%s2563 + $0xb8] sm:$0xff]
        %v2588 = vld [vmem:[%s2563 + $0xc0] sm:$0xff]
        %v2589 = vld [vmem:[%s2563 + $0xc8] sm:$0xff]
        %v2590 = vld [vmem:[%s2563 + $0xd0] sm:$0xff]
        %v2591 = vld [vmem:[%s2563 + $0xd8] sm:$0xff]
        %v2592 = vld [vmem:[%s2563 + $0xe0] sm:$0xff]
        %v2593 = vld [vmem:[%s2563 + $0xe8] sm:$0xff]
        %v2594 = vld [vmem:[%s2563 + $0xf0] sm:$0xff]
        %v2595 = vld [vmem:[%s2563 + $0xf8] sm:$0xff]
        %v2600 = vunpack.c.l.b16 %v2559
        %v2601 = vunpack.c.h.b16 %v2559
        %v2602 = vunpack.c.l.b16 %v2560
        %v2603 = vunpack.c.h.b16 %v2560
        %v2604 = vunpack.c.l.b16 %v2561
        %v2605 = vunpack.c.h.b16 %v2561
        %v2606 = vunpack.c.l.b16 %v2562
        %v2607 = vunpack.c.h.b16 %v2562
        %v2608 = vpack.c.b16 %v2602, %v2600
        %v2609 = vpack.c.b16 %v2603, %v2601
        %v2610 = vpack.c.b16 %v2606, %v2604
        %v2611 = vpack.c.b16 %v2607, %v2605
        %vm2612 = vcmask 1045504
        %v2613 = vrot.slane %v2608, 2
        %v2614 = vrot.slane %v2610, 2
        %v2615 = vsel %vm2612, %v2613, %v2614
        %v2616 = vrot.slane %v2609, 2
        %v2617 = vrot.slane %v2611, 2
        %v2618 = vsel %vm2612, %v2616, %v2617
        %v2655 = vunpack.c.l.b16 %v2564
        %v2656 = vunpack.c.h.b16 %v2564
        %v2657 = vunpack.c.l.b16 %v2565
        %v2658 = vunpack.c.h.b16 %v2565
        %v2659 = vunpack.c.l.b16 %v2566
        %v2660 = vunpack.c.h.b16 %v2566
        %v2661 = vunpack.c.l.b16 %v2567
        %v2662 = vunpack.c.h.b16 %v2567
        %v2663 = vunpack.c.l.b16 %v2568
        %v2664 = vunpack.c.h.b16 %v2568
        %v2665 = vunpack.c.l.b16 %v2569
        %v2666 = vunpack.c.h.b16 %v2569
        %v2667 = vunpack.c.l.b16 %v2570
        %v2668 = vunpack.c.h.b16 %v2570
        %v2669 = vunpack.c.l.b16 %v2571
        %v2670 = vunpack.c.h.b16 %v2571
        %v2671 = vunpack.c.l.b16 %v2572
        %v2672 = vunpack.c.h.b16 %v2572
        %v2673 = vunpack.c.l.b16 %v2573
        %v2674 = vunpack.c.h.b16 %v2573
        %v2675 = vunpack.c.l.b16 %v2574
        %v2676 = vunpack.c.h.b16 %v2574
        %v2677 = vunpack.c.l.b16 %v2575
        %v2678 = vunpack.c.h.b16 %v2575
        %v2679 = vunpack.c.l.b16 %v2576
        %v2680 = vunpack.c.h.b16 %v2576
        %v2681 = vunpack.c.l.b16 %v2577
        %v2682 = vunpack.c.h.b16 %v2577
        %v2683 = vunpack.c.l.b16 %v2578
        %v2684 = vunpack.c.h.b16 %v2578
        %v2685 = vunpack.c.l.b16 %v2579
        %v2686 = vunpack.c.h.b16 %v2579
        %v2687 = vunpack.c.l.b16 %v2580
        %v2688 = vunpack.c.h.b16 %v2580
        %v2689 = vunpack.c.l.b16 %v2581
        %v2690 = vunpack.c.h.b16 %v2581
        %v2691 = vunpack.c.l.b16 %v2582
        %v2692 = vunpack.c.h.b16 %v2582
        %v2693 = vunpack.c.l.b16 %v2583
        %v2694 = vunpack.c.h.b16 %v2583
        %v2695 = vunpack.c.l.b16 %v2584
        %v2696 = vunpack.c.h.b16 %v2584
        %v2697 = vunpack.c.l.b16 %v2585
        %v2698 = vunpack.c.h.b16 %v2585
        %v2699 = vunpack.c.l.b16 %v2586
        %v2700 = vunpack.c.h.b16 %v2586
        %v2701 = vunpack.c.l.b16 %v2587
        %v2702 = vunpack.c.h.b16 %v2587
        %v2703 = vunpack.c.l.b16 %v2588
        %v2704 = vunpack.c.h.b16 %v2588
        %v2705 = vunpack.c.l.b16 %v2589
        %v2706 = vunpack.c.h.b16 %v2589
        %v2707 = vunpack.c.l.b16 %v2590
        %v2708 = vunpack.c.h.b16 %v2590
        %v2709 = vunpack.c.l.b16 %v2591
        %v2710 = vunpack.c.h.b16 %v2591
        %v2711 = vunpack.c.l.b16 %v2592
        %v2712 = vunpack.c.h.b16 %v2592
        %v2713 = vunpack.c.l.b16 %v2593
        %v2714 = vunpack.c.h.b16 %v2593
        %v2715 = vunpack.c.l.b16 %v2594
        %v2716 = vunpack.c.h.b16 %v2594
        %v2717 = vunpack.c.l.b16 %v2595
        %v2718 = vunpack.c.h.b16 %v2595
        %v2719 = vpack.c.b16 %v2657, %v2655
        %v2720 = vpack.c.b16 %v2658, %v2656
        %v2721 = vpack.c.b16 %v2661, %v2659
        %v2722 = vpack.c.b16 %v2662, %v2660
        %v2723 = vpack.c.b16 %v2665, %v2663
        %v2724 = vpack.c.b16 %v2666, %v2664
        %v2725 = vpack.c.b16 %v2669, %v2667
        %v2726 = vpack.c.b16 %v2670, %v2668
        %v2727 = vpack.c.b16 %v2673, %v2671
        %v2728 = vpack.c.b16 %v2674, %v2672
        %v2729 = vpack.c.b16 %v2677, %v2675
        %v2730 = vpack.c.b16 %v2678, %v2676
        %v2731 = vpack.c.b16 %v2681, %v2679
        %v2732 = vpack.c.b16 %v2682, %v2680
        %v2733 = vpack.c.b16 %v2685, %v2683
        %v2734 = vpack.c.b16 %v2686, %v2684
        %v2735 = vpack.c.b16 %v2689, %v2687
        %v2736 = vpack.c.b16 %v2690, %v2688
        %v2737 = vpack.c.b16 %v2693, %v2691
        %v2738 = vpack.c.b16 %v2694, %v2692
        %v2739 = vpack.c.b16 %v2697, %v2695
        %v2740 = vpack.c.b16 %v2698, %v2696
        %v2741 = vpack.c.b16 %v2701, %v2699
        %v2742 = vpack.c.b16 %v2702, %v2700
        %v2743 = vpack.c.b16 %v2705, %v2703
        %v2744 = vpack.c.b16 %v2706, %v2704
        %v2745 = vpack.c.b16 %v2709, %v2707
        %v2746 = vpack.c.b16 %v2710, %v2708
        %v2747 = vpack.c.b16 %v2713, %v2711
        %v2748 = vpack.c.b16 %v2714, %v2712
        %v2749 = vpack.c.b16 %v2717, %v2715
        %v2750 = vpack.c.b16 %v2718, %v2716
        %2783 = vmatprep.subr.bf16.mxu0 %v2720
        %2784 = vmatpush1.bf16.msra.mxu0 %v2719
        %2785 = vmatprep.subr.bf16.mxu0 %v2722
        %2786 = vmatpush1.bf16.msra.mxu0 %v2721
        %2787 = vmatprep.subr.bf16.mxu0 %v2724
        %2788 = vmatpush1.bf16.msra.mxu0 %v2723
        %2789 = vmatprep.subr.bf16.mxu0 %v2726
        %2790 = vmatpush1.bf16.msra.mxu0 %v2725
        %2791 = vmatprep.subr.bf16.mxu0 %v2728
        %2792 = vmatpush1.bf16.msra.mxu0 %v2727
        %2793 = vmatprep.subr.bf16.mxu0 %v2730
        %2794 = vmatpush1.bf16.msra.mxu0 %v2729
        %2795 = vmatprep.subr.bf16.mxu0 %v2732
        %2796 = vmatpush1.bf16.msra.mxu0 %v2731
        %2797 = vmatprep.subr.bf16.mxu0 %v2734
        %2798 = vmatpush1.bf16.msra.mxu0 %v2733
        %2799 = vmatprep.subr.bf16.mxu0 %v2736
        %2800 = vmatpush1.bf16.msra.mxu0 %v2735
        %2801 = vmatprep.subr.bf16.mxu0 %v2738
        %2802 = vmatpush1.bf16.msra.mxu0 %v2737
        %2803 = vmatprep.subr.bf16.mxu0 %v2740
        %2804 = vmatpush1.bf16.msra.mxu0 %v2739
        %2805 = vmatprep.subr.bf16.mxu0 %v2742
        %2806 = vmatpush1.bf16.msra.mxu0 %v2741
        %2807 = vmatprep.subr.bf16.mxu0 %v2744
        %2808 = vmatpush1.bf16.msra.mxu0 %v2743
        %2809 = vmatprep.subr.bf16.mxu0 %v2746
        %2810 = vmatpush1.bf16.msra.mxu0 %v2745
        %2811 = vmatprep.subr.bf16.mxu0 %v2748
        %2812 = vmatpush1.bf16.msra.mxu0 %v2747
        %2813 = vmatprep.subr.bf16.mxu0 %v2750
        %2814 = vmatpush1.bf16.msra.mxu0 %v2749
        %2815 = vmatprep.mubr.bf16.mxu0 %v2618
        %2816 = vmatmul.mubr.bf16.gmra.mrb[0].mxu0 %v2615
        %v2817 = vpop.f32.mrb[0].mxu0
        %v2818 = vadd.f32 0.0, %v2817
        %v2819 = vpop.f32.mrb[0].mxu0
        %v2820 = vadd.f32 0.0, %v2819
        %v2821 = vpop.f32.mrb[0].mxu0
        %v2822 = vadd.f32 0.0, %v2821
        %v2823 = vpop.f32.mrb[0].mxu0
        %v2824 = vadd.f32 0.0, %v2823
        %2825 = vmatprep.mubr.bf16.mxu0 %v2617
        %2826 = vmatmul.mubr.bf16.gmra.mrb[0].mxu0 %v2614
        %v2827 = vpop.f32.mrb[0].mxu0
        %v2828 = vadd.f32 0.0, %v2827
        %v2829 = vpop.f32.mrb[0].mxu0
        %v2830 = vadd.f32 0.0, %v2829
        %v2831 = vpop.f32.mrb[0].mxu0
        %v2832 = vpop.f32.mrb[0].mxu0
        %2833 = vdwg.mxu0
        %v2834 = vadd.f32 %v2553, %v2818
        %v2835 = vadd.f32 %v2554, %v2820
        %v2836 = vadd.f32 %v2555, %v2822
        %v2837 = vadd.f32 %v2556, %v2824
        %v2838 = vadd.f32 %v2557, %v2828
        %v2839 = vadd.f32 %v2558, %v2830
        %v2840 = vld [vmem:[#allocation2 + $0x20] sm:$0x77]
        %s2841 = scalar_lea.vmem [#allocation6], 1792
        %v2842 = vld [vmem:[%s2841] sm:$0xff]
        %v2843 = vld [vmem:[%s2841 + $0x8] sm:$0xff]
        %v2844 = vld [vmem:[%s2841 + $0x10] sm:$0xff]
        %v2845 = vld [vmem:[%s2841 + $0x18] sm:$0xff]
        %v2846 = vld [vmem:[%s2841 + $0x20] sm:$0xff]
        %v2847 = vld [vmem:[%s2841 + $0x28] sm:$0xff]
        %v2848 = vld [vmem:[%s2841 + $0x30] sm:$0xff]
        %v2849 = vld [vmem:[%s2841 + $0x38] sm:$0xff]
        %v2850 = vld [vmem:[%s2841 + $0x40] sm:$0xff]
        %v2851 = vld [vmem:[%s2841 + $0x48] sm:$0xff]
        %v2852 = vld [vmem:[%s2841 + $0x50] sm:$0xff]
        %v2853 = vld [vmem:[%s2841 + $0x58] sm:$0xff]
        %v2854 = vld [vmem:[%s2841 + $0x60] sm:$0xff]
        %v2855 = vld [vmem:[%s2841 + $0x68] sm:$0xff]
        %v2856 = vld [vmem:[%s2841 + $0x70] sm:$0xff]
        %v2857 = vld [vmem:[%s2841 + $0x78] sm:$0xff]
        %v2858 = vld [vmem:[%s2841 + $0x80] sm:$0xff]
        %v2859 = vld [vmem:[%s2841 + $0x88] sm:$0xff]
        %v2860 = vld [vmem:[%s2841 + $0x90] sm:$0xff]
        %v2861 = vld [vmem:[%s2841 + $0x98] sm:$0xff]
        %v2862 = vld [vmem:[%s2841 + $0xa0] sm:$0xff]
        %v2863 = vld [vmem:[%s2841 + $0xa8] sm:$0xff]
        %v2864 = vld [vmem:[%s2841 + $0xb0] sm:$0xff]
        %v2865 = vld [vmem:[%s2841 + $0xb8] sm:$0xff]
        %v2866 = vld [vmem:[%s2841 + $0xc0] sm:$0xff]
        %v2867 = vld [vmem:[%s2841 + $0xc8] sm:$0xff]
        %v2868 = vld [vmem:[%s2841 + $0xd0] sm:$0xff]
        %v2869 = vld [vmem:[%s2841 + $0xd8] sm:$0xff]
        %v2870 = vld [vmem:[%s2841 + $0xe0] sm:$0xff]
        %v2871 = vld [vmem:[%s2841 + $0xe8] sm:$0xff]
        %v2872 = vld [vmem:[%s2841 + $0xf0] sm:$0xff]
        %v2873 = vld [vmem:[%s2841 + $0xf8] sm:$0xff]
        %v2875 = vunpack.c.l.b16 %v2840
        %v2876 = vunpack.c.h.b16 %v2840
        %v2877 = vpack.c.b16 %v2875, %v2604
        %v2878 = vpack.c.b16 %v2876, %v2605
        %v2880 = vshrl.u32 %v2608, 16
        %v2882 = vrot.slane %v2880, 2
        %v2883 = vshll.u32 %v2608, 16
        %v2885 = vrot.slane %v2883, 3
        %v2886 = vor.u32 %v2882, %v2885
        %v2888 = vshrl.u32 %v2877, 16
        %v2890 = vrot.slane %v2888, 2
        %v2891 = vshll.u32 %v2877, 16
        %v2893 = vrot.slane %v2891, 3
        %v2894 = vor.u32 %v2890, %v2893
        %v2895 = vsel %vm851, %v2886, %v2894
        %v2897 = vshrl.u32 %v2609, 16
        %v2899 = vrot.slane %v2897, 2
        %v2900 = vshll.u32 %v2609, 16
        %v2902 = vrot.slane %v2900, 3
        %v2903 = vor.u32 %v2899, %v2902
        %v2905 = vshrl.u32 %v2878, 16
        %v2907 = vrot.slane %v2905, 2
        %v2908 = vshll.u32 %v2878, 16
        %v2910 = vrot.slane %v2908, 3
        %v2911 = vor.u32 %v2907, %v2910
        %v2912 = vsel %vm851, %v2903, %v2911
        %v2949 = vunpack.c.l.b16 %v2842
        %v2950 = vunpack.c.h.b16 %v2842
        %v2951 = vunpack.c.l.b16 %v2843
        %v2952 = vunpack.c.h.b16 %v2843
        %v2953 = vunpack.c.l.b16 %v2844
        %v2954 = vunpack.c.h.b16 %v2844
        %v2955 = vunpack.c.l.b16 %v2845
        %v2956 = vunpack.c.h.b16 %v2845
        %v2957 = vunpack.c.l.b16 %v2846
        %v2958 = vunpack.c.h.b16 %v2846
        %v2959 = vunpack.c.l.b16 %v2847
        %v2960 = vunpack.c.h.b16 %v2847
        %v2961 = vunpack.c.l.b16 %v2848
        %v2962 = vunpack.c.h.b16 %v2848
        %v2963 = vunpack.c.l.b16 %v2849
        %v2964 = vunpack.c.h.b16 %v2849
        %v2965 = vunpack.c.l.b16 %v2850
        %v2966 = vunpack.c.h.b16 %v2850
        %v2967 = vunpack.c.l.b16 %v2851
        %v2968 = vunpack.c.h.b16 %v2851
        %v2969 = vunpack.c.l.b16 %v2852
        %v2970 = vunpack.c.h.b16 %v2852
        %v2971 = vunpack.c.l.b16 %v2853
        %v2972 = vunpack.c.h.b16 %v2853
        %v2973 = vunpack.c.l.b16 %v2854
        %v2974 = vunpack.c.h.b16 %v2854
        %v2975 = vunpack.c.l.b16 %v2855
        %v2976 = vunpack.c.h.b16 %v2855
        %v2977 = vunpack.c.l.b16 %v2856
        %v2978 = vunpack.c.h.b16 %v2856
        %v2979 = vunpack.c.l.b16 %v2857
        %v2980 = vunpack.c.h.b16 %v2857
        %v2981 = vunpack.c.l.b16 %v2858
        %v2982 = vunpack.c.h.b16 %v2858
        %v2983 = vunpack.c.l.b16 %v2859
        %v2984 = vunpack.c.h.b16 %v2859
        %v2985 = vunpack.c.l.b16 %v2860
        %v2986 = vunpack.c.h.b16 %v2860
        %v2987 = vunpack.c.l.b16 %v2861
        %v2988 = vunpack.c.h.b16 %v2861
        %v2989 = vunpack.c.l.b16 %v2862
        %v2990 = vunpack.c.h.b16 %v2862
        %v2991 = vunpack.c.l.b16 %v2863
        %v2992 = vunpack.c.h.b16 %v2863
        %v2993 = vunpack.c.l.b16 %v2864
        %v2994 = vunpack.c.h.b16 %v2864
        %v2995 = vunpack.c.l.b16 %v2865
        %v2996 = vunpack.c.h.b16 %v2865
        %v2997 = vunpack.c.l.b16 %v2866
        %v2998 = vunpack.c.h.b16 %v2866
        %v2999 = vunpack.c.l.b16 %v2867
        %v3000 = vunpack.c.h.b16 %v2867
        %v3001 = vunpack.c.l.b16 %v2868
        %v3002 = vunpack.c.h.b16 %v2868
        %v3003 = vunpack.c.l.b16 %v2869
        %v3004 = vunpack.c.h.b16 %v2869
        %v3005 = vunpack.c.l.b16 %v2870
        %v3006 = vunpack.c.h.b16 %v2870
        %v3007 = vunpack.c.l.b16 %v2871
        %v3008 = vunpack.c.h.b16 %v2871
        %v3009 = vunpack.c.l.b16 %v2872
        %v3010 = vunpack.c.h.b16 %v2872
        %v3011 = vunpack.c.l.b16 %v2873
        %v3012 = vunpack.c.h.b16 %v2873
        %v3013 = vpack.c.b16 %v2951, %v2949
        %v3014 = vpack.c.b16 %v2952, %v2950
        %v3015 = vpack.c.b16 %v2955, %v2953
        %v3016 = vpack.c.b16 %v2956, %v2954
        %v3017 = vpack.c.b16 %v2959, %v2957
        %v3018 = vpack.c.b16 %v2960, %v2958
        %v3019 = vpack.c.b16 %v2963, %v2961
        %v3020 = vpack.c.b16 %v2964, %v2962
        %v3021 = vpack.c.b16 %v2967, %v2965
        %v3022 = vpack.c.b16 %v2968, %v2966
        %v3023 = vpack.c.b16 %v2971, %v2969
        %v3024 = vpack.c.b16 %v2972, %v2970
        %v3025 = vpack.c.b16 %v2975, %v2973
        %v3026 = vpack.c.b16 %v2976, %v2974
        %v3027 = vpack.c.b16 %v2979, %v2977
        %v3028 = vpack.c.b16 %v2980, %v2978
        %v3029 = vpack.c.b16 %v2983, %v2981
        %v3030 = vpack.c.b16 %v2984, %v2982
        %v3031 = vpack.c.b16 %v2987, %v2985
        %v3032 = vpack.c.b16 %v2988, %v2986
        %v3033 = vpack.c.b16 %v2991, %v2989
        %v3034 = vpack.c.b16 %v2992, %v2990
        %v3035 = vpack.c.b16 %v2995, %v2993
        %v3036 = vpack.c.b16 %v2996, %v2994
        %v3037 = vpack.c.b16 %v2999, %v2997
        %v3038 = vpack.c.b16 %v3000, %v2998
        %v3039 = vpack.c.b16 %v3003, %v3001
        %v3040 = vpack.c.b16 %v3004, %v3002
        %v3041 = vpack.c.b16 %v3007, %v3005
        %v3042 = vpack.c.b16 %v3008, %v3006
        %v3043 = vpack.c.b16 %v3011, %v3009
        %v3044 = vpack.c.b16 %v3012, %v3010
        %3077 = vmatprep.subr.bf16.mxu0 %v3014
        %3078 = vmatpush1.bf16.msra.mxu0 %v3013
        %3079 = vmatprep.subr.bf16.mxu0 %v3016
        %3080 = vmatpush1.bf16.msra.mxu0 %v3015
        %3081 = vmatprep.subr.bf16.mxu0 %v3018
        %3082 = vmatpush1.bf16.msra.mxu0 %v3017
        %3083 = vmatprep.subr.bf16.mxu0 %v3020
        %3084 = vmatpush1.bf16.msra.mxu0 %v3019
        %3085 = vmatprep.subr.bf16.mxu0 %v3022
        %3086 = vmatpush1.bf16.msra.mxu0 %v3021
        %3087 = vmatprep.subr.bf16.mxu0 %v3024
        %3088 = vmatpush1.bf16.msra.mxu0 %v3023
        %3089 = vmatprep.subr.bf16.mxu0 %v3026
        %3090 = vmatpush1.bf16.msra.mxu0 %v3025
        %3091 = vmatprep.subr.bf16.mxu0 %v3028
        %3092 = vmatpush1.bf16.msra.mxu0 %v3027
        %3093 = vmatprep.subr.bf16.mxu0 %v3030
        %3094 = vmatpush1.bf16.msra.mxu0 %v3029
        %3095 = vmatprep.subr.bf16.mxu0 %v3032
        %3096 = vmatpush1.bf16.msra.mxu0 %v3031
        %3097 = vmatprep.subr.bf16.mxu0 %v3034
        %3098 = vmatpush1.bf16.msra.mxu0 %v3033
        %3099 = vmatprep.subr.bf16.mxu0 %v3036
        %3100 = vmatpush1.bf16.msra.mxu0 %v3035
        %3101 = vmatprep.subr.bf16.mxu0 %v3038
        %3102 = vmatpush1.bf16.msra.mxu0 %v3037
        %3103 = vmatprep.subr.bf16.mxu0 %v3040
        %3104 = vmatpush1.bf16.msra.mxu0 %v3039
        %3105 = vmatprep.subr.bf16.mxu0 %v3042
        %3106 = vmatpush1.bf16.msra.mxu0 %v3041
        %3107 = vmatprep.subr.bf16.mxu0 %v3044
        %3108 = vmatpush1.bf16.msra.mxu0 %v3043
        %3109 = vmatprep.mubr.bf16.mxu0 %v2912
        %3110 = vmatmul.mubr.bf16.gmra.mrb[0].mxu0 %v2895
        %v3111 = vpop.f32.mrb[0].mxu0
        %v3112 = vadd.f32 0.0, %v3111
        %v3113 = vpop.f32.mrb[0].mxu0
        %v3114 = vadd.f32 0.0, %v3113
        %v3115 = vpop.f32.mrb[0].mxu0
        %v3116 = vadd.f32 0.0, %v3115
        %v3117 = vpop.f32.mrb[0].mxu0
        %v3118 = vadd.f32 0.0, %v3117
        %3119 = vmatprep.mubr.bf16.mxu0 %v2911
        %3120 = vmatmul.mubr.bf16.gmra.mrb[0].mxu0 %v2894
        %v3121 = vpop.f32.mrb[0].mxu0
        %v3122 = vadd.f32 0.0, %v3121
        %v3123 = vpop.f32.mrb[0].mxu0
        %v3124 = vadd.f32 0.0, %v3123
        %v3125 = vpop.f32.mrb[0].mxu0
        %v3126 = vpop.f32.mrb[0].mxu0
        %3127 = vdwg.mxu0
        %v3128 = vadd.f32 %v2834, %v3112
        %v3129 = vadd.f32 %v2835, %v3114
        %v3130 = vadd.f32 %v2836, %v3116
        %v3131 = vadd.f32 %v2837, %v3118
        %v3132 = vadd.f32 %v2838, %v3122
        %v3133 = vadd.f32 %v2839, %v3124
        %v3134 = vld [vmem:[#allocation2 + $0x8] sm:$0x88]
        %s3135 = scalar_lea.vmem [#allocation6], 2048
        %v3136 = vld [vmem:[%s3135] sm:$0xff]
        %v3137 = vld [vmem:[%s3135 + $0x8] sm:$0xff]
        %v3138 = vld [vmem:[%s3135 + $0x10] sm:$0xff]
        %v3139 = vld [vmem:[%s3135 + $0x18] sm:$0xff]
        %v3140 = vld [vmem:[%s3135 + $0x20] sm:$0xff]
        %v3141 = vld [vmem:[%s3135 + $0x28] sm:$0xff]
        %v3142 = vld [vmem:[%s3135 + $0x30] sm:$0xff]
        %v3143 = vld [vmem:[%s3135 + $0x38] sm:$0xff]
        %v3144 = vld [vmem:[%s3135 + $0x40] sm:$0xff]
        %v3145 = vld [vmem:[%s3135 + $0x48] sm:$0xff]
        %v3146 = vld [vmem:[%s3135 + $0x50] sm:$0xff]
        %v3147 = vld [vmem:[%s3135 + $0x58] sm:$0xff]
        %v3148 = vld [vmem:[%s3135 + $0x60] sm:$0xff]
        %v3149 = vld [vmem:[%s3135 + $0x68] sm:$0xff]
        %v3150 = vld [vmem:[%s3135 + $0x70] sm:$0xff]
        %v3151 = vld [vmem:[%s3135 + $0x78] sm:$0xff]
        %v3152 = vld [vmem:[%s3135 + $0x80] sm:$0xff]
        %v3153 = vld [vmem:[%s3135 + $0x88] sm:$0xff]
        %v3154 = vld [vmem:[%s3135 + $0x90] sm:$0xff]
        %v3155 = vld [vmem:[%s3135 + $0x98] sm:$0xff]
        %v3156 = vld [vmem:[%s3135 + $0xa0] sm:$0xff]
        %v3157 = vld [vmem:[%s3135 + $0xa8] sm:$0xff]
        %v3158 = vld [vmem:[%s3135 + $0xb0] sm:$0xff]
        %v3159 = vld [vmem:[%s3135 + $0xb8] sm:$0xff]
        %v3160 = vld [vmem:[%s3135 + $0xc0] sm:$0xff]
        %v3161 = vld [vmem:[%s3135 + $0xc8] sm:$0xff]
        %v3162 = vld [vmem:[%s3135 + $0xd0] sm:$0xff]
        %v3163 = vld [vmem:[%s3135 + $0xd8] sm:$0xff]
        %v3164 = vld [vmem:[%s3135 + $0xe0] sm:$0xff]
        %v3165 = vld [vmem:[%s3135 + $0xe8] sm:$0xff]
        %v3166 = vld [vmem:[%s3135 + $0xf0] sm:$0xff]
        %v3167 = vld [vmem:[%s3135 + $0xf8] sm:$0xff]
        %v3169 = vunpack.c.l.b16 %v3134
        %v3170 = vunpack.c.h.b16 %v3134
        %v3171 = vpack.c.b16 %v2602, %v3169
        %v3172 = vpack.c.b16 %v2603, %v3170
        %v3173 = vrot.slane %v3171, 3
        %v3174 = vrot.slane %v2877, 3
        %v3175 = vsel %vm1779, %v3173, %v3174
        %v3176 = vrot.slane %v3172, 3
        %v3177 = vrot.slane %v2878, 3
        %v3178 = vsel %vm1779, %v3176, %v3177
        %v3215 = vunpack.c.l.b16 %v3136
        %v3216 = vunpack.c.h.b16 %v3136
        %v3217 = vunpack.c.l.b16 %v3137
        %v3218 = vunpack.c.h.b16 %v3137
        %v3219 = vunpack.c.l.b16 %v3138
        %v3220 = vunpack.c.h.b16 %v3138
        %v3221 = vunpack.c.l.b16 %v3139
        %v3222 = vunpack.c.h.b16 %v3139
        %v3223 = vunpack.c.l.b16 %v3140
        %v3224 = vunpack.c.h.b16 %v3140
        %v3225 = vunpack.c.l.b16 %v3141
        %v3226 = vunpack.c.h.b16 %v3141
        %v3227 = vunpack.c.l.b16 %v3142
        %v3228 = vunpack.c.h.b16 %v3142
        %v3229 = vunpack.c.l.b16 %v3143
        %v3230 = vunpack.c.h.b16 %v3143
        %v3231 = vunpack.c.l.b16 %v3144
        %v3232 = vunpack.c.h.b16 %v3144
        %v3233 = vunpack.c.l.b16 %v3145
        %v3234 = vunpack.c.h.b16 %v3145
        %v3235 = vunpack.c.l.b16 %v3146
        %v3236 = vunpack.c.h.b16 %v3146
        %v3237 = vunpack.c.l.b16 %v3147
        %v3238 = vunpack.c.h.b16 %v3147
        %v3239 = vunpack.c.l.b16 %v3148
        %v3240 = vunpack.c.h.b16 %v3148
        %v3241 = vunpack.c.l.b16 %v3149
        %v3242 = vunpack.c.h.b16 %v3149
        %v3243 = vunpack.c.l.b16 %v3150
        %v3244 = vunpack.c.h.b16 %v3150
        %v3245 = vunpack.c.l.b16 %v3151
        %v3246 = vunpack.c.h.b16 %v3151
        %v3247 = vunpack.c.l.b16 %v3152
        %v3248 = vunpack.c.h.b16 %v3152
        %v3249 = vunpack.c.l.b16 %v3153
        %v3250 = vunpack.c.h.b16 %v3153
        %v3251 = vunpack.c.l.b16 %v3154
        %v3252 = vunpack.c.h.b16 %v3154
        %v3253 = vunpack.c.l.b16 %v3155
        %v3254 = vunpack.c.h.b16 %v3155
        %v3255 = vunpack.c.l.b16 %v3156
        %v3256 = vunpack.c.h.b16 %v3156
        %v3257 = vunpack.c.l.b16 %v3157
        %v3258 = vunpack.c.h.b16 %v3157
        %v3259 = vunpack.c.l.b16 %v3158
        %v3260 = vunpack.c.h.b16 %v3158
        %v3261 = vunpack.c.l.b16 %v3159
        %v3262 = vunpack.c.h.b16 %v3159
        %v3263 = vunpack.c.l.b16 %v3160
        %v3264 = vunpack.c.h.b16 %v3160
        %v3265 = vunpack.c.l.b16 %v3161
        %v3266 = vunpack.c.h.b16 %v3161
        %v3267 = vunpack.c.l.b16 %v3162
        %v3268 = vunpack.c.h.b16 %v3162
        %v3269 = vunpack.c.l.b16 %v3163
        %v3270 = vunpack.c.h.b16 %v3163
        %v3271 = vunpack.c.l.b16 %v3164
        %v3272 = vunpack.c.h.b16 %v3164
        %v3273 = vunpack.c.l.b16 %v3165
        %v3274 = vunpack.c.h.b16 %v3165
        %v3275 = vunpack.c.l.b16 %v3166
        %v3276 = vunpack.c.h.b16 %v3166
        %v3277 = vunpack.c.l.b16 %v3167
        %v3278 = vunpack.c.h.b16 %v3167
        %v3279 = vpack.c.b16 %v3217, %v3215
        %v3280 = vpack.c.b16 %v3218, %v3216
        %v3281 = vpack.c.b16 %v3221, %v3219
        %v3282 = vpack.c.b16 %v3222, %v3220
        %v3283 = vpack.c.b16 %v3225, %v3223
        %v3284 = vpack.c.b16 %v3226, %v3224
        %v3285 = vpack.c.b16 %v3229, %v3227
        %v3286 = vpack.c.b16 %v3230, %v3228
        %v3287 = vpack.c.b16 %v3233, %v3231
        %v3288 = vpack.c.b16 %v3234, %v3232
        %v3289 = vpack.c.b16 %v3237, %v3235
        %v3290 = vpack.c.b16 %v3238, %v3236
        %v3291 = vpack.c.b16 %v3241, %v3239
        %v3292 = vpack.c.b16 %v3242, %v3240
        %v3293 = vpack.c.b16 %v3245, %v3243
        %v3294 = vpack.c.b16 %v3246, %v3244
        %v3295 = vpack.c.b16 %v3249, %v3247
        %v3296 = vpack.c.b16 %v3250, %v3248
        %v3297 = vpack.c.b16 %v3253, %v3251
        %v3298 = vpack.c.b16 %v3254, %v3252
        %v3299 = vpack.c.b16 %v3257, %v3255
        %v3300 = vpack.c.b16 %v3258, %v3256
        %v3301 = vpack.c.b16 %v3261, %v3259
        %v3302 = vpack.c.b16 %v3262, %v3260
        %v3303 = vpack.c.b16 %v3265, %v3263
        %v3304 = vpack.c.b16 %v3266, %v3264
        %v3305 = vpack.c.b16 %v3269, %v3267
        %v3306 = vpack.c.b16 %v3270, %v3268
        %v3307 = vpack.c.b16 %v3273, %v3271
        %v3308 = vpack.c.b16 %v3274, %v3272
        %v3309 = vpack.c.b16 %v3277, %v3275
        %v3310 = vpack.c.b16 %v3278, %v3276
        %3343 = vmatprep.subr.bf16.mxu0 %v3280
        %3344 = vmatpush1.bf16.msra.mxu0 %v3279
        %3345 = vmatprep.subr.bf16.mxu0 %v3282
        %3346 = vmatpush1.bf16.msra.mxu0 %v3281
        %3347 = vmatprep.subr.bf16.mxu0 %v3284
        %3348 = vmatpush1.bf16.msra.mxu0 %v3283
        %3349 = vmatprep.subr.bf16.mxu0 %v3286
        %3350 = vmatpush1.bf16.msra.mxu0 %v3285
        %3351 = vmatprep.subr.bf16.mxu0 %v3288
        %3352 = vmatpush1.bf16.msra.mxu0 %v3287
        %3353 = vmatprep.subr.bf16.mxu0 %v3290
        %3354 = vmatpush1.bf16.msra.mxu0 %v3289
        %3355 = vmatprep.subr.bf16.mxu0 %v3292
        %3356 = vmatpush1.bf16.msra.mxu0 %v3291
        %3357 = vmatprep.subr.bf16.mxu0 %v3294
        %3358 = vmatpush1.bf16.msra.mxu0 %v3293
        %3359 = vmatprep.subr.bf16.mxu0 %v3296
        %3360 = vmatpush1.bf16.msra.mxu0 %v3295
        %3361 = vmatprep.subr.bf16.mxu0 %v3298
        %3362 = vmatpush1.bf16.msra.mxu0 %v3297
        %3363 = vmatprep.subr.bf16.mxu0 %v3300
        %3364 = vmatpush1.bf16.msra.mxu0 %v3299
        %3365 = vmatprep.subr.bf16.mxu0 %v3302
        %3366 = vmatpush1.bf16.msra.mxu0 %v3301
        %3367 = vmatprep.subr.bf16.mxu0 %v3304
        %3368 = vmatpush1.bf16.msra.mxu0 %v3303
        %3369 = vmatprep.subr.bf16.mxu0 %v3306
        %3370 = vmatpush1.bf16.msra.mxu0 %v3305
        %3371 = vmatprep.subr.bf16.mxu0 %v3308
        %3372 = vmatpush1.bf16.msra.mxu0 %v3307
        %3373 = vmatprep.subr.bf16.mxu0 %v3310
        %3374 = vmatpush1.bf16.msra.mxu0 %v3309
        %3375 = vmatprep.mubr.bf16.mxu0 %v3178
        %3376 = vmatmul.mubr.bf16.gmra.mrb[0].mxu0 %v3175
        %v3377 = vpop.f32.mrb[0].mxu0
        %v3378 = vadd.f32 0.0, %v3377
        %v3379 = vpop.f32.mrb[0].mxu0
        %v3380 = vadd.f32 0.0, %v3379
        %v3381 = vpop.f32.mrb[0].mxu0
        %v3382 = vadd.f32 0.0, %v3381
        %v3383 = vpop.f32.mrb[0].mxu0
        %v3384 = vadd.f32 0.0, %v3383
        %3385 = vmatprep.mubr.bf16.mxu0 %v3177
        %3386 = vmatmul.mubr.bf16.gmra.mrb[0].mxu0 %v3174
        %v3387 = vpop.f32.mrb[0].mxu0
        %v3388 = vadd.f32 0.0, %v3387
        %v3389 = vpop.f32.mrb[0].mxu0
        %v3390 = vadd.f32 0.0, %v3389
        %v3391 = vpop.f32.mrb[0].mxu0
        %v3392 = vpop.f32.mrb[0].mxu0
        %3393 = vdwg.mxu0
        %v3394 = vadd.f32 %v3128, %v3378
        %v3395 = vadd.f32 %v3129, %v3380
        %v3396 = vadd.f32 %v3130, %v3382
        %v3397 = vadd.f32 %v3131, %v3384
        %v3398 = vadd.f32 %v3132, %v3388
        %v3399 = vadd.f32 %v3133, %v3390
        %v3400 = vld [vmem:[#allocation8] sm:$0x3]
        %v3402 = vlaneseq
        %v3403 = vshrl.u32 %v3402, 7
        %v3404 = vsub.s32 0, %v3403
        %v3405 = vrot.slane %v3400, %v3404
        %v3406 = vlaneseq
        %v3407 = vshrl.u32 %v3406, 7
        %v3408 = vsub.s32 1, %v3407
        %v3409 = vrot.slane %v3400, %v3408
        %v3412 = vadd.f32 %v3394, %v3405
        %v3413 = vadd.f32 %v3395, %v3409
        %v3414 = vadd.f32 %v3396, %v3405
        %v3415 = vadd.f32 %v3397, %v3409
        %v3416 = vadd.f32 %v3398, %v3405
        %v3417 = vadd.f32 %v3399, %v3409
        %v3418 = vld [vmem:[%s581] sm:$0xff]
        %v3419 = vld [vmem:[%s581 + $0x8] sm:$0xff]
        %v3420 = vld [vmem:[%s581 + $0x10] sm:$0xff]
        %v3421 = vld [vmem:[#allocation14] sm:$0x3]
        %v3422 = vld [vmem:[%s612] sm:$0x3]
        %v3423 = vld [vmem:[%s621] sm:$0x3]
        %v3424 = vld [vmem:[#allocation9] sm:$0xff]
        %v3425 = vld [vmem:[#allocation9 + $0x8] sm:$0xff]
        %v3426 = vld [vmem:[#allocation9 + $0x10] sm:$0xff]
        %3428 = vset.pattern.permute.xlu0 0
        %3429 = vperm.xlu0 %3428, %v3418
        %v3430 = vpop.permute.xlu0 %3429
        %3433 = vset.pattern.permute.xlu0 0
        %3434 = vperm.xlu0 %3433, %v3419
        %v3435 = vpop.permute.xlu0 %3434
        %3438 = vset.pattern.permute.xlu0 0
        %3439 = vperm.xlu0 %3438, %v3420
        %v3440 = vpop.permute.xlu0 %3439
        %v3443 = vlaneseq
        %v3444 = vshrl.u32 %v3443, 7
        %v3445 = vsub.s32 0, %v3444
        %v3446 = vrot.slane %v3421, %v3445
        %v3447 = vlaneseq
        %v3448 = vshrl.u32 %v3447, 7
        %v3449 = vsub.s32 1, %v3448
        %v3450 = vrot.slane %v3421, %v3449
        %v3453 = vmul.f32 %v3430, %v3446
        %v3454 = vmul.f32 %v3430, %v3450
        %v3455 = vmul.f32 %v3435, %v3446
        %v3456 = vmul.f32 %v3435, %v3450
        %v3457 = vmul.f32 %v3440, %v3446
        %v3458 = vmul.f32 %v3440, %v3450
        %v3459 = vadd.f32 %v3412, %v3453
        %v3460 = vadd.f32 %v3413, %v3454
        %v3461 = vadd.f32 %v3414, %v3455
        %v3462 = vadd.f32 %v3415, %v3456
        %v3463 = vadd.f32 %v3416, %v3457
        %v3464 = vadd.f32 %v3417, %v3458
        %3466 = vset.pattern.permute.xlu0 0
        %3467 = vperm.xlu0 %3466, %v3424
        %v3468 = vpop.permute.xlu0 %3467
        %3471 = vset.pattern.permute.xlu0 0
        %3472 = vperm.xlu0 %3471, %v3425
        %v3473 = vpop.permute.xlu0 %3472
        %3476 = vset.pattern.permute.xlu0 0
        %3477 = vperm.xlu0 %3476, %v3426
        %v3478 = vpop.permute.xlu0 %3477
        %v3480 = vmul.f32 %v3459, %v3468
        %v3481 = vmul.f32 %v3460, %v3468
        %v3482 = vmul.f32 %v3461, %v3473
        %v3483 = vmul.f32 %v3462, %v3473
        %v3484 = vmul.f32 %v3463, %v3478
        %v3485 = vmul.f32 %v3464, %v3478
        %v3486 = vadd.f32 %v3480, %v3482
        %v3487 = vadd.f32 %v3486, %v3484
        %v3488 = vrot.slane %v3487, 4
        %v3489 = vadd.f32 %v3487, %v3488
        %v3490 = vrot.slane %v3489, 2
        %v3491 = vadd.f32 %v3489, %v3490
        %v3492 = vrot.slane %v3491, 1
        %v3493 = vadd.f32 %v3491, %v3492
        %v3494 = vadd.f32 %v3481, %v3483
        %v3495 = vadd.f32 %v3494, %v3485
        %v3496 = vrot.slane %v3495, 4
        %v3497 = vadd.f32 %v3495, %v3496
        %v3498 = vrot.slane %v3497, 2
        %v3499 = vadd.f32 %v3497, %v3498
        %v3500 = vrot.slane %v3499, 1
        %v3501 = vadd.f32 %v3499, %v3500
        %v3502 = vmul.f32 %v3493, 0.0625
        %v3503 = vmul.f32 %v3501, 0.0625
        %v3504 = vsub.f32 %v3459, %v3502
        %v3505 = vsub.f32 %v3460, %v3503
        %v3506 = vsub.f32 %v3461, %v3502
        %v3507 = vsub.f32 %v3462, %v3503
        %v3508 = vsub.f32 %v3463, %v3502
        %v3509 = vsub.f32 %v3464, %v3503
        %v3510 = vmul.f32 %v3504, %v3504
        %v3511 = vmul.f32 %v3505, %v3505
        %v3512 = vmul.f32 %v3506, %v3506
        %v3513 = vmul.f32 %v3507, %v3507
        %v3514 = vmul.f32 %v3508, %v3508
        %v3515 = vmul.f32 %v3509, %v3509
        %v3516 = vmul.f32 %v3510, %v3468
        %v3517 = vmul.f32 %v3511, %v3468
        %v3518 = vmul.f32 %v3512, %v3473
        %v3519 = vmul.f32 %v3513, %v3473
        %v3520 = vmul.f32 %v3514, %v3478
        %v3521 = vmul.f32 %v3515, %v3478
        %v3522 = vadd.f32 %v3516, %v3518
        %v3523 = vadd.f32 %v3522, %v3520
        %v3524 = vrot.slane %v3523, 4
        %v3525 = vadd.f32 %v3523, %v3524
        %v3526 = vrot.slane %v3525, 2
        %v3527 = vadd.f32 %v3525, %v3526
        %v3528 = vrot.slane %v3527, 1
        %v3529 = vadd.f32 %v3527, %v3528
        %v3530 = vadd.f32 %v3517, %v3519
        %v3531 = vadd.f32 %v3530, %v3521
        %v3532 = vrot.slane %v3531, 4
        %v3533 = vadd.f32 %v3531, %v3532
        %v3534 = vrot.slane %v3533, 2
        %v3535 = vadd.f32 %v3533, %v3534
        %v3536 = vrot.slane %v3535, 1
        %v3537 = vadd.f32 %v3535, %v3536
        %v3538 = vmul.f32 %v3529, 0.0625
        %v3539 = vmul.f32 %v3537, 0.0625
        %v3540 = vadd.f32 %v3538, 1e-05
        %v3541 = vadd.f32 %v3539, 1e-05
        %v3542 = vrsqrt.pop %v3540
        %v3543 = vrsqrt.pop %v3541
        %v3544 = vmul.f32 %v3504, %v3542
        %v3545 = vmul.f32 %v3505, %v3543
        %v3546 = vmul.f32 %v3506, %v3542
        %v3547 = vmul.f32 %v3507, %v3543
        %v3548 = vmul.f32 %v3508, %v3542
        %v3549 = vmul.f32 %v3509, %v3543
        %v3551 = vlaneseq
        %v3552 = vshrl.u32 %v3551, 7
        %v3553 = vsub.s32 0, %v3552
        %v3554 = vrot.slane %v3422, %v3553
        %v3555 = vlaneseq
        %v3556 = vshrl.u32 %v3555, 7
        %v3557 = vsub.s32 1, %v3556
        %v3558 = vrot.slane %v3422, %v3557
        %v3561 = vmul.f32 %v3554, %v3544
        %v3562 = vmul.f32 %v3558, %v3545
        %v3563 = vmul.f32 %v3554, %v3546
        %v3564 = vmul.f32 %v3558, %v3547
        %v3565 = vmul.f32 %v3554, %v3548
        %v3566 = vmul.f32 %v3558, %v3549
        %v3568 = vlaneseq
        %v3569 = vshrl.u32 %v3568, 7
        %v3570 = vsub.s32 0, %v3569
        %v3571 = vrot.slane %v3423, %v3570
        %v3572 = vlaneseq
        %v3573 = vshrl.u32 %v3572, 7
        %v3574 = vsub.s32 1, %v3573
        %v3575 = vrot.slane %v3423, %v3574
        %v3578 = vadd.f32 %v3561, %v3571
        %v3579 = vadd.f32 %v3562, %v3575
        %v3580 = vadd.f32 %v3563, %v3571
        %v3581 = vadd.f32 %v3564, %v3575
        %v3582 = vadd.f32 %v3565, %v3571
        %v3583 = vadd.f32 %v3566, %v3575
        %v3584 = vmul.f32 %v3578, 0.2
        %v3585 = vmul.f32 %v3579, 0.2
        %v3586 = vmul.f32 %v3580, 0.2
        %v3587 = vmul.f32 %v3581, 0.2
        %v3588 = vmul.f32 %v3582, 0.2
        %v3589 = vmul.f32 %v3583, 0.2
        %v3590 = vmax.f32 %v3578, %v3584
        %v3591 = vmax.f32 %v3579, %v3585
        %v3592 = vmax.f32 %v3580, %v3586
        %v3593 = vmax.f32 %v3581, %v3587
        %v3594 = vmax.f32 %v3582, %v3588
        %v3595 = vmax.f32 %v3583, %v3589
        %v3596 = vpack.c.bf16 %v3592, %v3590
        %v3597 = vpack.c.bf16 %v3593, %v3591
        %v3598 = vpack.c.bf16 %v3594, %v3594
        %v3599 = vpack.c.bf16 %v3595, %v3595
        %v3602 = vunpack.c.l.b16 %v3596
        %v3603 = vunpack.c.l.b16 %v3597
        %v3604 = vpack.c.b16 %v3603, %v3602
        %3606 = vst [vmem:[%s686] sm:$0x33] %v3604
        %v3607 = vunpack.c.h.b16 %v3596
        %v3608 = vunpack.c.h.b16 %v3597
        %v3609 = vpack.c.b16 %v3608, %v3607
        %vm3610 = vmor %vm909, %vm912
        %v3611 = vrot.slane %v3604, 5
        %v3612 = vrot.slane %v3611, 4
        %v3613 = vrot.slane %v3609, 5
        %v3614 = vsel %vm3610, %v3612, %v3613
        %3616 = vst [vmem:[%s686] sm:$0xcc] %v3614
        %v3617 = vrot.slane %v3609, 6
        %v3618 = vrot.slane %v3617, 4
        %3620 = vst [vmem:[%s686 + $0x8] sm:$0x33] %v3618
        %v3623 = vunpack.c.l.b16 %v3598
        %v3624 = vunpack.c.l.b16 %v3599
        %v3625 = vpack.c.b16 %v3624, %v3623
        %v3626 = vrot.slane %v3625, 7
        %3628 = vst [vmem:[%s686 + $0x8] sm:$0xcc] %v3626
        %s3629 = sand.u32 %s319, 1
        %s3630 = scalar_lea.sflag [#allocation5], %s3629
        %s3631 = sand.u32 %s319, 1
        %s3632 = smul.addr %s3631, 16
        %s3633 = scalar_lea.vmem [#allocation19], %s3632
        // Predicated region
        $region117: #{tpu_custom_call.1} parent=67 // pred_check
          %p3634 = pneg %p329
        $region118: #{tpu_custom_call.1} parent=67 // pred_check_branch
          %3636 = sbr.rel (%p3634) target = $region120
        $region119: #{tpu_custom_call.1} parent=67 // pred_region
          %s3638 = ssub.s32 256, 256
          %3639 = vsyncadd %s3630, %s3638
          %s3640 = smul.addr %s29, 4
          %s3641 = smul.addr %s3640, 64
          %s3642 = scalar_lea.hbm %s12, %s3641
          %s3643 = sshll.u32 %s3633, 4
          %s3644 = int_to_ptr.vmem [resolvable:$true] %s3643
          %3649 = dma.vmem_to_hbm [thread:$0]  %s3644, 256, %s3642, %s3630, 128, 128, 8
        $region120: #{tpu_custom_call.1} parent=67 // pred_fallthru
          _
      $region68: #{tpu_custom_call.1} parent=5 // pred_fallthru
        _
      %p3650 = scmp.le.s32.totalorder 2, %s24
      // Predicated region
      $region121: #{tpu_custom_call.1} parent=5 // pred_check
        %p3651 = pneg %p3650
      $region122: #{tpu_custom_call.1} parent=5 // pred_check_branch
        %3653 = sbr.rel (%p3651) target = $region124
      $region123: #{tpu_custom_call.1} parent=5 // pred_region
        %s3654 = ssub.s32 %s24, 2
        // Predicated region
        $region125: #{tpu_custom_call.1} parent=123 // pred_check
          %p3655 = pneg %p335
        $region126: #{tpu_custom_call.1} parent=123 // pred_check_branch
          %3657 = sbr.rel (%p3655) target = $region128
        $region127: #{tpu_custom_call.1} parent=123 // pred_region
          %s3658 = sand.u32 %s320, 1
          %s3659 = scalar_lea.sflag [#allocation5], %s3658
          %s3660 = sand.u32 %s320, 1
          %s3661 = smul.addr %s3660, 16
          %s3662 = scalar_lea.vmem [#allocation19], %s3661
          %3663 = dma.done %s3659, 256
        $region128: #{tpu_custom_call.1} parent=123 // pred_fallthru
          _
      $region124: #{tpu_custom_call.1} parent=5 // pred_fallthru
        _
    $region6: #{tpu_custom_call.1} parent=1 // loop_footer
      %s28 = sadd.s32 1, %s24
    $region7: #{tpu_custom_call.1} parent=1 // loop_footer_branch
      %23 = sbr.rel target = $region3
    $region8: #{tpu_custom_call.1} parent=1 // loop_exit
      _
    %3664 = vsyncpa [#allocation4], 1
    %s3665 = scalar_lea.sflag [#allocation4], 1
    %3666 = vsyncpa %s3665, 1
    %3667 = vsyncpa [#allocation7], 1
    %3668 = vsyncpa [#allocation10], 1
    %3669 = vsyncpa [#allocation5], 1
    %s3670 = scalar_lea.sflag [#allocation5], 1
    %3671 = vsyncpa %s3670, 1

</llo_original>
